<compile_context>
chip_gen: v6e
topology: v6e:2x2x1
jax: 0.10.0
libtpu: 0.0.40
codegen_flags: <defaults>
</compile_context>

<pallas_src>
import math
import numpy as np
import jax
import jax.numpy as jnp
from jax.experimental import pallas as pl
from jax.experimental.pallas import tpu as pltpu

_HALF_LOG_2PI = 0.9189385332046727  # 0.5 * log(2*pi)


# --------------------------------------------------------------------------- kernel
def _make_actor_kernel(bt, heights):
    h0, h1, h2, h3, h4 = heights  # padded-input / per-layer activation heights

    def kernel(x_ref, t1_ref, b1_ref, t2_ref, b2_ref, t3_ref, b3_ref,
               t4_ref, b4_ref, wl_ref, bl_ref, eps_ref, out_ref,
               a1_ref, a2_ref, a3_ref, a4_ref):
        def conv_relu(in_ref, hin, t_ref, b_ref, out_sref):
            # in_ref: (hin*bt, Kin)   t_ref: (3, Kin, Nout)   b_ref: (1, Nout)
            ho = hin - 2
            m = ho * bt
            acc = jnp.dot(in_ref[0:m, :], t_ref[0],
                          preferred_element_type=jnp.float32)
            acc = acc + jnp.dot(in_ref[bt:bt + m, :], t_ref[1],
                                preferred_element_type=jnp.float32)
            acc = acc + jnp.dot(in_ref[2 * bt:2 * bt + m, :], t_ref[2],
                                preferred_element_type=jnp.float32)
            out_sref[...] = jnp.maximum(acc + b_ref[...], 0.0)

        conv_relu(x_ref, h0, t1_ref, b1_ref, a1_ref)   # (h1*bt, n1)
        conv_relu(a1_ref, h1, t2_ref, b2_ref, a2_ref)  # (h2*bt, n2)
        conv_relu(a2_ref, h2, t3_ref, b3_ref, a3_ref)  # (h3*bt, n3)
        conv_relu(a3_ref, h3, t4_ref, b4_ref, a4_ref)  # (h4*bt, n4)

        # MU/STD head: h4 independent (bt, n4) @ (n4, 8) partials, tree-summed.
        parts = [jnp.dot(a4_ref[h * bt:(h + 1) * bt, :], wl_ref[h],
                         preferred_element_type=jnp.float32)
                 for h in range(h4)]
        while len(parts) > 1:
            nxt = [parts[i] + parts[i + 1] for i in range(0, len(parts) - 1, 2)]
            if len(parts) % 2:
                nxt.append(parts[-1])
            parts = nxt
        ms = parts[0] + bl_ref[...]                    # (bt, 8): cols 0-2 MU, 3-5 STD

        mean = ms[:, 0:3]
        log_std = jnp.clip(ms[:, 3:6], -20.0, 2.0)
        std = jnp.exp(log_std)

        eps = eps_ref[...]                             # (bt, 3) ~ N(0, 1)
        x_t = mean + std * eps                         # Normal(mean, std).rsample()
        y_t = jnp.tanh(x_t)
        action = jnp.clip(y_t * 2.0 + 2.0, 0.0, 3.99)  # action_scale=2, action_bias=2
        log_prob = -0.5 * (eps * eps) - log_std - _HALF_LOG_2PI  # == Normal.log_prob(x_t)
        entropy = -jnp.exp(log_prob) * log_prob

        out_ref[...] = jnp.concatenate([action, log_prob, entropy], axis=1)  # (bt, 9)

    return kernel


# --------------------------------------------------------------------------- wrapper glue
def _rup(n, m):
    return ((n + m - 1) // m) * m


def _conv_toeplitz(w, win, k_pad, n_pad):
    """torch conv weight (Cout, Cin, 3, 3) -> (3, k_pad, n_pad) block-Toeplitz (zero padded)."""
    w = np.asarray(w, np.float32)
    cout, cin, kh, kw = w.shape
    wout = win - kw + 1
    t = np.zeros((kh, k_pad, n_pad), np.float32)
    for dh in range(kh):
        for dw in range(kw):
            for wo in range(wout):
                wi = wo + dw
                t[dh, wi * cin:(wi + 1) * cin, wo * cout:(wo + 1) * cout] = w[:, :, dh, dw].T
    return jnp.asarray(t)


def _bias_row(b, wout, n_pad):
    row = np.zeros((1, n_pad), np.float32)
    tiled = np.tile(np.asarray(b, np.float32), wout)
    row[0, :tiled.size] = tiled
    return jnp.asarray(row)


def _head_weights(wmu, bmu, wstd, bstd, hf, wf, cf, k_pad):
    """Torch (c,h,w)-major flatten -> kernel's (h, w*cf + c) layout; pad K->k_pad, N->8."""
    wcat = np.concatenate([np.asarray(wmu, np.float32), np.asarray(wstd, np.float32)], axis=0)
    w = wcat.reshape(6, cf, hf, wf).transpose(2, 3, 1, 0).reshape(hf, wf * cf, 6)
    wl = np.zeros((hf, k_pad, 8), np.float32)
    wl[:, :wf * cf, :6] = w
    bl = np.zeros((1, 8), np.float32)
    bl[0, 0:3] = np.asarray(bmu, np.float32)
    bl[0, 3:6] = np.asarray(bstd, np.float32)
    return jnp.asarray(wl), jnp.asarray(bl)


def actor_forward_pallas(x_nchw, params, eps, block_b=128):
    """x_nchw: (B, 4, H, W) with (H-6)*(W-6)*32 == 1792; eps: (B, 3) standard-normal noise.

    block_b samples are processed per grid step (rounded to a multiple of 8). For v7x,
    pick block_b <= B/2 so the 'parallel' grid has >= 2 steps (both TensorCores busy).
    """
    (w1, b1, w2, b2, w3, b3, w4, b4, wmu, bmu, wstd, bstd) = params
    B, Cin, H, W = x_nchw.shape
    Hf, Wf, Cf = H - 6, W - 6, 32
    assert Hf * Wf * Cf == 1792

    bt = max(8, _rup(int(block_b), 8))
    bt = min(bt, _rup(B, 8))
    nsteps = _rup(B, bt) // bt
    B_pad = nsteps * bt

    # Padded lane widths per layer (multiples of 128 => unmasked matmuls / stores).
    k1 = (W + 2) * Cin                       # conv1 input lanes (w-major, channel-fastest)
    n1 = _rup(W * 4, 128)
    n2 = _rup((W - 2) * 8, 128)
    n3 = _rup((W - 4) * 16, 128)
    n4 = _rup((W - 6) * 32, 128)
    h0, h1, h2, h3, h4 = H + 2, H, H - 2, H - 4, H - 6

    t1 = _conv_toeplitz(w1, W + 2, k1, n1); br1 = _bias_row(b1, W, n1)
    t2 = _conv_toeplitz(w2, W, n1, n2);     br2 = _bias_row(b2, W - 2, n2)
    t3 = _conv_toeplitz(w3, W - 2, n2, n3); br3 = _bias_row(b3, W - 4, n3)
    t4 = _conv_toeplitz(w4, W - 4, n3, n4); br4 = _bias_row(b4, W - 6, n4)
    wlk, blk = _head_weights(wmu, bmu, wstd, bstd, Hf, Wf, Cf, n4)

    # Host-side restack: pad batch, pad conv1 (pad=1), lay rows out h-major / batch-minor
    # so the whole padded input is one lane-dense 2-D slab of shape (nsteps*h0*bt, k1).
    xk = jnp.transpose(x_nchw, (0, 2, 3, 1)).astype(jnp.float32)          # (B, H, W, C)
    xk = jnp.pad(xk, ((0, B_pad - B), (1, 1), (1, 1), (0, 0)))            # (B_pad, H+2, W+2, C)
    xk = xk.reshape(B_pad, h0, k1)
    xk = xk.reshape(nsteps, bt, h0, k1).transpose(0, 2, 1, 3).reshape(nsteps * h0 * bt, k1)

    eps_k = jnp.pad(eps.astype(jnp.float32).reshape(B, 3), ((0, B_pad - B), (0, 0)))

    def rep(arr):  # weight replicated across the batch grid (constant block index)
        zeros = (0,) * arr.ndim
        return pl.BlockSpec(arr.shape, lambda i, _z=zeros: _z)

    kernel = _make_actor_kernel(bt, (h0, h1, h2, h3, h4))

    out = pl.pallas_call(
        kernel,
        out_shape=jax.ShapeDtypeStruct((B_pad, 9), jnp.float32),
        grid=(nsteps,),
        in_specs=[
            pl.BlockSpec((h0 * bt, k1), lambda i: (i, 0)),   # stacked input slab
            rep(t1), rep(br1), rep(t2), rep(br2),
            rep(t3), rep(br3), rep(t4), rep(br4),
            rep(wlk), rep(blk),
            pl.BlockSpec((bt, 3), lambda i: (i, 0)),         # eps
        ],
        out_specs=pl.BlockSpec((bt, 9), lambda i: (i, 0)),
        scratch_shapes=[
            pltpu.VMEM((h1 * bt, n1), jnp.float32),
            pltpu.VMEM((h2 * bt, n2), jnp.float32),
            pltpu.VMEM((h3 * bt, n3), jnp.float32),
            pltpu.VMEM((h4 * bt, n4), jnp.float32),
        ],
        compiler_params=pltpu.CompilerParams(dimension_semantics=("parallel",)),
    )(xk, t1, br1, t2, br2, t3, br3, t4, br4, wlk, blk, eps_k)

    out = out[:B]
    return out[:, None, 0:3], out[:, None, 3:6], out[:, None, 6:9]


# --------------------------------------------------------------------------- reference
def actor_reference(x_nchw, params, eps):
    """Pure-JAX reference mirroring the PyTorch forward (same eps for rsample)."""
    (w1, b1, w2, b2, w3, b3, w4, b4, wmu, bmu, wstd, bstd) = params

    def conv(x, w, b, pad):
        y = jax.lax.conv_general_dilated(
            x, w, window_strides=(1, 1), padding=[(pad, pad), (pad, pad)],
            dimension_numbers=("NCHW", "OIHW", "NCHW"),
            precision=jax.lax.Precision.HIGHEST)
        return jax.nn.relu(y + b[None, :, None, None])

    h = conv(x_nchw, w1, b1, 1)
    h = conv(h, w2, b2, 0)
    h = conv(h, w3, b3, 0)
    h = conv(h, w4, b4, 0)
    B = h.shape[0]
    flat = h.reshape(B, 1, 1792)
    mean = jnp.matmul(flat, wmu.T, precision=jax.lax.Precision.HIGHEST) + bmu
    log_std = jnp.clip(jnp.matmul(flat, wstd.T, precision=jax.lax.Precision.HIGHEST) + bstd,
                       -20.0, 2.0)
    std = jnp.exp(log_std)
    x_t = mean + std * eps.reshape(B, 1, 3)
    y_t = jnp.tanh(x_t)
    action = jnp.clip(y_t * 2.0 + 2.0, 0.0, 3.99)
    log_prob = -((x_t - mean) ** 2) / (2.0 * std * std) - jnp.log(std) - _HALF_LOG_2PI
    entropy = -jnp.exp(log_prob) * log_prob
    return action, log_prob, entropy


def init_params(key):
    """Deterministic init matching the shapes of Actor.__init__ (PyTorch-style uniform)."""
    ks = jax.random.split(key, 12)

    def uconv(k, cout, cin):
        bound = 1.0 / math.sqrt(cin * 9)
        return jax.random.uniform(k, (cout, cin, 3, 3), jnp.float32, -bound, bound)

    def ubias(k, n, fan_in):
        bound = 1.0 / math.sqrt(fan_in)
        return jax.random.uniform(k, (n,), jnp.float32, -bound, bound)

    w1 = uconv(ks[0], 4, 4);    b1 = ubias(ks[1], 4, 36)
    w2 = uconv(ks[2], 8, 4);    b2 = ubias(ks[3], 8, 36)
    w3 = uconv(ks[4], 16, 8);   b3 = ubias(ks[5], 16, 72)
    w4 = uconv(ks[6], 32, 16);  b4 = ubias(ks[7], 32, 144)
    blin = 1.0 / math.sqrt(1792.0)
    wmu = jax.random.uniform(ks[8], (3, 1792), jnp.float32, -blin, blin)
    bmu = ubias(ks[9], 3, 1792)
    wstd = jax.random.uniform(ks[10], (3, 1792), jnp.float32, -blin, blin)
    bstd = ubias(ks[11], 3, 1792)
    return (w1, b1, w2, b2, w3, b3, w4, b4, wmu, bmu, wstd, bstd)


if __name__ == "__main__":
    key = jax.random.PRNGKey(0)
    kp, kx, ke = jax.random.split(key, 3)
    params = init_params(kp)

    # Input spatial size implied by the module: (H-6)*(W-6)*32 == 1792  ->  13 x 14.
    B, H, W = 12, 13, 14
    x = jax.random.normal(kx, (B, 4, H, W), jnp.float32)
    # TODO(synk): torch's internal RNG for Normal.rsample() is replaced by this explicit eps.
    eps = jax.random.normal(ke, (B, 3), jnp.float32)

    # Small config: Bt=8 samples per grid step, 2 grid steps, exercises batch padding.
    act, logp, ent = jax.block_until_ready(actor_forward_pallas(x, params, eps, block_b=8))
    r_act, r_logp, r_ent = actor_reference(x, params, eps)
    np.testing.assert_allclose(np.asarray(act), np.asarray(r_act), rtol=2e-3, atol=2e-3)
    np.testing.assert_allclose(np.asarray(logp), np.asarray(r_logp), rtol=2e-3, atol=2e-3)
    np.testing.assert_allclose(np.asarray(ent), np.asarray(r_ent), rtol=2e-3, atol=2e-3)

    # Performance-shaped config: Bt=32 samples per step on the MXU M dimension, 2 steps.
    kx2, ke2 = jax.random.split(jax.random.PRNGKey(1))
    B2 = 64
    x2 = jax.random.normal(kx2, (B2, 4, H, W), jnp.float32)
    eps2 = jax.random.normal(ke2, (B2, 3), jnp.float32)
    act2, logp2, ent2 = jax.block_until_ready(
        actor_forward_pallas(x2, params, eps2, block_b=32))
    r2_act, r2_logp, r2_ent = actor_reference(x2, params, eps2)
    np.testing.assert_allclose(np.asarray(act2), np.asarray(r2_act), rtol=2e-3, atol=2e-3)
    np.testing.assert_allclose(np.asarray(logp2), np.asarray(r2_logp), rtol=2e-3, atol=2e-3)
    np.testing.assert_allclose(np.asarray(ent2), np.asarray(r2_ent), rtol=2e-3, atol=2e-3)

    print("KERNEL_OK")
</pallas_src>

<mosaic_0001>
module attributes {stable_mosaic.version = 11 : i64} {
  func.func @kernel(%arg0: i32, %arg1: memref<120x64xf32, #tpu.memory_space<vmem>>, %arg2: memref<3x64x128xf32, #tpu.memory_space<vmem>>, %arg3: memref<1x128xf32, #tpu.memory_space<vmem>>, %arg4: memref<3x128x128xf32, #tpu.memory_space<vmem>>, %arg5: memref<1x128xf32, #tpu.memory_space<vmem>>, %arg6: memref<3x128x256xf32, #tpu.memory_space<vmem>>, %arg7: memref<1x256xf32, #tpu.memory_space<vmem>>, %arg8: memref<3x256x256xf32, #tpu.memory_space<vmem>>, %arg9: memref<1x256xf32, #tpu.memory_space<vmem>>, %arg10: memref<7x256x8xf32, #tpu.memory_space<vmem>>, %arg11: memref<1x8xf32, #tpu.memory_space<vmem>>, %arg12: memref<8x3xf32, #tpu.memory_space<vmem>>, %arg13: memref<8x9xf32, #tpu.memory_space<vmem>>, %arg14: memref<104x128xf32, #tpu.memory_space<vmem>>, %arg15: memref<88x128xf32, #tpu.memory_space<vmem>>, %arg16: memref<72x256xf32, #tpu.memory_space<vmem>>, %arg17: memref<56x256xf32, #tpu.memory_space<vmem>>) attributes {dimension_semantics = [#tpu.dimension_semantics<parallel>], iteration_bounds = array<i64: 2>, scalar_prefetch = 0 : i64, scratch_operands = 4 : i64, tpu.core_type = #tpu.core_type<tc>, window_params = [{transform_indices = @transform_0, window_bounds = array<i64: 120, 64>}, {pipeline_mode = #tpu.pipeline_mode<synchronous>, transform_indices = @transform_1, window_bounds = array<i64: 3, 64, 128>}, {pipeline_mode = #tpu.pipeline_mode<synchronous>, transform_indices = @transform_2, window_bounds = array<i64: 1, 128>}, {pipeline_mode = #tpu.pipeline_mode<synchronous>, transform_indices = @transform_3, window_bounds = array<i64: 3, 128, 128>}, {pipeline_mode = #tpu.pipeline_mode<synchronous>, transform_indices = @transform_4, window_bounds = array<i64: 1, 128>}, {pipeline_mode = #tpu.pipeline_mode<synchronous>, transform_indices = @transform_5, window_bounds = array<i64: 3, 128, 256>}, {pipeline_mode = #tpu.pipeline_mode<synchronous>, transform_indices = @transform_6, window_bounds = array<i64: 1, 256>}, {pipeline_mode = #tpu.pipeline_mode<synchronous>, transform_indices = @transform_7, window_bounds = array<i64: 3, 256, 256>}, {pipeline_mode = #tpu.pipeline_mode<synchronous>, transform_indices = @transform_8, window_bounds = array<i64: 1, 256>}, {pipeline_mode = #tpu.pipeline_mode<synchronous>, transform_indices = @transform_9, window_bounds = array<i64: 7, 256, 8>}, {pipeline_mode = #tpu.pipeline_mode<synchronous>, transform_indices = @transform_10, window_bounds = array<i64: 1, 8>}, {transform_indices = @transform_11, window_bounds = array<i64: 8, 3>}, {transform_indices = @transform_12, window_bounds = array<i64: 8, 9>}]} {
    %c0 = arith.constant 0 : index
    %c0_0 = arith.constant 0 : index
    %0 = vector.load %arg1[%c0, %c0_0] : memref<120x64xf32, #tpu.memory_space<vmem>>, vector<104x64xf32>
    %c0_1 = arith.constant 0 : index
    %c0_2 = arith.constant 0 : index
    %c0_3 = arith.constant 0 : index
    %1 = vector.load %arg2[%c0_1, %c0_2, %c0_3] : memref<3x64x128xf32, #tpu.memory_space<vmem>>, vector<1x64x128xf32>
    %2 = vector.shape_cast %1 : vector<1x64x128xf32> to vector<64x128xf32>
    %cst = arith.constant dense<0.000000e+00> : vector<104x128xf32>
    %3 = tpu.matmul %0, %2, %cst {dimension_numbers = #tpu.dot_dimension_numbers<[1], [0], [0], [1], [0, 0, 1, 1], [], []>} : vector<104x64xf32>, vector<64x128xf32>, vector<104x128xf32> -> vector<104x128xf32>
    %c8 = arith.constant 8 : index
    %c0_4 = arith.constant 0 : index
    %4 = vector.load %arg1[%c8, %c0_4] : memref<120x64xf32, #tpu.memory_space<vmem>>, vector<104x64xf32>
    %c1 = arith.constant 1 : index
    %c0_5 = arith.constant 0 : index
    %c0_6 = arith.constant 0 : index
    %5 = vector.load %arg2[%c1, %c0_5, %c0_6] : memref<3x64x128xf32, #tpu.memory_space<vmem>>, vector<1x64x128xf32>
    %6 = vector.shape_cast %5 : vector<1x64x128xf32> to vector<64x128xf32>
    %cst_7 = arith.constant dense<0.000000e+00> : vector<104x128xf32>
    %7 = tpu.matmul %4, %6, %cst_7 {dimension_numbers = #tpu.dot_dimension_numbers<[1], [0], [0], [1], [0, 0, 1, 1], [], []>} : vector<104x64xf32>, vector<64x128xf32>, vector<104x128xf32> -> vector<104x128xf32>
    %8 = arith.addf %3, %7 : vector<104x128xf32>
    %c16 = arith.constant 16 : index
    %c0_8 = arith.constant 0 : index
    %9 = vector.load %arg1[%c16, %c0_8] : memref<120x64xf32, #tpu.memory_space<vmem>>, vector<104x64xf32>
    %c2 = arith.constant 2 : index
    %c0_9 = arith.constant 0 : index
    %c0_10 = arith.constant 0 : index
    %10 = vector.load %arg2[%c2, %c0_9, %c0_10] : memref<3x64x128xf32, #tpu.memory_space<vmem>>, vector<1x64x128xf32>
    %11 = vector.shape_cast %10 : vector<1x64x128xf32> to vector<64x128xf32>
    %cst_11 = arith.constant dense<0.000000e+00> : vector<104x128xf32>
    %12 = tpu.matmul %9, %11, %cst_11 {dimension_numbers = #tpu.dot_dimension_numbers<[1], [0], [0], [1], [0, 0, 1, 1], [], []>} : vector<104x64xf32>, vector<64x128xf32>, vector<104x128xf32> -> vector<104x128xf32>
    %13 = arith.addf %8, %12 : vector<104x128xf32>
    %c0_12 = arith.constant 0 : index
    %c0_13 = arith.constant 0 : index
    %14 = vector.load %arg3[%c0_12, %c0_13] : memref<1x128xf32, #tpu.memory_space<vmem>>, vector<1x128xf32>
    %15 = vector.broadcast %14 : vector<1x128xf32> to vector<104x128xf32>
    %16 = arith.addf %13, %15 : vector<104x128xf32>
    %cst_14 = arith.constant 0.000000e+00 : f32
    %17 = vector.broadcast %cst_14 : f32 to vector<104x128xf32>
    %18 = arith.maximumf %16, %17 : vector<104x128xf32>
    %c0_15 = arith.constant 0 : index
    %c0_16 = arith.constant 0 : index
    %19 = vector.load %arg14[%c0_15, %c0_16] : memref<104x128xf32, #tpu.memory_space<vmem>>, vector<104x128xf32>
    tpu.vector_store %arg14[%c0_15, %c0_16], %18 {strides = array<i32>} : memref<104x128xf32, #tpu.memory_space<vmem>>, vector<104x128xf32>,
    %c0_17 = arith.constant 0 : index
    %c0_18 = arith.constant 0 : index
    %20 = vector.load %arg14[%c0_17, %c0_18] : memref<104x128xf32, #tpu.memory_space<vmem>>, vector<88x128xf32>
    %c0_19 = arith.constant 0 : index
    %c0_20 = arith.constant 0 : index
    %c0_21 = arith.constant 0 : index
    %21 = vector.load %arg4[%c0_19, %c0_20, %c0_21] : memref<3x128x128xf32, #tpu.memory_space<vmem>>, vector<1x128x128xf32>
    %22 = vector.shape_cast %21 : vector<1x128x128xf32> to vector<128x128xf32>
    %cst_22 = arith.constant dense<0.000000e+00> : vector<88x128xf32>
    %23 = tpu.matmul %20, %22, %cst_22 {dimension_numbers = #tpu.dot_dimension_numbers<[1], [0], [0], [1], [0, 0, 1, 1], [], []>} : vector<88x128xf32>, vector<128x128xf32>, vector<88x128xf32> -> vector<88x128xf32>
    %c8_23 = arith.constant 8 : index
    %c0_24 = arith.constant 0 : index
    %24 = vector.load %arg14[%c8_23, %c0_24] : memref<104x128xf32, #tpu.memory_space<vmem>>, vector<88x128xf32>
    %c1_25 = arith.constant 1 : index
    %c0_26 = arith.constant 0 : index
    %c0_27 = arith.constant 0 : index
    %25 = vector.load %arg4[%c1_25, %c0_26, %c0_27] : memref<3x128x128xf32, #tpu.memory_space<vmem>>, vector<1x128x128xf32>
    %26 = vector.shape_cast %25 : vector<1x128x128xf32> to vector<128x128xf32>
    %cst_28 = arith.constant dense<0.000000e+00> : vector<88x128xf32>
    %27 = tpu.matmul %24, %26, %cst_28 {dimension_numbers = #tpu.dot_dimension_numbers<[1], [0], [0], [1], [0, 0, 1, 1], [], []>} : vector<88x128xf32>, vector<128x128xf32>, vector<88x128xf32> -> vector<88x128xf32>
    %28 = arith.addf %23, %27 : vector<88x128xf32>
    %c16_29 = arith.constant 16 : index
    %c0_30 = arith.constant 0 : index
    %29 = vector.load %arg14[%c16_29, %c0_30] : memref<104x128xf32, #tpu.memory_space<vmem>>, vector<88x128xf32>
    %c2_31 = arith.constant 2 : index
    %c0_32 = arith.constant 0 : index
    %c0_33 = arith.constant 0 : index
    %30 = vector.load %arg4[%c2_31, %c0_32, %c0_33] : memref<3x128x128xf32, #tpu.memory_space<vmem>>, vector<1x128x128xf32>
    %31 = vector.shape_cast %30 : vector<1x128x128xf32> to vector<128x128xf32>
    %cst_34 = arith.constant dense<0.000000e+00> : vector<88x128xf32>
    %32 = tpu.matmul %29, %31, %cst_34 {dimension_numbers = #tpu.dot_dimension_numbers<[1], [0], [0], [1], [0, 0, 1, 1], [], []>} : vector<88x128xf32>, vector<128x128xf32>, vector<88x128xf32> -> vector<88x128xf32>
    %33 = arith.addf %28, %32 : vector<88x128xf32>
    %c0_35 = arith.constant 0 : index
    %c0_36 = arith.constant 0 : index
    %34 = vector.load %arg5[%c0_35, %c0_36] : memref<1x128xf32, #tpu.memory_space<vmem>>, vector<1x128xf32>
    %35 = vector.broadcast %34 : vector<1x128xf32> to vector<88x128xf32>
    %36 = arith.addf %33, %35 : vector<88x128xf32>
    %cst_37 = arith.constant 0.000000e+00 : f32
    %37 = vector.broadcast %cst_37 : f32 to vector<88x128xf32>
    %38 = arith.maximumf %36, %37 : vector<88x128xf32>
    %c0_38 = arith.constant 0 : index
    %c0_39 = arith.constant 0 : index
    %39 = vector.load %arg15[%c0_38, %c0_39] : memref<88x128xf32, #tpu.memory_space<vmem>>, vector<88x128xf32>
    tpu.vector_store %arg15[%c0_38, %c0_39], %38 {strides = array<i32>} : memref<88x128xf32, #tpu.memory_space<vmem>>, vector<88x128xf32>,
    %c0_40 = arith.constant 0 : index
    %c0_41 = arith.constant 0 : index
    %40 = vector.load %arg15[%c0_40, %c0_41] : memref<88x128xf32, #tpu.memory_space<vmem>>, vector<72x128xf32>
    %c0_42 = arith.constant 0 : index
    %c0_43 = arith.constant 0 : index
    %c0_44 = arith.constant 0 : index
    %41 = vector.load %arg6[%c0_42, %c0_43, %c0_44] : memref<3x128x256xf32, #tpu.memory_space<vmem>>, vector<1x128x256xf32>
    %42 = vector.shape_cast %41 : vector<1x128x256xf32> to vector<128x256xf32>
    %cst_45 = arith.constant dense<0.000000e+00> : vector<72x256xf32>
    %43 = tpu.matmul %40, %42, %cst_45 {dimension_numbers = #tpu.dot_dimension_numbers<[1], [0], [0], [1], [0, 0, 1, 1], [], []>} : vector<72x128xf32>, vector<128x256xf32>, vector<72x256xf32> -> vector<72x256xf32>
    %c8_46 = arith.constant 8 : index
    %c0_47 = arith.constant 0 : index
    %44 = vector.load %arg15[%c8_46, %c0_47] : memref<88x128xf32, #tpu.memory_space<vmem>>, vector<72x128xf32>
    %c1_48 = arith.constant 1 : index
    %c0_49 = arith.constant 0 : index
    %c0_50 = arith.constant 0 : index
    %45 = vector.load %arg6[%c1_48, %c0_49, %c0_50] : memref<3x128x256xf32, #tpu.memory_space<vmem>>, vector<1x128x256xf32>
    %46 = vector.shape_cast %45 : vector<1x128x256xf32> to vector<128x256xf32>
    %cst_51 = arith.constant dense<0.000000e+00> : vector<72x256xf32>
    %47 = tpu.matmul %44, %46, %cst_51 {dimension_numbers = #tpu.dot_dimension_numbers<[1], [0], [0], [1], [0, 0, 1, 1], [], []>} : vector<72x128xf32>, vector<128x256xf32>, vector<72x256xf32> -> vector<72x256xf32>
    %48 = arith.addf %43, %47 : vector<72x256xf32>
    %c16_52 = arith.constant 16 : index
    %c0_53 = arith.constant 0 : index
    %49 = vector.load %arg15[%c16_52, %c0_53] : memref<88x128xf32, #tpu.memory_space<vmem>>, vector<72x128xf32>
    %c2_54 = arith.constant 2 : index
    %c0_55 = arith.constant 0 : index
    %c0_56 = arith.constant 0 : index
    %50 = vector.load %arg6[%c2_54, %c0_55, %c0_56] : memref<3x128x256xf32, #tpu.memory_space<vmem>>, vector<1x128x256xf32>
    %51 = vector.shape_cast %50 : vector<1x128x256xf32> to vector<128x256xf32>
    %cst_57 = arith.constant dense<0.000000e+00> : vector<72x256xf32>
    %52 = tpu.matmul %49, %51, %cst_57 {dimension_numbers = #tpu.dot_dimension_numbers<[1], [0], [0], [1], [0, 0, 1, 1], [], []>} : vector<72x128xf32>, vector<128x256xf32>, vector<72x256xf32> -> vector<72x256xf32>
    %53 = arith.addf %48, %52 : vector<72x256xf32>
    %c0_58 = arith.constant 0 : index
    %c0_59 = arith.constant 0 : index
    %54 = vector.load %arg7[%c0_58, %c0_59] : memref<1x256xf32, #tpu.memory_space<vmem>>, vector<1x256xf32>
    %55 = vector.broadcast %54 : vector<1x256xf32> to vector<72x256xf32>
    %56 = arith.addf %53, %55 : vector<72x256xf32>
    %cst_60 = arith.constant 0.000000e+00 : f32
    %57 = vector.broadcast %cst_60 : f32 to vector<72x256xf32>
    %58 = arith.maximumf %56, %57 : vector<72x256xf32>
    %c0_61 = arith.constant 0 : index
    %c0_62 = arith.constant 0 : index
    %59 = vector.load %arg16[%c0_61, %c0_62] : memref<72x256xf32, #tpu.memory_space<vmem>>, vector<72x256xf32>
    tpu.vector_store %arg16[%c0_61, %c0_62], %58 {strides = array<i32>} : memref<72x256xf32, #tpu.memory_space<vmem>>, vector<72x256xf32>,
    %c0_63 = arith.constant 0 : index
    %c0_64 = arith.constant 0 : index
    %60 = vector.load %arg16[%c0_63, %c0_64] : memref<72x256xf32, #tpu.memory_space<vmem>>, vector<56x256xf32>
    %c0_65 = arith.constant 0 : index
    %c0_66 = arith.constant 0 : index
    %c0_67 = arith.constant 0 : index
    %61 = vector.load %arg8[%c0_65, %c0_66, %c0_67] : memref<3x256x256xf32, #tpu.memory_space<vmem>>, vector<1x256x256xf32>
    %62 = vector.shape_cast %61 : vector<1x256x256xf32> to vector<256x256xf32>
    %cst_68 = arith.constant dense<0.000000e+00> : vector<56x256xf32>
    %63 = tpu.matmul %60, %62, %cst_68 {dimension_numbers = #tpu.dot_dimension_numbers<[1], [0], [0], [1], [0, 0, 1, 1], [], []>} : vector<56x256xf32>, vector<256x256xf32>, vector<56x256xf32> -> vector<56x256xf32>
    %c8_69 = arith.constant 8 : index
    %c0_70 = arith.constant 0 : index
    %64 = vector.load %arg16[%c8_69, %c0_70] : memref<72x256xf32, #tpu.memory_space<vmem>>, vector<56x256xf32>
    %c1_71 = arith.constant 1 : index
    %c0_72 = arith.constant 0 : index
    %c0_73 = arith.constant 0 : index
    %65 = vector.load %arg8[%c1_71, %c0_72, %c0_73] : memref<3x256x256xf32, #tpu.memory_space<vmem>>, vector<1x256x256xf32>
    %66 = vector.shape_cast %65 : vector<1x256x256xf32> to vector<256x256xf32>
    %cst_74 = arith.constant dense<0.000000e+00> : vector<56x256xf32>
    %67 = tpu.matmul %64, %66, %cst_74 {dimension_numbers = #tpu.dot_dimension_numbers<[1], [0], [0], [1], [0, 0, 1, 1], [], []>} : vector<56x256xf32>, vector<256x256xf32>, vector<56x256xf32> -> vector<56x256xf32>
    %68 = arith.addf %63, %67 : vector<56x256xf32>
    %c16_75 = arith.constant 16 : index
    %c0_76 = arith.constant 0 : index
    %69 = vector.load %arg16[%c16_75, %c0_76] : memref<72x256xf32, #tpu.memory_space<vmem>>, vector<56x256xf32>
    %c2_77 = arith.constant 2 : index
    %c0_78 = arith.constant 0 : index
    %c0_79 = arith.constant 0 : index
    %70 = vector.load %arg8[%c2_77, %c0_78, %c0_79] : memref<3x256x256xf32, #tpu.memory_space<vmem>>, vector<1x256x256xf32>
    %71 = vector.shape_cast %70 : vector<1x256x256xf32> to vector<256x256xf32>
    %cst_80 = arith.constant dense<0.000000e+00> : vector<56x256xf32>
    %72 = tpu.matmul %69, %71, %cst_80 {dimension_numbers = #tpu.dot_dimension_numbers<[1], [0], [0], [1], [0, 0, 1, 1], [], []>} : vector<56x256xf32>, vector<256x256xf32>, vector<56x256xf32> -> vector<56x256xf32>
    %73 = arith.addf %68, %72 : vector<56x256xf32>
    %c0_81 = arith.constant 0 : index
    %c0_82 = arith.constant 0 : index
    %74 = vector.load %arg9[%c0_81, %c0_82] : memref<1x256xf32, #tpu.memory_space<vmem>>, vector<1x256xf32>
    %75 = vector.broadcast %74 : vector<1x256xf32> to vector<56x256xf32>
    %76 = arith.addf %73, %75 : vector<56x256xf32>
    %cst_83 = arith.constant 0.000000e+00 : f32
    %77 = vector.broadcast %cst_83 : f32 to vector<56x256xf32>
    %78 = arith.maximumf %76, %77 : vector<56x256xf32>
    %c0_84 = arith.constant 0 : index
    %c0_85 = arith.constant 0 : index
    %79 = vector.load %arg17[%c0_84, %c0_85] : memref<56x256xf32, #tpu.memory_space<vmem>>, vector<56x256xf32>
    tpu.vector_store %arg17[%c0_84, %c0_85], %78 {strides = array<i32>} : memref<56x256xf32, #tpu.memory_space<vmem>>, vector<56x256xf32>,
    %c0_86 = arith.constant 0 : index
    %c0_87 = arith.constant 0 : index
    %80 = vector.load %arg17[%c0_86, %c0_87] : memref<56x256xf32, #tpu.memory_space<vmem>>, vector<8x256xf32>
    %c0_88 = arith.constant 0 : index
    %c0_89 = arith.constant 0 : index
    %c0_90 = arith.constant 0 : index
    %81 = vector.load %arg10[%c0_88, %c0_89, %c0_90] : memref<7x256x8xf32, #tpu.memory_space<vmem>>, vector<1x256x8xf32>
    %82 = vector.shape_cast %81 : vector<1x256x8xf32> to vector<256x8xf32>
    %cst_91 = arith.constant dense<0.000000e+00> : vector<8x8xf32>
    %83 = tpu.matmul %80, %82, %cst_91 {dimension_numbers = #tpu.dot_dimension_numbers<[1], [0], [0], [1], [0, 0, 1, 1], [], []>} : vector<8x256xf32>, vector<256x8xf32>, vector<8x8xf32> -> vector<8x8xf32>
    %c8_92 = arith.constant 8 : index
    %c0_93 = arith.constant 0 : index
    %84 = vector.load %arg17[%c8_92, %c0_93] : memref<56x256xf32, #tpu.memory_space<vmem>>, vector<8x256xf32>
    %c1_94 = arith.constant 1 : index
    %c0_95 = arith.constant 0 : index
    %c0_96 = arith.constant 0 : index
    %85 = vector.load %arg10[%c1_94, %c0_95, %c0_96] : memref<7x256x8xf32, #tpu.memory_space<vmem>>, vector<1x256x8xf32>
    %86 = vector.shape_cast %85 : vector<1x256x8xf32> to vector<256x8xf32>
    %cst_97 = arith.constant dense<0.000000e+00> : vector<8x8xf32>
    %87 = tpu.matmul %84, %86, %cst_97 {dimension_numbers = #tpu.dot_dimension_numbers<[1], [0], [0], [1], [0, 0, 1, 1], [], []>} : vector<8x256xf32>, vector<256x8xf32>, vector<8x8xf32> -> vector<8x8xf32>
    %c16_98 = arith.constant 16 : index
    %c0_99 = arith.constant 0 : index
    %88 = vector.load %arg17[%c16_98, %c0_99] : memref<56x256xf32, #tpu.memory_space<vmem>>, vector<8x256xf32>
    %c2_100 = arith.constant 2 : index
    %c0_101 = arith.constant 0 : index
    %c0_102 = arith.constant 0 : index
    %89 = vector.load %arg10[%c2_100, %c0_101, %c0_102] : memref<7x256x8xf32, #tpu.memory_space<vmem>>, vector<1x256x8xf32>
    %90 = vector.shape_cast %89 : vector<1x256x8xf32> to vector<256x8xf32>
    %cst_103 = arith.constant dense<0.000000e+00> : vector<8x8xf32>
    %91 = tpu.matmul %88, %90, %cst_103 {dimension_numbers = #tpu.dot_dimension_numbers<[1], [0], [0], [1], [0, 0, 1, 1], [], []>} : vector<8x256xf32>, vector<256x8xf32>, vector<8x8xf32> -> vector<8x8xf32>
    %c24 = arith.constant 24 : index
    %c0_104 = arith.constant 0 : index
    %92 = vector.load %arg17[%c24, %c0_104] : memref<56x256xf32, #tpu.memory_space<vmem>>, vector<8x256xf32>
    %c3 = arith.constant 3 : index
    %c0_105 = arith.constant 0 : index
    %c0_106 = arith.constant 0 : index
    %93 = vector.load %arg10[%c3, %c0_105, %c0_106] : memref<7x256x8xf32, #tpu.memory_space<vmem>>, vector<1x256x8xf32>
    %94 = vector.shape_cast %93 : vector<1x256x8xf32> to vector<256x8xf32>
    %cst_107 = arith.constant dense<0.000000e+00> : vector<8x8xf32>
    %95 = tpu.matmul %92, %94, %cst_107 {dimension_numbers = #tpu.dot_dimension_numbers<[1], [0], [0], [1], [0, 0, 1, 1], [], []>} : vector<8x256xf32>, vector<256x8xf32>, vector<8x8xf32> -> vector<8x8xf32>
    %c32 = arith.constant 32 : index
    %c0_108 = arith.constant 0 : index
    %96 = vector.load %arg17[%c32, %c0_108] : memref<56x256xf32, #tpu.memory_space<vmem>>, vector<8x256xf32>
    %c4 = arith.constant 4 : index
    %c0_109 = arith.constant 0 : index
    %c0_110 = arith.constant 0 : index
    %97 = vector.load %arg10[%c4, %c0_109, %c0_110] : memref<7x256x8xf32, #tpu.memory_space<vmem>>, vector<1x256x8xf32>
    %98 = vector.shape_cast %97 : vector<1x256x8xf32> to vector<256x8xf32>
    %cst_111 = arith.constant dense<0.000000e+00> : vector<8x8xf32>
    %99 = tpu.matmul %96, %98, %cst_111 {dimension_numbers = #tpu.dot_dimension_numbers<[1], [0], [0], [1], [0, 0, 1, 1], [], []>} : vector<8x256xf32>, vector<256x8xf32>, vector<8x8xf32> -> vector<8x8xf32>
    %c40 = arith.constant 40 : index
    %c0_112 = arith.constant 0 : index
    %100 = vector.load %arg17[%c40, %c0_112] : memref<56x256xf32, #tpu.memory_space<vmem>>, vector<8x256xf32>
    %c5 = arith.constant 5 : index
    %c0_113 = arith.constant 0 : index
    %c0_114 = arith.constant 0 : index
    %101 = vector.load %arg10[%c5, %c0_113, %c0_114] : memref<7x256x8xf32, #tpu.memory_space<vmem>>, vector<1x256x8xf32>
    %102 = vector.shape_cast %101 : vector<1x256x8xf32> to vector<256x8xf32>
    %cst_115 = arith.constant dense<0.000000e+00> : vector<8x8xf32>
    %103 = tpu.matmul %100, %102, %cst_115 {dimension_numbers = #tpu.dot_dimension_numbers<[1], [0], [0], [1], [0, 0, 1, 1], [], []>} : vector<8x256xf32>, vector<256x8xf32>, vector<8x8xf32> -> vector<8x8xf32>
    %c48 = arith.constant 48 : index
    %c0_116 = arith.constant 0 : index
    %104 = vector.load %arg17[%c48, %c0_116] : memref<56x256xf32, #tpu.memory_space<vmem>>, vector<8x256xf32>
    %c6 = arith.constant 6 : index
    %c0_117 = arith.constant 0 : index
    %c0_118 = arith.constant 0 : index
    %105 = vector.load %arg10[%c6, %c0_117, %c0_118] : memref<7x256x8xf32, #tpu.memory_space<vmem>>, vector<1x256x8xf32>
    %106 = vector.shape_cast %105 : vector<1x256x8xf32> to vector<256x8xf32>
    %cst_119 = arith.constant dense<0.000000e+00> : vector<8x8xf32>
    %107 = tpu.matmul %104, %106, %cst_119 {dimension_numbers = #tpu.dot_dimension_numbers<[1], [0], [0], [1], [0, 0, 1, 1], [], []>} : vector<8x256xf32>, vector<256x8xf32>, vector<8x8xf32> -> vector<8x8xf32>
    %108 = arith.addf %83, %87 : vector<8x8xf32>
    %109 = arith.addf %91, %95 : vector<8x8xf32>
    %110 = arith.addf %99, %103 : vector<8x8xf32>
    %111 = arith.addf %108, %109 : vector<8x8xf32>
    %112 = arith.addf %110, %107 : vector<8x8xf32>
    %113 = arith.addf %111, %112 : vector<8x8xf32>
    %c0_120 = arith.constant 0 : index
    %c0_121 = arith.constant 0 : index
    %114 = vector.load %arg11[%c0_120, %c0_121] : memref<1x8xf32, #tpu.memory_space<vmem>>, vector<1x8xf32>
    %115 = vector.broadcast %114 : vector<1x8xf32> to vector<8x8xf32>
    %116 = arith.addf %113, %115 : vector<8x8xf32>
    %117 = vector.extract_strided_slice %116 {offsets = [0, 0], sizes = [8, 3], strides = [1, 1]} : vector<8x8xf32> to vector<8x3xf32>
    %118 = vector.extract_strided_slice %116 {offsets = [0, 3], sizes = [8, 3], strides = [1, 1]} : vector<8x8xf32> to vector<8x3xf32>
    %cst_122 = arith.constant -2.000000e+01 : f32
    %cst_123 = arith.constant 2.000000e+00 : f32
    %119 = vector.broadcast %cst_122 : f32 to vector<8x3xf32>
    %120 = arith.maximumf %119, %118 : vector<8x3xf32>
    %121 = vector.broadcast %cst_123 : f32 to vector<8x3xf32>
    %122 = arith.minimumf %121, %120 : vector<8x3xf32>
    %123 = math.exp %122 : vector<8x3xf32>
    %c0_124 = arith.constant 0 : index
    %c0_125 = arith.constant 0 : index
    %124 = vector.load %arg12[%c0_124, %c0_125] : memref<8x3xf32, #tpu.memory_space<vmem>>, vector<8x3xf32>
    %125 = arith.mulf %123, %124 : vector<8x3xf32>
    %126 = arith.addf %117, %125 : vector<8x3xf32>
    %127 = math.tanh %126 : vector<8x3xf32>
    %cst_126 = arith.constant 2.000000e+00 : f32
    %128 = vector.broadcast %cst_126 : f32 to vector<8x3xf32>
    %129 = arith.mulf %127, %128 : vector<8x3xf32>
    %cst_127 = arith.constant 2.000000e+00 : f32
    %130 = vector.broadcast %cst_127 : f32 to vector<8x3xf32>
    %131 = arith.addf %129, %130 : vector<8x3xf32>
    %cst_128 = arith.constant 0.000000e+00 : f32
    %cst_129 = arith.constant 3.990000e+00 : f32
    %132 = vector.broadcast %cst_128 : f32 to vector<8x3xf32>
    %133 = arith.maximumf %132, %131 : vector<8x3xf32>
    %134 = vector.broadcast %cst_129 : f32 to vector<8x3xf32>
    %135 = arith.minimumf %134, %133 : vector<8x3xf32>
    %136 = arith.mulf %124, %124 : vector<8x3xf32>
    %cst_130 = arith.constant -5.000000e-01 : f32
    %137 = vector.broadcast %cst_130 : f32 to vector<8x3xf32>
    %138 = arith.mulf %137, %136 : vector<8x3xf32>
    %139 = arith.subf %138, %122 : vector<8x3xf32>
    %cst_131 = arith.constant 0.918938517 : f32
    %140 = vector.broadcast %cst_131 : f32 to vector<8x3xf32>
    %141 = arith.subf %139, %140 : vector<8x3xf32>
    %142 = math.exp %141 : vector<8x3xf32>
    %cst_132 = arith.constant 0.000000e+00 : f32
    %143 = vector.broadcast %cst_132 : f32 to vector<8x3xf32>
    %144 = arith.subf %143, %142 : vector<8x3xf32>
    %145 = arith.mulf %144, %141 : vector<8x3xf32>
    %146 = tpu.concatenate %135, %141, %145 in 1 : vector<8x3xf32>, vector<8x3xf32>, vector<8x3xf32> -> vector<8x9xf32>
    %c0_133 = arith.constant 0 : index
    %c0_134 = arith.constant 0 : index
    %147 = vector.load %arg13[%c0_133, %c0_134] : memref<8x9xf32, #tpu.memory_space<vmem>>, vector<8x9xf32>
    tpu.vector_store %arg13[%c0_133, %c0_134], %146 {strides = array<i32>} : memref<8x9xf32, #tpu.memory_space<vmem>>, vector<8x9xf32>,
    return
  }
  func.func @transform_0(%arg0: i32) -> (i32, i32) {
    %c0_i32 = arith.constant 0 : i32
    %c0_i32_0 = arith.constant 0 : i32
    return %arg0, %c0_i32 : i32, i32
  }
  func.func @transform_1(%arg0: i32) -> (i32, i32, i32) {
    %c0_i32 = arith.constant 0 : i32
    %c0_i32_0 = arith.constant 0 : i32
    %c0_i32_1 = arith.constant 0 : i32
    %c0_i32_2 = arith.constant 0 : i32
    return %c0_i32, %c0_i32_0, %c0_i32_1 : i32, i32, i32
  }
  func.func @transform_2(%arg0: i32) -> (i32, i32) {
    %c0_i32 = arith.constant 0 : i32
    %c0_i32_0 = arith.constant 0 : i32
    %c0_i32_1 = arith.constant 0 : i32
    return %c0_i32, %c0_i32_0 : i32, i32
  }
  func.func @transform_3(%arg0: i32) -> (i32, i32, i32) {
    %c0_i32 = arith.constant 0 : i32
    %c0_i32_0 = arith.constant 0 : i32
    %c0_i32_1 = arith.constant 0 : i32
    %c0_i32_2 = arith.constant 0 : i32
    return %c0_i32, %c0_i32_0, %c0_i32_1 : i32, i32, i32
  }
  func.func @transform_4(%arg0: i32) -> (i32, i32) {
    %c0_i32 = arith.constant 0 : i32
    %c0_i32_0 = arith.constant 0 : i32
    %c0_i32_1 = arith.constant 0 : i32
    return %c0_i32, %c0_i32_0 : i32, i32
  }
  func.func @transform_5(%arg0: i32) -> (i32, i32, i32) {
    %c0_i32 = arith.constant 0 : i32
    %c0_i32_0 = arith.constant 0 : i32
    %c0_i32_1 = arith.constant 0 : i32
    %c0_i32_2 = arith.constant 0 : i32
    return %c0_i32, %c0_i32_0, %c0_i32_1 : i32, i32, i32
  }
  func.func @transform_6(%arg0: i32) -> (i32, i32) {
    %c0_i32 = arith.constant 0 : i32
    %c0_i32_0 = arith.constant 0 : i32
    %c0_i32_1 = arith.constant 0 : i32
    return %c0_i32, %c0_i32_0 : i32, i32
  }
  func.func @transform_7(%arg0: i32) -> (i32, i32, i32) {
    %c0_i32 = arith.constant 0 : i32
    %c0_i32_0 = arith.constant 0 : i32
    %c0_i32_1 = arith.constant 0 : i32
    %c0_i32_2 = arith.constant 0 : i32
    return %c0_i32, %c0_i32_0, %c0_i32_1 : i32, i32, i32
  }
  func.func @transform_8(%arg0: i32) -> (i32, i32) {
    %c0_i32 = arith.constant 0 : i32
    %c0_i32_0 = arith.constant 0 : i32
    %c0_i32_1 = arith.constant 0 : i32
    return %c0_i32, %c0_i32_0 : i32, i32
  }
  func.func @transform_9(%arg0: i32) -> (i32, i32, i32) {
    %c0_i32 = arith.constant 0 : i32
    %c0_i32_0 = arith.constant 0 : i32
    %c0_i32_1 = arith.constant 0 : i32
    %c0_i32_2 = arith.constant 0 : i32
    return %c0_i32, %c0_i32_0, %c0_i32_1 : i32, i32, i32
  }
  func.func @transform_10(%arg0: i32) -> (i32, i32) {
    %c0_i32 = arith.constant 0 : i32
    %c0_i32_0 = arith.constant 0 : i32
    %c0_i32_1 = arith.constant 0 : i32
    return %c0_i32, %c0_i32_0 : i32, i32
  }
  func.func @transform_11(%arg0: i32) -> (i32, i32) {
    %c0_i32 = arith.constant 0 : i32
    %c0_i32_0 = arith.constant 0 : i32
    return %arg0, %c0_i32 : i32, i32
  }
  func.func @transform_12(%arg0: i32) -> (i32, i32) {
    %c0_i32 = arith.constant 0 : i32
    %c0_i32_0 = arith.constant 0 : i32
    return %arg0, %c0_i32 : i32, i32
  }
}

</mosaic_0001>

<llo_original>
// kernel: tpu_custom_call.1
$region0: #{tpu_custom_call.1}
  #allocation0 [shape = 'u32[]', space=smem, size = 0x4, offset = 0x4, fixed_abs, tag = 'smem constant byte address 0x4 - core index']
  #allocation1 [shape = 'u32[144,128]{1,0:T(1,128)}', space=vmem, size = 0x12000, scoped, tag = 'internal scratch']
  #allocation2 [shape = 'f32[104,128]{1,0:T(8,128)}', space=vmem, size = 0xd000, scoped, tag = 'scratch operand']
  #allocation3 [shape = 'f32[88,128]{1,0:T(8,128)}', space=vmem, size = 0xb000, scoped, tag = 'scratch operand']
  #allocation4 [shape = 'f32[72,256]{1,0:T(8,128)}', space=vmem, size = 0x12000, scoped, tag = 'scratch operand']
  #allocation5 [shape = 'f32[56,256]{1,0:T(8,128)}', space=vmem, size = 0xe000, scoped, tag = 'scratch operand']
  %s0 = inlined_call_operand.vmem [shape: f32[240,64], index: 0, kind: input, shape index: {}]
  %s1 = inlined_call_operand.hbm [shape: f32[3,64,128], index: 1, kind: input, shape index: {}]
  %s2 = inlined_call_operand.hbm [shape: f32[1,128], index: 2, kind: input, shape index: {}]
  %s3 = inlined_call_operand.hbm [shape: f32[3,128,128], index: 3, kind: input, shape index: {}]
  %s4 = inlined_call_operand.hbm [shape: f32[1,128], index: 4, kind: input, shape index: {}]
  %s5 = inlined_call_operand.vmem [shape: f32[3,128,256], index: 5, kind: input, shape index: {}]
  %s6 = inlined_call_operand.hbm [shape: f32[1,256], index: 6, kind: input, shape index: {}]
  %s7 = inlined_call_operand.vmem [shape: f32[3,256,256], index: 7, kind: input, shape index: {}]
  %s8 = inlined_call_operand.hbm [shape: f32[1,256], index: 8, kind: input, shape index: {}]
  %s9 = inlined_call_operand.vmem [shape: f32[7,256,8], index: 9, kind: input, shape index: {}]
  %s10 = inlined_call_operand.hbm [shape: f32[1,8], index: 10, kind: input, shape index: {}]
  %s11 = inlined_call_operand.vmem [shape: f32[16,3], index: 11, kind: input, shape index: {}]
  %s12 = inlined_call_operand.hbm [shape: f32[16,9], index: 12, kind: output, shape index: {}]
  %s13 = sld [smem:[#allocation0]]
  $region109: #{tpu_custom_call.1} parent=0
    _
  %s15 = ssub.s32 1, %s13
  %s16 = scalar_select 0, %s15, %s13
  $region1: #{tpu_custom_call.1} parent=0
    #allocation6 [shape = 'u8[98304]{0}', space=vmem, size = 0x18000, scoped, tag = 'input window, operand 1, single buffered']
    #allocation7 [shape = 's32[2]{0}', space=sflag, size = 0x8, scoped, tag = 'scoped memory for tpu_custom_call.1']
    #allocation8 [shape = 's32[2]{0}', space=sflag, size = 0x8, scoped, tag = 'scoped memory for tpu_custom_call.1']
    #allocation9 [shape = 'u8[512]{0}', space=vmem, size = 0x400, scoped, tag = 'input window, operand 2, single buffered']
    #allocation10 [shape = 's32[1]{0}', space=sflag, size = 0x4, scoped, tag = 'scoped memory for tpu_custom_call.1']
    #allocation11 [shape = 'u8[196608]{0}', space=vmem, size = 0x30000, scoped, tag = 'input window, operand 3, single buffered']
    #allocation12 [shape = 'u8[512]{0}', space=vmem, size = 0x400, scoped, tag = 'input window, operand 4, single buffered']
    #allocation13 [shape = 's32[1]{0}', space=sflag, size = 0x4, scoped, tag = 'scoped memory for tpu_custom_call.1']
    #allocation14 [shape = 'u8[1024]{0}', space=vmem, size = 0x400, scoped, tag = 'input window, operand 6, single buffered']
    #allocation15 [shape = 'u8[1024]{0}', space=vmem, size = 0x400, scoped, tag = 'input window, operand 8, single buffered']
    #allocation16 [shape = 's32[1]{0}', space=sflag, size = 0x4, scoped, tag = 'scoped memory for tpu_custom_call.1']
    #allocation17 [shape = 'u8[512]{0}', space=vmem, size = 0x400, scoped, tag = 'input window, operand 10, single buffered']
    #allocation18 [shape = 'u8[8192]{0}', space=vmem, size = 0x2000, scoped, tag = 'output window, operand 0']
    %17 = vsyncpa [#allocation7], 0
    %18 = vsyncpa [#allocation10], 0
    %19 = vsyncpa [#allocation13], 0
    %20 = vsyncpa [#allocation16], 0
    %21 = vsyncpa [#allocation8], 0
    %s22 = scalar_lea.sflag [#allocation8], 1
    %23 = vsyncpa %s22, 0
    loop: start=0, step=1, limit=4
    $region2: #{tpu_custom_call.1} parent=1 // loop_pre_header
      _
    $region3: #{tpu_custom_call.1} parent=1 // loop_header
      %s25 = sphi 0, %s29
      %p26 = scmp.ge.s32.totalorder %s25, 4
      %s35 = sphi 0, %s37
      %s38 = sphi 0, %s35
      %s39 = sphi 0, %s38
      %s55 = sphi 0, %s39
      %s59 = sphi 0, %s59
      %s61 = sphi 0, %s59
      %s62 = sphi 0, %s61
      %s76 = sphi 0, %s62
      %s80 = sphi 0, %s80
      %s82 = sphi 0, %s80
      %s83 = sphi 0, %s82
      %s97 = sphi 0, %s83
      %s101 = sphi 0, %s101
      %s103 = sphi 0, %s101
      %s104 = sphi 0, %s103
      %s118 = sphi 0, %s104
      %s122 = sphi 0, %s122
      %s124 = sphi 0, %s122
      %s125 = sphi 0, %s124
      %s139 = sphi 0, %s125
      %s143 = sphi 0, %s143
      %s145 = sphi 0, %s143
      %s146 = sphi 0, %s145
      %s160 = sphi 0, %s146
      %s164 = sphi 0, %s164
      %s166 = sphi 0, %s164
      %s167 = sphi 0, %s166
      %s181 = sphi 0, %s167
      %s185 = sphi 0, %s185
      %s187 = sphi 0, %s185
      %s188 = sphi 0, %s187
      %s202 = sphi 0, %s188
      %s206 = sphi 0, %s206
      %s208 = sphi 0, %s206
      %s209 = sphi 0, %s208
      %s223 = sphi 0, %s209
      %s227 = sphi 0, %s227
      %s229 = sphi 0, %s227
      %s230 = sphi 0, %s229
      %s244 = sphi 0, %s230
      %s248 = sphi 0, %s248
      %s250 = sphi 0, %s248
      %s251 = sphi 0, %s250
      %s265 = sphi 0, %s251
      %s271 = sphi 0, %s273
      %s274 = sphi 0, %s271
      %s275 = sphi 0, %s274
      %s291 = sphi 0, %s275
      %s297 = sphi 0, %s299
      %s300 = sphi 0, %s297
      %s301 = sphi 0, %s300
      %s317 = sphi 0, %s301
    $region4: #{tpu_custom_call.1} parent=1 // loop_header_branch
      %28 = sbr.rel (%p26) target = $region8
    $region5: #{tpu_custom_call.1} parent=1 // loop_body
      %s30 = ssub.s32 %s25, 1
      %s31 = ssub.s32 %s25, 2
      %s32 = sadd.s32 %s25, 1
      %s33 = ssub.s32 %s25, %s32
      %p34 = scmp.eq.s32.totalorder %s33, 0
      %s36 = sadd.s32 %s35, 1
      %s37 = scalar_select %p34, %s35, %s36
      %p40 = pneg %p34
      %p41 = scmp.eq.s32.totalorder %s25, 1
      %p42 = por %p40, %p41
      %p43 = scmp.ne.s32.totalorder %s35, %s38
      %p44 = scmp.eq.s32.totalorder %s25, 0
      %p45 = por %p43, %p44
      %p46 = scmp.ne.s32.totalorder %s35, %s38
      %p47 = scmp.eq.s32.totalorder %s30, 1
      %p48 = por %p46, %p47
      %p49 = scmp.ne.s32.totalorder %s38, %s39
      %p50 = scmp.eq.s32.totalorder %s30, 0
      %p51 = por %p49, %p50
      %p52 = scmp.ne.s32.totalorder %s38, %s39
      %p53 = scmp.eq.s32.totalorder %s31, 1
      %p54 = por %p52, %p53
      %p56 = scmp.ne.s32.totalorder %s39, %s55
      %p57 = scmp.eq.s32.totalorder %s31, 0
      %p58 = por %p56, %p57
      %s60 = sadd.s32 %s59, 1
      %p63 = scmp.eq.s32.totalorder %s25, 1
      %p64 = scmp.ne.s32.totalorder %s59, %s61
      %p65 = scmp.eq.s32.totalorder %s25, 0
      %p66 = por %p64, %p65
      %p67 = scmp.ne.s32.totalorder %s59, %s61
      %p68 = scmp.eq.s32.totalorder %s30, 1
      %p69 = por %p67, %p68
      %p70 = scmp.ne.s32.totalorder %s61, %s62
      %p71 = scmp.eq.s32.totalorder %s30, 0
      %p72 = por %p70, %p71
      %p73 = scmp.ne.s32.totalorder %s61, %s62
      %p74 = scmp.eq.s32.totalorder %s31, 1
      %p75 = por %p73, %p74
      %p77 = scmp.ne.s32.totalorder %s62, %s76
      %p78 = scmp.eq.s32.totalorder %s31, 0
      %p79 = por %p77, %p78
      %s81 = sadd.s32 %s80, 1
      %p84 = scmp.eq.s32.totalorder %s25, 1
      %p85 = scmp.ne.s32.totalorder %s80, %s82
      %p86 = scmp.eq.s32.totalorder %s25, 0
      %p87 = por %p85, %p86
      %p88 = scmp.ne.s32.totalorder %s80, %s82
      %p89 = scmp.eq.s32.totalorder %s30, 1
      %p90 = por %p88, %p89
      %p91 = scmp.ne.s32.totalorder %s82, %s83
      %p92 = scmp.eq.s32.totalorder %s30, 0
      %p93 = por %p91, %p92
      %p94 = scmp.ne.s32.totalorder %s82, %s83
      %p95 = scmp.eq.s32.totalorder %s31, 1
      %p96 = por %p94, %p95
      %p98 = scmp.ne.s32.totalorder %s83, %s97
      %p99 = scmp.eq.s32.totalorder %s31, 0
      %p100 = por %p98, %p99
      %s102 = sadd.s32 %s101, 1
      %p105 = scmp.eq.s32.totalorder %s25, 1
      %p106 = scmp.ne.s32.totalorder %s101, %s103
      %p107 = scmp.eq.s32.totalorder %s25, 0
      %p108 = por %p106, %p107
      %p109 = scmp.ne.s32.totalorder %s101, %s103
      %p110 = scmp.eq.s32.totalorder %s30, 1
      %p111 = por %p109, %p110
      %p112 = scmp.ne.s32.totalorder %s103, %s104
      %p113 = scmp.eq.s32.totalorder %s30, 0
      %p114 = por %p112, %p113
      %p115 = scmp.ne.s32.totalorder %s103, %s104
      %p116 = scmp.eq.s32.totalorder %s31, 1
      %p117 = por %p115, %p116
      %p119 = scmp.ne.s32.totalorder %s104, %s118
      %p120 = scmp.eq.s32.totalorder %s31, 0
      %p121 = por %p119, %p120
      %s123 = sadd.s32 %s122, 1
      %p126 = scmp.eq.s32.totalorder %s25, 1
      %p127 = scmp.ne.s32.totalorder %s122, %s124
      %p128 = scmp.eq.s32.totalorder %s25, 0
      %p129 = por %p127, %p128
      %p130 = scmp.ne.s32.totalorder %s122, %s124
      %p131 = scmp.eq.s32.totalorder %s30, 1
      %p132 = por %p130, %p131
      %p133 = scmp.ne.s32.totalorder %s124, %s125
      %p134 = scmp.eq.s32.totalorder %s30, 0
      %p135 = por %p133, %p134
      %p136 = scmp.ne.s32.totalorder %s124, %s125
      %p137 = scmp.eq.s32.totalorder %s31, 1
      %p138 = por %p136, %p137
      %p140 = scmp.ne.s32.totalorder %s125, %s139
      %p141 = scmp.eq.s32.totalorder %s31, 0
      %p142 = por %p140, %p141
      %s144 = sadd.s32 %s143, 1
      %p147 = scmp.eq.s32.totalorder %s25, 1
      %p148 = scmp.ne.s32.totalorder %s143, %s145
      %p149 = scmp.eq.s32.totalorder %s25, 0
      %p150 = por %p148, %p149
      %p151 = scmp.ne.s32.totalorder %s143, %s145
      %p152 = scmp.eq.s32.totalorder %s30, 1
      %p153 = por %p151, %p152
      %p154 = scmp.ne.s32.totalorder %s145, %s146
      %p155 = scmp.eq.s32.totalorder %s30, 0
      %p156 = por %p154, %p155
      %p157 = scmp.ne.s32.totalorder %s145, %s146
      %p158 = scmp.eq.s32.totalorder %s31, 1
      %p159 = por %p157, %p158
      %p161 = scmp.ne.s32.totalorder %s146, %s160
      %p162 = scmp.eq.s32.totalorder %s31, 0
      %p163 = por %p161, %p162
      %s165 = sadd.s32 %s164, 1
      %p168 = scmp.eq.s32.totalorder %s25, 1
      %p169 = scmp.ne.s32.totalorder %s164, %s166
      %p170 = scmp.eq.s32.totalorder %s25, 0
      %p171 = por %p169, %p170
      %p172 = scmp.ne.s32.totalorder %s164, %s166
      %p173 = scmp.eq.s32.totalorder %s30, 1
      %p174 = por %p172, %p173
      %p175 = scmp.ne.s32.totalorder %s166, %s167
      %p176 = scmp.eq.s32.totalorder %s30, 0
      %p177 = por %p175, %p176
      %p178 = scmp.ne.s32.totalorder %s166, %s167
      %p179 = scmp.eq.s32.totalorder %s31, 1
      %p180 = por %p178, %p179
      %p182 = scmp.ne.s32.totalorder %s167, %s181
      %p183 = scmp.eq.s32.totalorder %s31, 0
      %p184 = por %p182, %p183
      %s186 = sadd.s32 %s185, 1
      %p189 = scmp.eq.s32.totalorder %s25, 1
      %p190 = scmp.ne.s32.totalorder %s185, %s187
      %p191 = scmp.eq.s32.totalorder %s25, 0
      %p192 = por %p190, %p191
      %p193 = scmp.ne.s32.totalorder %s185, %s187
      %p194 = scmp.eq.s32.totalorder %s30, 1
      %p195 = por %p193, %p194
      %p196 = scmp.ne.s32.totalorder %s187, %s188
      %p197 = scmp.eq.s32.totalorder %s30, 0
      %p198 = por %p196, %p197
      %p199 = scmp.ne.s32.totalorder %s187, %s188
      %p200 = scmp.eq.s32.totalorder %s31, 1
      %p201 = por %p199, %p200
      %p203 = scmp.ne.s32.totalorder %s188, %s202
      %p204 = scmp.eq.s32.totalorder %s31, 0
      %p205 = por %p203, %p204
      %s207 = sadd.s32 %s206, 1
      %p210 = scmp.eq.s32.totalorder %s25, 1
      %p211 = scmp.ne.s32.totalorder %s206, %s208
      %p212 = scmp.eq.s32.totalorder %s25, 0
      %p213 = por %p211, %p212
      %p214 = scmp.ne.s32.totalorder %s206, %s208
      %p215 = scmp.eq.s32.totalorder %s30, 1
      %p216 = por %p214, %p215
      %p217 = scmp.ne.s32.totalorder %s208, %s209
      %p218 = scmp.eq.s32.totalorder %s30, 0
      %p219 = por %p217, %p218
      %p220 = scmp.ne.s32.totalorder %s208, %s209
      %p221 = scmp.eq.s32.totalorder %s31, 1
      %p222 = por %p220, %p221
      %p224 = scmp.ne.s32.totalorder %s209, %s223
      %p225 = scmp.eq.s32.totalorder %s31, 0
      %p226 = por %p224, %p225
      %s228 = sadd.s32 %s227, 1
      %p231 = scmp.eq.s32.totalorder %s25, 1
      %p232 = scmp.ne.s32.totalorder %s227, %s229
      %p233 = scmp.eq.s32.totalorder %s25, 0
      %p234 = por %p232, %p233
      %p235 = scmp.ne.s32.totalorder %s227, %s229
      %p236 = scmp.eq.s32.totalorder %s30, 1
      %p237 = por %p235, %p236
      %p238 = scmp.ne.s32.totalorder %s229, %s230
      %p239 = scmp.eq.s32.totalorder %s30, 0
      %p240 = por %p238, %p239
      %p241 = scmp.ne.s32.totalorder %s229, %s230
      %p242 = scmp.eq.s32.totalorder %s31, 1
      %p243 = por %p241, %p242
      %p245 = scmp.ne.s32.totalorder %s230, %s244
      %p246 = scmp.eq.s32.totalorder %s31, 0
      %p247 = por %p245, %p246
      %s249 = sadd.s32 %s248, 1
      %p252 = scmp.eq.s32.totalorder %s25, 1
      %p253 = scmp.ne.s32.totalorder %s248, %s250
      %p254 = scmp.eq.s32.totalorder %s25, 0
      %p255 = por %p253, %p254
      %p256 = scmp.ne.s32.totalorder %s248, %s250
      %p257 = scmp.eq.s32.totalorder %s30, 1
      %p258 = por %p256, %p257
      %p259 = scmp.ne.s32.totalorder %s250, %s251
      %p260 = scmp.eq.s32.totalorder %s30, 0
      %p261 = por %p259, %p260
      %p262 = scmp.ne.s32.totalorder %s250, %s251
      %p263 = scmp.eq.s32.totalorder %s31, 1
      %p264 = por %p262, %p263
      %p266 = scmp.ne.s32.totalorder %s251, %s265
      %p267 = scmp.eq.s32.totalorder %s31, 0
      %p268 = por %p266, %p267
      %s269 = ssub.s32 %s25, %s32
      %p270 = scmp.eq.s32.totalorder %s269, 0
      %s272 = sadd.s32 %s271, 1
      %s273 = scalar_select %p270, %s271, %s272
      %p276 = pneg %p270
      %p277 = scmp.eq.s32.totalorder %s25, 1
      %p278 = por %p276, %p277
      %p279 = scmp.ne.s32.totalorder %s271, %s274
      %p280 = scmp.eq.s32.totalorder %s25, 0
      %p281 = por %p279, %p280
      %p282 = scmp.ne.s32.totalorder %s271, %s274
      %p283 = scmp.eq.s32.totalorder %s30, 1
      %p284 = por %p282, %p283
      %p285 = scmp.ne.s32.totalorder %s274, %s275
      %p286 = scmp.eq.s32.totalorder %s30, 0
      %p287 = por %p285, %p286
      %p288 = scmp.ne.s32.totalorder %s274, %s275
      %p289 = scmp.eq.s32.totalorder %s31, 1
      %p290 = por %p288, %p289
      %p292 = scmp.ne.s32.totalorder %s275, %s291
      %p293 = scmp.eq.s32.totalorder %s31, 0
      %p294 = por %p292, %p293
      %s295 = ssub.s32 %s25, %s32
      %p296 = scmp.eq.s32.totalorder %s295, 0
      %s298 = sadd.s32 %s297, 1
      %s299 = scalar_select %p296, %s297, %s298
      %p302 = pneg %p296
      %p303 = scmp.eq.s32.totalorder %s25, 1
      %p304 = por %p302, %p303
      %p305 = scmp.ne.s32.totalorder %s297, %s300
      %p306 = scmp.eq.s32.totalorder %s25, 0
      %p307 = por %p305, %p306
      %p308 = scmp.ne.s32.totalorder %s297, %s300
      %p309 = scmp.eq.s32.totalorder %s30, 1
      %p310 = por %p308, %p309
      %p311 = scmp.ne.s32.totalorder %s300, %s301
      %p312 = scmp.eq.s32.totalorder %s30, 0
      %p313 = por %p311, %p312
      %p314 = scmp.ne.s32.totalorder %s300, %s301
      %p315 = scmp.eq.s32.totalorder %s31, 1
      %p316 = por %p314, %p315
      %p318 = scmp.ne.s32.totalorder %s301, %s317
      %p319 = scmp.eq.s32.totalorder %s31, 0
      %p320 = por %p318, %p319
      %p321 = scmp.le.s32.totalorder 1, %s25
      %p322 = scmp.lt.s32.totalorder %s25, 3
      %p323 = pnand %p321, %p322
      %p324 = pneg %p323
      // Predicated region
      $region9: #{tpu_custom_call.1} parent=5 // pred_check
        _
      $region10: #{tpu_custom_call.1} parent=5 // pred_check_branch
        %326 = sbr.rel (%p323) target = $region12
      $region11: #{tpu_custom_call.1} parent=5 // pred_region
        %s327 = ssub.s32 %s25, 1
        // Predicated region
        $region13: #{tpu_custom_call.1} parent=11 // pred_check
          %p328 = pneg %p72
        $region14: #{tpu_custom_call.1} parent=11 // pred_check_branch
          %330 = sbr.rel (%p328) target = $region16
        $region15: #{tpu_custom_call.1} parent=11 // pred_region
          %s332 = ssub.s32 3072, 3072
          %333 = vsyncadd [#allocation7], %s332
          %s334 = sshll.u32 [#allocation6], 4
          %s335 = int_to_ptr.vmem [resolvable:$true] %s334
          %340 = dma.hbm_to_vmem [thread:$0]  %s1, 3072, %s335, [#allocation7], 128, 128, 8
        $region16: #{tpu_custom_call.1} parent=11 // pred_fallthru
          _
        // Predicated region
        $region17: #{tpu_custom_call.1} parent=11 // pred_check
          %p341 = pneg %p93
        $region18: #{tpu_custom_call.1} parent=11 // pred_check_branch
          %343 = sbr.rel (%p341) target = $region20
        $region19: #{tpu_custom_call.1} parent=11 // pred_region
          %s345 = ssub.s32 16, 16
          %346 = vsyncadd [#allocation10], %s345
          %s348 = sshll.u32 [#allocation9], 4
          %s349 = int_to_ptr.vmem [resolvable:$true] %s348
          %351 = dma.hbm_to_vmem [thread:$0]  %s2, 16, %s349, [#allocation10]
        $region20: #{tpu_custom_call.1} parent=11 // pred_fallthru
          _
        // Predicated region
        $region21: #{tpu_custom_call.1} parent=11 // pred_check
          %p352 = pneg %p114
        $region22: #{tpu_custom_call.1} parent=11 // pred_check_branch
          %354 = sbr.rel (%p352) target = $region24
        $region23: #{tpu_custom_call.1} parent=11 // pred_region
          %s356 = ssub.s32 6144, 6144
          %357 = vsyncadd [#allocation10], %s356
          %s358 = sshll.u32 [#allocation11], 4
          %s359 = int_to_ptr.vmem [resolvable:$true] %s358
          %364 = dma.hbm_to_vmem [thread:$0]  %s3, 6144, %s359, [#allocation10], 128, 128, 8
        $region24: #{tpu_custom_call.1} parent=11 // pred_fallthru
          _
        // Predicated region
        $region25: #{tpu_custom_call.1} parent=11 // pred_check
          %p365 = pneg %p135
        $region26: #{tpu_custom_call.1} parent=11 // pred_check_branch
          %367 = sbr.rel (%p365) target = $region28
        $region27: #{tpu_custom_call.1} parent=11 // pred_region
          %s369 = ssub.s32 16, 16
          %370 = vsyncadd [#allocation13], %s369
          %s372 = sshll.u32 [#allocation12], 4
          %s373 = int_to_ptr.vmem [resolvable:$true] %s372
          %375 = dma.hbm_to_vmem [thread:$0]  %s4, 16, %s373, [#allocation13]
        $region28: #{tpu_custom_call.1} parent=11 // pred_fallthru
          _
        // Predicated region
        $region29: #{tpu_custom_call.1} parent=11 // pred_check
          %p376 = pneg %p156
        $region30: #{tpu_custom_call.1} parent=11 // pred_check_branch
          %378 = sbr.rel (%p376) target = $region32
        $region31: #{tpu_custom_call.1} parent=11 // pred_region
          _
        $region32: #{tpu_custom_call.1} parent=11 // pred_fallthru
          _
        // Predicated region
        $region33: #{tpu_custom_call.1} parent=11 // pred_check
          %p379 = pneg %p177
        $region34: #{tpu_custom_call.1} parent=11 // pred_check_branch
          %381 = sbr.rel (%p379) target = $region36
        $region35: #{tpu_custom_call.1} parent=11 // pred_region
          %s383 = ssub.s32 32, 32
          %384 = vsyncadd [#allocation13], %s383
          %s386 = sshll.u32 [#allocation14], 4
          %s387 = int_to_ptr.vmem [resolvable:$true] %s386
          %389 = dma.hbm_to_vmem [thread:$0]  %s6, 32, %s387, [#allocation13]
        $region36: #{tpu_custom_call.1} parent=11 // pred_fallthru
          _
        // Predicated region
        $region37: #{tpu_custom_call.1} parent=11 // pred_check
          %p390 = pneg %p198
        $region38: #{tpu_custom_call.1} parent=11 // pred_check_branch
          %392 = sbr.rel (%p390) target = $region40
        $region39: #{tpu_custom_call.1} parent=11 // pred_region
          _
        $region40: #{tpu_custom_call.1} parent=11 // pred_fallthru
          _
        // Predicated region
        $region41: #{tpu_custom_call.1} parent=11 // pred_check
          %p393 = pneg %p219
        $region42: #{tpu_custom_call.1} parent=11 // pred_check_branch
          %395 = sbr.rel (%p393) target = $region44
        $region43: #{tpu_custom_call.1} parent=11 // pred_region
          %s397 = ssub.s32 32, 32
          %398 = vsyncadd [#allocation16], %s397
          %s400 = sshll.u32 [#allocation15], 4
          %s401 = int_to_ptr.vmem [resolvable:$true] %s400
          %403 = dma.hbm_to_vmem [thread:$0]  %s8, 32, %s401, [#allocation16]
        $region44: #{tpu_custom_call.1} parent=11 // pred_fallthru
          _
        // Predicated region
        $region45: #{tpu_custom_call.1} parent=11 // pred_check
          %p404 = pneg %p240
        $region46: #{tpu_custom_call.1} parent=11 // pred_check_branch
          %406 = sbr.rel (%p404) target = $region48
        $region47: #{tpu_custom_call.1} parent=11 // pred_region
          _
        $region48: #{tpu_custom_call.1} parent=11 // pred_fallthru
          _
        // Predicated region
        $region49: #{tpu_custom_call.1} parent=11 // pred_check
          %p407 = pneg %p261
        $region50: #{tpu_custom_call.1} parent=11 // pred_check_branch
          %409 = sbr.rel (%p407) target = $region52
        $region51: #{tpu_custom_call.1} parent=11 // pred_region
          %s411 = ssub.s32 16, 16
          %412 = vsyncadd [#allocation16], %s411
          %s414 = sshll.u32 [#allocation17], 4
          %s415 = int_to_ptr.vmem [resolvable:$true] %s414
          %417 = dma.hbm_to_vmem [thread:$0]  %s10, 16, %s415, [#allocation16]
        $region52: #{tpu_custom_call.1} parent=11 // pred_fallthru
          _
      $region12: #{tpu_custom_call.1} parent=5 // pred_fallthru
        _
      %p418 = scmp.lt.s32.totalorder %s25, 2
      // Predicated region
      $region53: #{tpu_custom_call.1} parent=5 // pred_check
        %p419 = pneg %p418
      $region54: #{tpu_custom_call.1} parent=5 // pred_check_branch
        %421 = sbr.rel (%p419) target = $region56
      $region55: #{tpu_custom_call.1} parent=5 // pred_region
        // Predicated region
        $region57: #{tpu_custom_call.1} parent=55 // pred_check
          %p422 = pneg %p45
        $region58: #{tpu_custom_call.1} parent=55 // pred_check_branch
          %424 = sbr.rel (%p422) target = $region60
        $region59: #{tpu_custom_call.1} parent=55 // pred_region
          %s425 = smul.u32 15, %s25
          %p426 = scmp.lt.s32.totalorder %s425, 29
          %s427 = scalar_select %p426, %s425, 29
          %s428 = smul.addr %s427, 8
          %s429 = scalar_lea.vmem %s0, %s428
          %s430 = smul.u32 15, %s25
        $region60: #{tpu_custom_call.1} parent=55 // pred_fallthru
          _
        // Predicated region
        $region61: #{tpu_custom_call.1} parent=55 // pred_check
          %p431 = pneg %p281
        $region62: #{tpu_custom_call.1} parent=55 // pred_check_branch
          %433 = sbr.rel (%p431) target = $region64
        $region63: #{tpu_custom_call.1} parent=55 // pred_region
          %p434 = scmp.lt.s32.totalorder %s25, 1
          %s435 = scalar_select %p434, %s25, 1
          %s436 = smul.addr %s435, 8
          %s437 = scalar_lea.vmem %s11, %s436
        $region64: #{tpu_custom_call.1} parent=55 // pred_fallthru
          _
      $region56: #{tpu_custom_call.1} parent=5 // pred_fallthru
        _
      %p438 = scmp.le.s32.totalorder 1, %s25
      %p439 = scmp.lt.s32.totalorder %s25, 3
      %p440 = pnand %p438, %p439
      %p441 = pneg %p440
      // Predicated region
      $region65: #{tpu_custom_call.1} parent=5 // pred_check
        _
      $region66: #{tpu_custom_call.1} parent=5 // pred_check_branch
        %443 = sbr.rel (%p440) target = $region68
      $region67: #{tpu_custom_call.1} parent=5 // pred_region
        %s444 = ssub.s32 %s25, 1
        // Predicated region
        $region69: #{tpu_custom_call.1} parent=67 // pred_check
          %p445 = pneg %p72
        $region70: #{tpu_custom_call.1} parent=67 // pred_check_branch
          %447 = sbr.rel (%p445) target = $region72
        $region71: #{tpu_custom_call.1} parent=67 // pred_region
          %448 = dma.done [#allocation7], 3072
        $region72: #{tpu_custom_call.1} parent=67 // pred_fallthru
          _
        // Predicated region
        $region73: #{tpu_custom_call.1} parent=67 // pred_check
          %p449 = pneg %p93
        $region74: #{tpu_custom_call.1} parent=67 // pred_check_branch
          %451 = sbr.rel (%p449) target = $region76
        $region75: #{tpu_custom_call.1} parent=67 // pred_region
          %452 = dma.done [#allocation10], 16
        $region76: #{tpu_custom_call.1} parent=67 // pred_fallthru
          _
        // Predicated region
        $region77: #{tpu_custom_call.1} parent=67 // pred_check
          %p453 = pneg %p114
        $region78: #{tpu_custom_call.1} parent=67 // pred_check_branch
          %455 = sbr.rel (%p453) target = $region80
        $region79: #{tpu_custom_call.1} parent=67 // pred_region
          %456 = dma.done [#allocation10], 6144
        $region80: #{tpu_custom_call.1} parent=67 // pred_fallthru
          _
        // Predicated region
        $region81: #{tpu_custom_call.1} parent=67 // pred_check
          %p457 = pneg %p135
        $region82: #{tpu_custom_call.1} parent=67 // pred_check_branch
          %459 = sbr.rel (%p457) target = $region84
        $region83: #{tpu_custom_call.1} parent=67 // pred_region
          %460 = dma.done [#allocation13], 16
        $region84: #{tpu_custom_call.1} parent=67 // pred_fallthru
          _
        // Predicated region
        $region85: #{tpu_custom_call.1} parent=67 // pred_check
          %p461 = pneg %p177
        $region86: #{tpu_custom_call.1} parent=67 // pred_check_branch
          %463 = sbr.rel (%p461) target = $region88
        $region87: #{tpu_custom_call.1} parent=67 // pred_region
          %464 = dma.done [#allocation13], 32
        $region88: #{tpu_custom_call.1} parent=67 // pred_fallthru
          _
        // Predicated region
        $region89: #{tpu_custom_call.1} parent=67 // pred_check
          %p465 = pneg %p219
        $region90: #{tpu_custom_call.1} parent=67 // pred_check_branch
          %467 = sbr.rel (%p465) target = $region92
        $region91: #{tpu_custom_call.1} parent=67 // pred_region
          %468 = dma.done [#allocation16], 32
        $region92: #{tpu_custom_call.1} parent=67 // pred_fallthru
          _
        // Predicated region
        $region93: #{tpu_custom_call.1} parent=67 // pred_check
          %p469 = pneg %p261
        $region94: #{tpu_custom_call.1} parent=67 // pred_check_branch
          %471 = sbr.rel (%p469) target = $region96
        $region95: #{tpu_custom_call.1} parent=67 // pred_region
          %472 = dma.done [#allocation16], 16
        $region96: #{tpu_custom_call.1} parent=67 // pred_fallthru
          _
        %s473 = smul.u32 15, %s30
        %p474 = scmp.lt.s32.totalorder %s473, 29
        %s475 = scalar_select %p474, %s473, 29
        %s476 = smul.addr %s475, 8
        %s477 = scalar_lea.vmem %s0, %s476
        %p478 = pneg %p51
        %p479 = pneg %p48
        %p480 = pneg %p72
        %p481 = pneg %p69
        %p482 = pneg %p93
        %p483 = pneg %p90
        %p484 = pneg %p114
        %p485 = pneg %p111
        %p486 = pneg %p135
        %p487 = pneg %p132
        %p488 = pneg %p156
        %p489 = pneg %p153
        %p490 = pneg %p177
        %p491 = pneg %p174
        %p492 = pneg %p198
        %p493 = pneg %p195
        %p494 = pneg %p219
        %p495 = pneg %p216
        %p496 = pneg %p240
        %p497 = pneg %p237
        %p498 = pneg %p261
        %p499 = pneg %p258
        %p500 = scmp.lt.s32.totalorder %s30, 1
        %s501 = scalar_select %p500, %s30, 1
        %s502 = smul.addr %s501, 8
        %s503 = scalar_lea.vmem %s11, %s502
        %p504 = pneg %p287
        %p505 = pneg %p284
        %p506 = pneg %p313
        %p507 = pneg %p310
        %s508 = sand.u32 %s300, 1
        %s509 = scalar_lea.sflag [#allocation8], %s508
        %s510 = sand.u32 %s300, 1
        %s511 = smul.addr %s510, 8
        %s512 = scalar_lea.vmem [#allocation18], %s511
        %s513 = smul.u32 15, %s30
        %p514 = scmp.lt.s32.totalorder %s513, 29
        %s515 = scalar_select %p514, %s513, 29
        %s516 = smul.addr %s515, 8
        %s517 = scalar_lea.vmem %s0, %s516
        %s518 = smul.u32 15, %s30
        %p519 = scmp.lt.s32.totalorder %s30, 1
        %s520 = scalar_select %p519, %s30, 1
        %s521 = smul.addr %s520, 8
        %s522 = scalar_lea.vmem %s11, %s521
        %v523 = vld [vmem:[%s517] sm:$0xff]
        %v524 = vld [vmem:[%s517 + $0x8] sm:$0xff]
        %v525 = vld [vmem:[%s517 + $0x10] sm:$0xff]
        %v526 = vld [vmem:[%s517 + $0x18] sm:$0xff]
        %v527 = vld [vmem:[%s517 + $0x20] sm:$0xff]
        %v528 = vld [vmem:[%s517 + $0x28] sm:$0xff]
        %v529 = vld [vmem:[%s517 + $0x30] sm:$0xff]
        %v530 = vld [vmem:[%s517 + $0x38] sm:$0xff]
        %v531 = vld [vmem:[%s517 + $0x40] sm:$0xff]
        %v532 = vld [vmem:[%s517 + $0x48] sm:$0xff]
        %v533 = vld [vmem:[%s517 + $0x50] sm:$0xff]
        %v534 = vld [vmem:[%s517 + $0x58] sm:$0xff]
        %v535 = vld [vmem:[%s517 + $0x60] sm:$0xff]
        %v536 = vld [vmem:[#allocation6] sm:$0xff]
        %v537 = vld [vmem:[#allocation6 + $0x8] sm:$0xff]
        %v538 = vld [vmem:[#allocation6 + $0x10] sm:$0xff]
        %v539 = vld [vmem:[#allocation6 + $0x18] sm:$0xff]
        %v540 = vld [vmem:[#allocation6 + $0x20] sm:$0xff]
        %v541 = vld [vmem:[#allocation6 + $0x28] sm:$0xff]
        %v542 = vld [vmem:[#allocation6 + $0x30] sm:$0xff]
        %v543 = vld [vmem:[#allocation6 + $0x38] sm:$0xff]
        %v544 = vld [vmem:[%s517 + $0x68] sm:$0xff]
        %s545 = scalar_lea.vmem [#allocation6], 64
        %v546 = vld [vmem:[%s545] sm:$0xff]
        %v547 = vld [vmem:[%s545 + $0x8] sm:$0xff]
        %v548 = vld [vmem:[%s545 + $0x10] sm:$0xff]
        %v549 = vld [vmem:[%s545 + $0x18] sm:$0xff]
        %v550 = vld [vmem:[%s545 + $0x20] sm:$0xff]
        %v551 = vld [vmem:[%s545 + $0x28] sm:$0xff]
        %v552 = vld [vmem:[%s545 + $0x30] sm:$0xff]
        %v553 = vld [vmem:[%s545 + $0x38] sm:$0xff]
        %vm554 = vcmask 523264
        %v556 = vsel %vm554, %v524, 0
        %v559 = vsel %vm554, %v525, 0
        %v562 = vsel %vm554, %v526, 0
        %v565 = vsel %vm554, %v527, 0
        %v568 = vsel %vm554, %v528, 0
        %v571 = vsel %vm554, %v529, 0
        %v574 = vsel %vm554, %v530, 0
        %v577 = vsel %vm554, %v531, 0
        %v580 = vsel %vm554, %v532, 0
        %v583 = vsel %vm554, %v533, 0
        %v586 = vsel %vm554, %v534, 0
        %v589 = vsel %vm554, %v535, 0
        %v592 = vsel %vm554, %v544, 0
        %594 = vmatprep.subr.mxu0 0.0
        %595 = vmatpush1.msra.mxu0 0.0
        %596 = vmatprep.subr.mxu0 0.0
        %597 = vmatpush1.msra.mxu0 0.0
        %598 = vmatprep.subr.mxu0 0.0
        %599 = vmatpush1.msra.mxu0 0.0
        %600 = vmatprep.subr.mxu0 0.0
        %601 = vmatpush1.msra.mxu0 0.0
        %602 = vmatprep.subr.mxu0 0.0
        %603 = vmatpush1.msra.mxu0 0.0
        %604 = vmatprep.subr.mxu0 0.0
        %605 = vmatpush1.msra.mxu0 0.0
        %606 = vmatprep.subr.mxu0 0.0
        %607 = vmatpush1.msra.mxu0 0.0
        %608 = vmatprep.subr.mxu0 0.0
        %609 = vmatpush1.msra.mxu0 0.0
        %610 = vmatprep.subr.mxu0 0.0
        %611 = vmatpush1.msra.mxu0 %v553
        %612 = vmatprep.subr.mxu0 0.0
        %613 = vmatpush1.msra.mxu0 %v552
        %614 = vmatprep.subr.mxu0 0.0
        %615 = vmatpush1.msra.mxu0 %v551
        %616 = vmatprep.subr.mxu0 0.0
        %617 = vmatpush1.msra.mxu0 %v550
        %618 = vmatprep.subr.mxu0 0.0
        %619 = vmatpush1.msra.mxu0 %v549
        %620 = vmatprep.subr.mxu0 0.0
        %621 = vmatpush1.msra.mxu0 %v548
        %622 = vmatprep.subr.mxu0 0.0
        %623 = vmatpush1.msra.mxu0 %v547
        %624 = vmatprep.subr.mxu0 0.0
        %625 = vmatpush1.msra.mxu0 %v546
        %626 = vmatprep.subr.mxu0 0.0
        %627 = vmatpush2.msra.mxu0 0.0
        %628 = vmatprep.subr.mxu0 0.0
        %629 = vmatpush2.msra.mxu0 0.0
        %630 = vmatprep.subr.mxu0 0.0
        %631 = vmatpush2.msra.mxu0 0.0
        %632 = vmatprep.subr.mxu0 0.0
        %633 = vmatpush2.msra.mxu0 0.0
        %634 = vmatprep.subr.mxu0 0.0
        %635 = vmatpush2.msra.mxu0 0.0
        %636 = vmatprep.subr.mxu0 0.0
        %637 = vmatpush2.msra.mxu0 0.0
        %638 = vmatprep.subr.mxu0 0.0
        %639 = vmatpush2.msra.mxu0 0.0
        %640 = vmatprep.subr.mxu0 0.0
        %641 = vmatpush2.msra.mxu0 0.0
        %642 = vmatprep.subr.mxu0 0.0
        %643 = vmatpush2.msra.mxu0 0.0
        %644 = vmatprep.subr.mxu0 0.0
        %645 = vmatpush2.msra.mxu0 0.0
        %646 = vmatprep.subr.mxu0 0.0
        %647 = vmatpush2.msra.mxu0 0.0
        %648 = vmatprep.subr.mxu0 0.0
        %649 = vmatpush2.msra.mxu0 0.0
        %650 = vmatprep.subr.mxu0 0.0
        %651 = vmatpush2.msra.mxu0 0.0
        %652 = vmatprep.subr.mxu0 0.0
        %653 = vmatpush2.msra.mxu0 0.0
        %654 = vmatprep.subr.mxu0 0.0
        %655 = vmatpush2.msra.mxu0 0.0
        %656 = vmatprep.subr.mxu0 0.0
        %657 = vmatpush2.msra.mxu0 0.0
        %658 = vmatprep.mubr.f32.mxu0 0.0
        %659 = vmatmul.mubr.f32.gmra.mxu0 %v556
        %v660 = vpop.f32.mrf.mxu0
        %v661 = vadd.f32 0.0, %v660
        %v662 = vpop.f32.mrf.mxu0
        %663 = vmatprep.mubr.f32.mxu0 0.0
        %664 = vmatmul.mubr.f32.gmra.mxu0 %v559
        %v665 = vpop.f32.mrf.mxu0
        %v666 = vadd.f32 0.0, %v665
        %v667 = vpop.f32.mrf.mxu0
        %668 = vmatprep.mubr.f32.mxu0 0.0
        %669 = vmatmul.mubr.f32.gmra.mxu0 %v562
        %v670 = vpop.f32.mrf.mxu0
        %v671 = vadd.f32 0.0, %v670
        %v672 = vpop.f32.mrf.mxu0
        %673 = vmatprep.mubr.f32.mxu0 0.0
        %674 = vmatmul.mubr.f32.gmra.mxu0 %v565
        %v675 = vpop.f32.mrf.mxu0
        %v676 = vadd.f32 0.0, %v675
        %v677 = vpop.f32.mrf.mxu0
        %678 = vmatprep.mubr.f32.mxu0 0.0
        %679 = vmatmul.mubr.f32.gmra.mxu0 %v568
        %v680 = vpop.f32.mrf.mxu0
        %v681 = vadd.f32 0.0, %v680
        %v682 = vpop.f32.mrf.mxu0
        %683 = vmatprep.mubr.f32.mxu0 0.0
        %684 = vmatmul.mubr.f32.gmra.mxu0 %v571
        %v685 = vpop.f32.mrf.mxu0
        %v686 = vadd.f32 0.0, %v685
        %v687 = vpop.f32.mrf.mxu0
        %688 = vmatprep.mubr.f32.mxu0 0.0
        %689 = vmatmul.mubr.f32.gmra.mxu0 %v574
        %v690 = vpop.f32.mrf.mxu0
        %v691 = vadd.f32 0.0, %v690
        %v692 = vpop.f32.mrf.mxu0
        %693 = vmatprep.mubr.f32.mxu0 0.0
        %694 = vmatmul.mubr.f32.gmra.mxu0 %v577
        %v695 = vpop.f32.mrf.mxu0
        %v696 = vadd.f32 0.0, %v695
        %v697 = vpop.f32.mrf.mxu0
        %698 = vmatprep.mubr.f32.mxu0 0.0
        %699 = vmatmul.mubr.f32.gmra.mxu0 %v580
        %v700 = vpop.f32.mrf.mxu0
        %v701 = vadd.f32 0.0, %v700
        %v702 = vpop.f32.mrf.mxu0
        %703 = vmatprep.mubr.f32.mxu0 0.0
        %704 = vmatmul.mubr.f32.gmra.mxu0 %v583
        %v705 = vpop.f32.mrf.mxu0
        %v706 = vadd.f32 0.0, %v705
        %v707 = vpop.f32.mrf.mxu0
        %708 = vmatprep.mubr.f32.mxu0 0.0
        %709 = vmatmul.mubr.f32.gmra.mxu0 %v586
        %v710 = vpop.f32.mrf.mxu0
        %v711 = vadd.f32 0.0, %v710
        %v712 = vpop.f32.mrf.mxu0
        %713 = vmatprep.mubr.f32.mxu0 0.0
        %714 = vmatmul.mubr.f32.gmra.mxu0 %v589
        %v715 = vpop.f32.mrf.mxu0
        %v716 = vadd.f32 0.0, %v715
        %v717 = vpop.f32.mrf.mxu0
        %718 = vmatprep.mubr.f32.mxu0 0.0
        %719 = vmatmul.mubr.f32.gmra.mxu0 %v592
        %v720 = vpop.f32.mrf.mxu0
        %v721 = vadd.f32 0.0, %v720
        %v722 = vpop.f32.mrf.mxu0
        %723 = vdwg.mxu0
        %v725 = vsel %vm554, %v523, 0
        %727 = vmatprep.subr.mxu0 0.0
        %728 = vmatpush1.msra.mxu0 0.0
        %729 = vmatprep.subr.mxu0 0.0
        %730 = vmatpush1.msra.mxu0 0.0
        %731 = vmatprep.subr.mxu0 0.0
        %732 = vmatpush1.msra.mxu0 0.0
        %733 = vmatprep.subr.mxu0 0.0
        %734 = vmatpush1.msra.mxu0 0.0
        %735 = vmatprep.subr.mxu0 0.0
        %736 = vmatpush1.msra.mxu0 0.0
        %737 = vmatprep.subr.mxu0 0.0
        %738 = vmatpush1.msra.mxu0 0.0
        %739 = vmatprep.subr.mxu0 0.0
        %740 = vmatpush1.msra.mxu0 0.0
        %741 = vmatprep.subr.mxu0 0.0
        %742 = vmatpush1.msra.mxu0 0.0
        %743 = vmatprep.subr.mxu0 0.0
        %744 = vmatpush1.msra.mxu0 %v543
        %745 = vmatprep.subr.mxu0 0.0
        %746 = vmatpush1.msra.mxu0 %v542
        %747 = vmatprep.subr.mxu0 0.0
        %748 = vmatpush1.msra.mxu0 %v541
        %749 = vmatprep.subr.mxu0 0.0
        %750 = vmatpush1.msra.mxu0 %v540
        %751 = vmatprep.subr.mxu0 0.0
        %752 = vmatpush1.msra.mxu0 %v539
        %753 = vmatprep.subr.mxu0 0.0
        %754 = vmatpush1.msra.mxu0 %v538
        %755 = vmatprep.subr.mxu0 0.0
        %756 = vmatpush1.msra.mxu0 %v537
        %757 = vmatprep.subr.mxu0 0.0
        %758 = vmatpush1.msra.mxu0 %v536
        %759 = vmatprep.subr.mxu0 0.0
        %760 = vmatpush2.msra.mxu0 0.0
        %761 = vmatprep.subr.mxu0 0.0
        %762 = vmatpush2.msra.mxu0 0.0
        %763 = vmatprep.subr.mxu0 0.0
        %764 = vmatpush2.msra.mxu0 0.0
        %765 = vmatprep.subr.mxu0 0.0
        %766 = vmatpush2.msra.mxu0 0.0
        %767 = vmatprep.subr.mxu0 0.0
        %768 = vmatpush2.msra.mxu0 0.0
        %769 = vmatprep.subr.mxu0 0.0
        %770 = vmatpush2.msra.mxu0 0.0
        %771 = vmatprep.subr.mxu0 0.0
        %772 = vmatpush2.msra.mxu0 0.0
        %773 = vmatprep.subr.mxu0 0.0
        %774 = vmatpush2.msra.mxu0 0.0
        %775 = vmatprep.subr.mxu0 0.0
        %776 = vmatpush2.msra.mxu0 0.0
        %777 = vmatprep.subr.mxu0 0.0
        %778 = vmatpush2.msra.mxu0 0.0
        %779 = vmatprep.subr.mxu0 0.0
        %780 = vmatpush2.msra.mxu0 0.0
        %781 = vmatprep.subr.mxu0 0.0
        %782 = vmatpush2.msra.mxu0 0.0
        %783 = vmatprep.subr.mxu0 0.0
        %784 = vmatpush2.msra.mxu0 0.0
        %785 = vmatprep.subr.mxu0 0.0
        %786 = vmatpush2.msra.mxu0 0.0
        %787 = vmatprep.subr.mxu0 0.0
        %788 = vmatpush2.msra.mxu0 0.0
        %789 = vmatprep.subr.mxu0 0.0
        %790 = vmatpush2.msra.mxu0 0.0
        %791 = vmatprep.mubr.f32.mxu0 0.0
        %792 = vmatmul.mubr.f32.gmra.mxu0 %v725
        %v793 = vpop.f32.mrf.mxu0
        %v794 = vadd.f32 %v661, %v793
        %v795 = vpop.f32.mrf.mxu0
        %796 = vmatprep.mubr.f32.mxu0 0.0
        %797 = vmatmul.mubr.f32.gmra.mxu0 %v556
        %v798 = vpop.f32.mrf.mxu0
        %v799 = vadd.f32 %v666, %v798
        %v800 = vpop.f32.mrf.mxu0
        %801 = vmatprep.mubr.f32.mxu0 0.0
        %802 = vmatmul.mubr.f32.gmra.mxu0 %v559
        %v803 = vpop.f32.mrf.mxu0
        %v804 = vadd.f32 %v671, %v803
        %v805 = vpop.f32.mrf.mxu0
        %806 = vmatprep.mubr.f32.mxu0 0.0
        %807 = vmatmul.mubr.f32.gmra.mxu0 %v562
        %v808 = vpop.f32.mrf.mxu0
        %v809 = vadd.f32 %v676, %v808
        %v810 = vpop.f32.mrf.mxu0
        %811 = vmatprep.mubr.f32.mxu0 0.0
        %812 = vmatmul.mubr.f32.gmra.mxu0 %v565
        %v813 = vpop.f32.mrf.mxu0
        %v814 = vadd.f32 %v681, %v813
        %v815 = vpop.f32.mrf.mxu0
        %816 = vmatprep.mubr.f32.mxu0 0.0
        %817 = vmatmul.mubr.f32.gmra.mxu0 %v568
        %v818 = vpop.f32.mrf.mxu0
        %v819 = vadd.f32 %v686, %v818
        %v820 = vpop.f32.mrf.mxu0
        %821 = vmatprep.mubr.f32.mxu0 0.0
        %822 = vmatmul.mubr.f32.gmra.mxu0 %v571
        %v823 = vpop.f32.mrf.mxu0
        %v824 = vadd.f32 %v691, %v823
        %v825 = vpop.f32.mrf.mxu0
        %826 = vmatprep.mubr.f32.mxu0 0.0
        %827 = vmatmul.mubr.f32.gmra.mxu0 %v574
        %v828 = vpop.f32.mrf.mxu0
        %v829 = vadd.f32 %v696, %v828
        %v830 = vpop.f32.mrf.mxu0
        %831 = vmatprep.mubr.f32.mxu0 0.0
        %832 = vmatmul.mubr.f32.gmra.mxu0 %v577
        %v833 = vpop.f32.mrf.mxu0
        %v834 = vadd.f32 %v701, %v833
        %v835 = vpop.f32.mrf.mxu0
        %836 = vmatprep.mubr.f32.mxu0 0.0
        %837 = vmatmul.mubr.f32.gmra.mxu0 %v580
        %v838 = vpop.f32.mrf.mxu0
        %v839 = vadd.f32 %v706, %v838
        %v840 = vpop.f32.mrf.mxu0
        %841 = vmatprep.mubr.f32.mxu0 0.0
        %842 = vmatmul.mubr.f32.gmra.mxu0 %v583
        %v843 = vpop.f32.mrf.mxu0
        %v844 = vadd.f32 %v711, %v843
        %v845 = vpop.f32.mrf.mxu0
        %846 = vmatprep.mubr.f32.mxu0 0.0
        %847 = vmatmul.mubr.f32.gmra.mxu0 %v586
        %v848 = vpop.f32.mrf.mxu0
        %v849 = vadd.f32 %v716, %v848
        %v850 = vpop.f32.mrf.mxu0
        %851 = vmatprep.mubr.f32.mxu0 0.0
        %852 = vmatmul.mubr.f32.gmra.mxu0 %v589
        %v853 = vpop.f32.mrf.mxu0
        %v854 = vadd.f32 %v721, %v853
        %v855 = vpop.f32.mrf.mxu0
        %856 = vdwg.mxu0
        %v857 = vld [vmem:[%s517 + $0x10] sm:$0xff]
        %v858 = vld [vmem:[%s517 + $0x18] sm:$0xff]
        %v859 = vld [vmem:[%s517 + $0x20] sm:$0xff]
        %v860 = vld [vmem:[%s517 + $0x28] sm:$0xff]
        %v861 = vld [vmem:[%s517 + $0x30] sm:$0xff]
        %v862 = vld [vmem:[%s517 + $0x38] sm:$0xff]
        %v863 = vld [vmem:[%s517 + $0x40] sm:$0xff]
        %v864 = vld [vmem:[%s517 + $0x48] sm:$0xff]
        %v865 = vld [vmem:[%s517 + $0x50] sm:$0xff]
        %v866 = vld [vmem:[%s517 + $0x58] sm:$0xff]
        %v867 = vld [vmem:[%s517 + $0x60] sm:$0xff]
        %v868 = vld [vmem:[%s517 + $0x68] sm:$0xff]
        %v869 = vld [vmem:[%s517 + $0x70] sm:$0xff]
        %s870 = scalar_lea.vmem [#allocation6], 128
        %v871 = vld [vmem:[%s870] sm:$0xff]
        %v872 = vld [vmem:[%s870 + $0x8] sm:$0xff]
        %v873 = vld [vmem:[%s870 + $0x10] sm:$0xff]
        %v874 = vld [vmem:[%s870 + $0x18] sm:$0xff]
        %v875 = vld [vmem:[%s870 + $0x20] sm:$0xff]
        %v876 = vld [vmem:[%s870 + $0x28] sm:$0xff]
        %v877 = vld [vmem:[%s870 + $0x30] sm:$0xff]
        %v878 = vld [vmem:[%s870 + $0x38] sm:$0xff]
        %v880 = vsel %vm554, %v857, 0
        %v883 = vsel %vm554, %v858, 0
        %v886 = vsel %vm554, %v859, 0
        %v889 = vsel %vm554, %v860, 0
        %v892 = vsel %vm554, %v861, 0
        %v895 = vsel %vm554, %v862, 0
        %v898 = vsel %vm554, %v863, 0
        %v901 = vsel %vm554, %v864, 0
        %v904 = vsel %vm554, %v865, 0
        %v907 = vsel %vm554, %v866, 0
        %v910 = vsel %vm554, %v867, 0
        %v913 = vsel %vm554, %v868, 0
        %v916 = vsel %vm554, %v869, 0
        %918 = vmatprep.subr.mxu0 0.0
        %919 = vmatpush1.msra.mxu0 0.0
        %920 = vmatprep.subr.mxu0 0.0
        %921 = vmatpush1.msra.mxu0 0.0
        %922 = vmatprep.subr.mxu0 0.0
        %923 = vmatpush1.msra.mxu0 0.0
        %924 = vmatprep.subr.mxu0 0.0
        %925 = vmatpush1.msra.mxu0 0.0
        %926 = vmatprep.subr.mxu0 0.0
        %927 = vmatpush1.msra.mxu0 0.0
        %928 = vmatprep.subr.mxu0 0.0
        %929 = vmatpush1.msra.mxu0 0.0
        %930 = vmatprep.subr.mxu0 0.0
        %931 = vmatpush1.msra.mxu0 0.0
        %932 = vmatprep.subr.mxu0 0.0
        %933 = vmatpush1.msra.mxu0 0.0
        %934 = vmatprep.subr.mxu0 0.0
        %935 = vmatpush1.msra.mxu0 %v878
        %936 = vmatprep.subr.mxu0 0.0
        %937 = vmatpush1.msra.mxu0 %v877
        %938 = vmatprep.subr.mxu0 0.0
        %939 = vmatpush1.msra.mxu0 %v876
        %940 = vmatprep.subr.mxu0 0.0
        %941 = vmatpush1.msra.mxu0 %v875
        %942 = vmatprep.subr.mxu0 0.0
        %943 = vmatpush1.msra.mxu0 %v874
        %944 = vmatprep.subr.mxu0 0.0
        %945 = vmatpush1.msra.mxu0 %v873
        %946 = vmatprep.subr.mxu0 0.0
        %947 = vmatpush1.msra.mxu0 %v872
        %948 = vmatprep.subr.mxu0 0.0
        %949 = vmatpush1.msra.mxu0 %v871
        %950 = vmatprep.subr.mxu0 0.0
        %951 = vmatpush2.msra.mxu0 0.0
        %952 = vmatprep.subr.mxu0 0.0
        %953 = vmatpush2.msra.mxu0 0.0
        %954 = vmatprep.subr.mxu0 0.0
        %955 = vmatpush2.msra.mxu0 0.0
        %956 = vmatprep.subr.mxu0 0.0
        %957 = vmatpush2.msra.mxu0 0.0
        %958 = vmatprep.subr.mxu0 0.0
        %959 = vmatpush2.msra.mxu0 0.0
        %960 = vmatprep.subr.mxu0 0.0
        %961 = vmatpush2.msra.mxu0 0.0
        %962 = vmatprep.subr.mxu0 0.0
        %963 = vmatpush2.msra.mxu0 0.0
        %964 = vmatprep.subr.mxu0 0.0
        %965 = vmatpush2.msra.mxu0 0.0
        %966 = vmatprep.subr.mxu0 0.0
        %967 = vmatpush2.msra.mxu0 0.0
        %968 = vmatprep.subr.mxu0 0.0
        %969 = vmatpush2.msra.mxu0 0.0
        %970 = vmatprep.subr.mxu0 0.0
        %971 = vmatpush2.msra.mxu0 0.0
        %972 = vmatprep.subr.mxu0 0.0
        %973 = vmatpush2.msra.mxu0 0.0
        %974 = vmatprep.subr.mxu0 0.0
        %975 = vmatpush2.msra.mxu0 0.0
        %976 = vmatprep.subr.mxu0 0.0
        %977 = vmatpush2.msra.mxu0 0.0
        %978 = vmatprep.subr.mxu0 0.0
        %979 = vmatpush2.msra.mxu0 0.0
        %980 = vmatprep.subr.mxu0 0.0
        %981 = vmatpush2.msra.mxu0 0.0
        %982 = vmatprep.mubr.f32.mxu0 0.0
        %983 = vmatmul.mubr.f32.gmra.mxu0 %v880
        %v984 = vpop.f32.mrf.mxu0
        %v985 = vadd.f32 0.0, %v984
        %v986 = vpop.f32.mrf.mxu0
        %987 = vmatprep.mubr.f32.mxu0 0.0
        %988 = vmatmul.mubr.f32.gmra.mxu0 %v883
        %v989 = vpop.f32.mrf.mxu0
        %v990 = vadd.f32 0.0, %v989
        %v991 = vpop.f32.mrf.mxu0
        %992 = vmatprep.mubr.f32.mxu0 0.0
        %993 = vmatmul.mubr.f32.gmra.mxu0 %v886
        %v994 = vpop.f32.mrf.mxu0
        %v995 = vadd.f32 0.0, %v994
        %v996 = vpop.f32.mrf.mxu0
        %997 = vmatprep.mubr.f32.mxu0 0.0
        %998 = vmatmul.mubr.f32.gmra.mxu0 %v889
        %v999 = vpop.f32.mrf.mxu0
        %v1000 = vadd.f32 0.0, %v999
        %v1001 = vpop.f32.mrf.mxu0
        %1002 = vmatprep.mubr.f32.mxu0 0.0
        %1003 = vmatmul.mubr.f32.gmra.mxu0 %v892
        %v1004 = vpop.f32.mrf.mxu0
        %v1005 = vadd.f32 0.0, %v1004
        %v1006 = vpop.f32.mrf.mxu0
        %1007 = vmatprep.mubr.f32.mxu0 0.0
        %1008 = vmatmul.mubr.f32.gmra.mxu0 %v895
        %v1009 = vpop.f32.mrf.mxu0
        %v1010 = vadd.f32 0.0, %v1009
        %v1011 = vpop.f32.mrf.mxu0
        %1012 = vmatprep.mubr.f32.mxu0 0.0
        %1013 = vmatmul.mubr.f32.gmra.mxu0 %v898
        %v1014 = vpop.f32.mrf.mxu0
        %v1015 = vadd.f32 0.0, %v1014
        %v1016 = vpop.f32.mrf.mxu0
        %1017 = vmatprep.mubr.f32.mxu0 0.0
        %1018 = vmatmul.mubr.f32.gmra.mxu0 %v901
        %v1019 = vpop.f32.mrf.mxu0
        %v1020 = vadd.f32 0.0, %v1019
        %v1021 = vpop.f32.mrf.mxu0
        %1022 = vmatprep.mubr.f32.mxu0 0.0
        %1023 = vmatmul.mubr.f32.gmra.mxu0 %v904
        %v1024 = vpop.f32.mrf.mxu0
        %v1025 = vadd.f32 0.0, %v1024
        %v1026 = vpop.f32.mrf.mxu0
        %1027 = vmatprep.mubr.f32.mxu0 0.0
        %1028 = vmatmul.mubr.f32.gmra.mxu0 %v907
        %v1029 = vpop.f32.mrf.mxu0
        %v1030 = vadd.f32 0.0, %v1029
        %v1031 = vpop.f32.mrf.mxu0
        %1032 = vmatprep.mubr.f32.mxu0 0.0
        %1033 = vmatmul.mubr.f32.gmra.mxu0 %v910
        %v1034 = vpop.f32.mrf.mxu0
        %v1035 = vadd.f32 0.0, %v1034
        %v1036 = vpop.f32.mrf.mxu0
        %1037 = vmatprep.mubr.f32.mxu0 0.0
        %1038 = vmatmul.mubr.f32.gmra.mxu0 %v913
        %v1039 = vpop.f32.mrf.mxu0
        %v1040 = vadd.f32 0.0, %v1039
        %v1041 = vpop.f32.mrf.mxu0
        %1042 = vmatprep.mubr.f32.mxu0 0.0
        %1043 = vmatmul.mubr.f32.gmra.mxu0 %v916
        %v1044 = vpop.f32.mrf.mxu0
        %v1045 = vadd.f32 0.0, %v1044
        %v1046 = vpop.f32.mrf.mxu0
        %1047 = vdwg.mxu0
        %v1048 = vadd.f32 %v794, %v985
        %v1049 = vadd.f32 %v799, %v990
        %v1050 = vadd.f32 %v804, %v995
        %v1051 = vadd.f32 %v809, %v1000
        %v1052 = vadd.f32 %v814, %v1005
        %v1053 = vadd.f32 %v819, %v1010
        %v1054 = vadd.f32 %v824, %v1015
        %v1055 = vadd.f32 %v829, %v1020
        %v1056 = vadd.f32 %v834, %v1025
        %v1057 = vadd.f32 %v839, %v1030
        %v1058 = vadd.f32 %v844, %v1035
        %v1059 = vadd.f32 %v849, %v1040
        %v1060 = vadd.f32 %v854, %v1045
        %v1061 = vld [vmem:[#allocation9] sm:$0x1]
        %v1063 = vlaneseq
        %v1064 = vshrl.u32 %v1063, 7
        %v1065 = vsub.s32 0, %v1064
        %v1066 = vrot.slane %v1061, %v1065
        %v1068 = vadd.f32 %v1048, %v1066
        %v1069 = vadd.f32 %v1049, %v1066
        %v1070 = vadd.f32 %v1050, %v1066
        %v1071 = vadd.f32 %v1051, %v1066
        %v1072 = vadd.f32 %v1052, %v1066
        %v1073 = vadd.f32 %v1053, %v1066
        %v1074 = vadd.f32 %v1054, %v1066
        %v1075 = vadd.f32 %v1055, %v1066
        %v1076 = vadd.f32 %v1056, %v1066
        %v1077 = vadd.f32 %v1057, %v1066
        %v1078 = vadd.f32 %v1058, %v1066
        %v1079 = vadd.f32 %v1059, %v1066
        %v1080 = vadd.f32 %v1060, %v1066
        %v1081 = vmax.f32 %v1068, 0.0
        %v1082 = vmax.f32 %v1069, 0.0
        %v1083 = vmax.f32 %v1070, 0.0
        %v1084 = vmax.f32 %v1071, 0.0
        %v1085 = vmax.f32 %v1072, 0.0
        %v1086 = vmax.f32 %v1073, 0.0
        %v1087 = vmax.f32 %v1074, 0.0
        %v1088 = vmax.f32 %v1075, 0.0
        %v1089 = vmax.f32 %v1076, 0.0
        %v1090 = vmax.f32 %v1077, 0.0
        %v1091 = vmax.f32 %v1078, 0.0
        %v1092 = vmax.f32 %v1079, 0.0
        %v1093 = vmax.f32 %v1080, 0.0
        %1094 = vst [vmem:[#allocation2] sm:$0xff] %v1081
        %1095 = vst [vmem:[#allocation2 + $0x8] sm:$0xff] %v1082
        %1096 = vst [vmem:[#allocation2 + $0x10] sm:$0xff] %v1083
        %1097 = vst [vmem:[#allocation2 + $0x18] sm:$0xff] %v1084
        %1098 = vst [vmem:[#allocation2 + $0x20] sm:$0xff] %v1085
        %1099 = vst [vmem:[#allocation2 + $0x28] sm:$0xff] %v1086
        %1100 = vst [vmem:[#allocation2 + $0x30] sm:$0xff] %v1087
        %1101 = vst [vmem:[#allocation2 + $0x38] sm:$0xff] %v1088
        %1102 = vst [vmem:[#allocation2 + $0x40] sm:$0xff] %v1089
        %1103 = vst [vmem:[#allocation2 + $0x48] sm:$0xff] %v1090
        %1104 = vst [vmem:[#allocation2 + $0x50] sm:$0xff] %v1091
        %1105 = vst [vmem:[#allocation2 + $0x58] sm:$0xff] %v1092
        %1106 = vst [vmem:[#allocation2 + $0x60] sm:$0xff] %v1093
        %v1107 = vld [vmem:[#allocation2] sm:$0xff]
        %v1108 = vld [vmem:[#allocation2 + $0x8] sm:$0xff]
        %v1109 = vld [vmem:[#allocation2 + $0x10] sm:$0xff]
        %v1110 = vld [vmem:[#allocation2 + $0x18] sm:$0xff]
        %v1111 = vld [vmem:[#allocation2 + $0x20] sm:$0xff]
        %v1112 = vld [vmem:[#allocation2 + $0x28] sm:$0xff]
        %v1113 = vld [vmem:[#allocation2 + $0x30] sm:$0xff]
        %v1114 = vld [vmem:[#allocation2 + $0x38] sm:$0xff]
        %v1115 = vld [vmem:[#allocation2 + $0x40] sm:$0xff]
        %v1116 = vld [vmem:[#allocation2 + $0x48] sm:$0xff]
        %v1117 = vld [vmem:[#allocation2 + $0x50] sm:$0xff]
        %v1118 = vld [vmem:[#allocation11] sm:$0xff]
        %v1119 = vld [vmem:[#allocation11 + $0x8] sm:$0xff]
        %v1120 = vld [vmem:[#allocation11 + $0x10] sm:$0xff]
        %v1121 = vld [vmem:[#allocation11 + $0x18] sm:$0xff]
        %v1122 = vld [vmem:[#allocation11 + $0x20] sm:$0xff]
        %v1123 = vld [vmem:[#allocation11 + $0x28] sm:$0xff]
        %v1124 = vld [vmem:[#allocation11 + $0x30] sm:$0xff]
        %v1125 = vld [vmem:[#allocation11 + $0x38] sm:$0xff]
        %v1126 = vld [vmem:[#allocation11 + $0x40] sm:$0xff]
        %v1127 = vld [vmem:[#allocation11 + $0x48] sm:$0xff]
        %v1128 = vld [vmem:[#allocation11 + $0x50] sm:$0xff]
        %v1129 = vld [vmem:[#allocation11 + $0x58] sm:$0xff]
        %v1130 = vld [vmem:[#allocation11 + $0x60] sm:$0xff]
        %v1131 = vld [vmem:[#allocation11 + $0x68] sm:$0xff]
        %v1132 = vld [vmem:[#allocation11 + $0x70] sm:$0xff]
        %v1133 = vld [vmem:[#allocation11 + $0x78] sm:$0xff]
        %v1134 = vld [vmem:[#allocation2 + $0x58] sm:$0xff]
        %s1135 = scalar_lea.vmem [#allocation11], 128
        %v1136 = vld [vmem:[%s1135] sm:$0xff]
        %v1137 = vld [vmem:[%s1135 + $0x8] sm:$0xff]
        %v1138 = vld [vmem:[%s1135 + $0x10] sm:$0xff]
        %v1139 = vld [vmem:[%s1135 + $0x18] sm:$0xff]
        %v1140 = vld [vmem:[%s1135 + $0x20] sm:$0xff]
        %v1141 = vld [vmem:[%s1135 + $0x28] sm:$0xff]
        %v1142 = vld [vmem:[%s1135 + $0x30] sm:$0xff]
        %v1143 = vld [vmem:[%s1135 + $0x38] sm:$0xff]
        %v1144 = vld [vmem:[%s1135 + $0x40] sm:$0xff]
        %v1145 = vld [vmem:[%s1135 + $0x48] sm:$0xff]
        %v1146 = vld [vmem:[%s1135 + $0x50] sm:$0xff]
        %v1147 = vld [vmem:[%s1135 + $0x58] sm:$0xff]
        %v1148 = vld [vmem:[%s1135 + $0x60] sm:$0xff]
        %v1149 = vld [vmem:[%s1135 + $0x68] sm:$0xff]
        %v1150 = vld [vmem:[%s1135 + $0x70] sm:$0xff]
        %v1151 = vld [vmem:[%s1135 + $0x78] sm:$0xff]
        %1152 = vmatprep.subr.mxu0 0.0
        %1153 = vmatpush1.msra.mxu0 %v1151
        %1154 = vmatprep.subr.mxu0 0.0
        %1155 = vmatpush1.msra.mxu0 %v1150
        %1156 = vmatprep.subr.mxu0 0.0
        %1157 = vmatpush1.msra.mxu0 %v1149
        %1158 = vmatprep.subr.mxu0 0.0
        %1159 = vmatpush1.msra.mxu0 %v1148
        %1160 = vmatprep.subr.mxu0 0.0
        %1161 = vmatpush1.msra.mxu0 %v1147
        %1162 = vmatprep.subr.mxu0 0.0
        %1163 = vmatpush1.msra.mxu0 %v1146
        %1164 = vmatprep.subr.mxu0 0.0
        %1165 = vmatpush1.msra.mxu0 %v1145
        %1166 = vmatprep.subr.mxu0 0.0
        %1167 = vmatpush1.msra.mxu0 %v1144
        %1168 = vmatprep.subr.mxu0 0.0
        %1169 = vmatpush1.msra.mxu0 %v1143
        %1170 = vmatprep.subr.mxu0 0.0
        %1171 = vmatpush1.msra.mxu0 %v1142
        %1172 = vmatprep.subr.mxu0 0.0
        %1173 = vmatpush1.msra.mxu0 %v1141
        %1174 = vmatprep.subr.mxu0 0.0
        %1175 = vmatpush1.msra.mxu0 %v1140
        %1176 = vmatprep.subr.mxu0 0.0
        %1177 = vmatpush1.msra.mxu0 %v1139
        %1178 = vmatprep.subr.mxu0 0.0
        %1179 = vmatpush1.msra.mxu0 %v1138
        %1180 = vmatprep.subr.mxu0 0.0
        %1181 = vmatpush1.msra.mxu0 %v1137
        %1182 = vmatprep.subr.mxu0 0.0
        %1183 = vmatpush1.msra.mxu0 %v1136
        %1184 = vmatprep.subr.mxu0 0.0
        %1185 = vmatpush2.msra.mxu0 0.0
        %1186 = vmatprep.subr.mxu0 0.0
        %1187 = vmatpush2.msra.mxu0 0.0
        %1188 = vmatprep.subr.mxu0 0.0
        %1189 = vmatpush2.msra.mxu0 0.0
        %1190 = vmatprep.subr.mxu0 0.0
        %1191 = vmatpush2.msra.mxu0 0.0
        %1192 = vmatprep.subr.mxu0 0.0
        %1193 = vmatpush2.msra.mxu0 0.0
        %1194 = vmatprep.subr.mxu0 0.0
        %1195 = vmatpush2.msra.mxu0 0.0
        %1196 = vmatprep.subr.mxu0 0.0
        %1197 = vmatpush2.msra.mxu0 0.0
        %1198 = vmatprep.subr.mxu0 0.0
        %1199 = vmatpush2.msra.mxu0 0.0
        %1200 = vmatprep.subr.mxu0 0.0
        %1201 = vmatpush2.msra.mxu0 0.0
        %1202 = vmatprep.subr.mxu0 0.0
        %1203 = vmatpush2.msra.mxu0 0.0
        %1204 = vmatprep.subr.mxu0 0.0
        %1205 = vmatpush2.msra.mxu0 0.0
        %1206 = vmatprep.subr.mxu0 0.0
        %1207 = vmatpush2.msra.mxu0 0.0
        %1208 = vmatprep.subr.mxu0 0.0
        %1209 = vmatpush2.msra.mxu0 0.0
        %1210 = vmatprep.subr.mxu0 0.0
        %1211 = vmatpush2.msra.mxu0 0.0
        %1212 = vmatprep.subr.mxu0 0.0
        %1213 = vmatpush2.msra.mxu0 0.0
        %1214 = vmatprep.subr.mxu0 0.0
        %1215 = vmatpush2.msra.mxu0 0.0
        %1216 = vmatprep.mubr.f32.mxu0 0.0
        %1217 = vmatmul.mubr.f32.gmra.mxu0 %v1108
        %v1218 = vpop.f32.mrf.mxu0
        %v1219 = vadd.f32 0.0, %v1218
        %v1220 = vpop.f32.mrf.mxu0
        %1221 = vmatprep.mubr.f32.mxu0 0.0
        %1222 = vmatmul.mubr.f32.gmra.mxu0 %v1109
        %v1223 = vpop.f32.mrf.mxu0
        %v1224 = vadd.f32 0.0, %v1223
        %v1225 = vpop.f32.mrf.mxu0
        %1226 = vmatprep.mubr.f32.mxu0 0.0
        %1227 = vmatmul.mubr.f32.gmra.mxu0 %v1110
        %v1228 = vpop.f32.mrf.mxu0
        %v1229 = vadd.f32 0.0, %v1228
        %v1230 = vpop.f32.mrf.mxu0
        %1231 = vmatprep.mubr.f32.mxu0 0.0
        %1232 = vmatmul.mubr.f32.gmra.mxu0 %v1111
        %v1233 = vpop.f32.mrf.mxu0
        %v1234 = vadd.f32 0.0, %v1233
        %v1235 = vpop.f32.mrf.mxu0
        %1236 = vmatprep.mubr.f32.mxu0 0.0
        %1237 = vmatmul.mubr.f32.gmra.mxu0 %v1112
        %v1238 = vpop.f32.mrf.mxu0
        %v1239 = vadd.f32 0.0, %v1238
        %v1240 = vpop.f32.mrf.mxu0
        %1241 = vmatprep.mubr.f32.mxu0 0.0
        %1242 = vmatmul.mubr.f32.gmra.mxu0 %v1113
        %v1243 = vpop.f32.mrf.mxu0
        %v1244 = vadd.f32 0.0, %v1243
        %v1245 = vpop.f32.mrf.mxu0
        %1246 = vmatprep.mubr.f32.mxu0 0.0
        %1247 = vmatmul.mubr.f32.gmra.mxu0 %v1114
        %v1248 = vpop.f32.mrf.mxu0
        %v1249 = vadd.f32 0.0, %v1248
        %v1250 = vpop.f32.mrf.mxu0
        %1251 = vmatprep.mubr.f32.mxu0 0.0
        %1252 = vmatmul.mubr.f32.gmra.mxu0 %v1115
        %v1253 = vpop.f32.mrf.mxu0
        %v1254 = vadd.f32 0.0, %v1253
        %v1255 = vpop.f32.mrf.mxu0
        %1256 = vmatprep.mubr.f32.mxu0 0.0
        %1257 = vmatmul.mubr.f32.gmra.mxu0 %v1116
        %v1258 = vpop.f32.mrf.mxu0
        %v1259 = vadd.f32 0.0, %v1258
        %v1260 = vpop.f32.mrf.mxu0
        %1261 = vmatprep.mubr.f32.mxu0 0.0
        %1262 = vmatmul.mubr.f32.gmra.mxu0 %v1117
        %v1263 = vpop.f32.mrf.mxu0
        %v1264 = vadd.f32 0.0, %v1263
        %v1265 = vpop.f32.mrf.mxu0
        %1266 = vmatprep.mubr.f32.mxu0 0.0
        %1267 = vmatmul.mubr.f32.gmra.mxu0 %v1134
        %v1268 = vpop.f32.mrf.mxu0
        %v1269 = vadd.f32 0.0, %v1268
        %v1270 = vpop.f32.mrf.mxu0
        %1271 = vdwg.mxu0
        %1272 = vmatprep.subr.mxu0 0.0
        %1273 = vmatpush1.msra.mxu0 %v1133
        %1274 = vmatprep.subr.mxu0 0.0
        %1275 = vmatpush1.msra.mxu0 %v1132
        %1276 = vmatprep.subr.mxu0 0.0
        %1277 = vmatpush1.msra.mxu0 %v1131
        %1278 = vmatprep.subr.mxu0 0.0
        %1279 = vmatpush1.msra.mxu0 %v1130
        %1280 = vmatprep.subr.mxu0 0.0
        %1281 = vmatpush1.msra.mxu0 %v1129
        %1282 = vmatprep.subr.mxu0 0.0
        %1283 = vmatpush1.msra.mxu0 %v1128
        %1284 = vmatprep.subr.mxu0 0.0
        %1285 = vmatpush1.msra.mxu0 %v1127
        %1286 = vmatprep.subr.mxu0 0.0
        %1287 = vmatpush1.msra.mxu0 %v1126
        %1288 = vmatprep.subr.mxu0 0.0
        %1289 = vmatpush1.msra.mxu0 %v1125
        %1290 = vmatprep.subr.mxu0 0.0
        %1291 = vmatpush1.msra.mxu0 %v1124
        %1292 = vmatprep.subr.mxu0 0.0
        %1293 = vmatpush1.msra.mxu0 %v1123
        %1294 = vmatprep.subr.mxu0 0.0
        %1295 = vmatpush1.msra.mxu0 %v1122
        %1296 = vmatprep.subr.mxu0 0.0
        %1297 = vmatpush1.msra.mxu0 %v1121
        %1298 = vmatprep.subr.mxu0 0.0
        %1299 = vmatpush1.msra.mxu0 %v1120
        %1300 = vmatprep.subr.mxu0 0.0
        %1301 = vmatpush1.msra.mxu0 %v1119
        %1302 = vmatprep.subr.mxu0 0.0
        %1303 = vmatpush1.msra.mxu0 %v1118
        %1304 = vmatprep.subr.mxu0 0.0
        %1305 = vmatpush2.msra.mxu0 0.0
        %1306 = vmatprep.subr.mxu0 0.0
        %1307 = vmatpush2.msra.mxu0 0.0
        %1308 = vmatprep.subr.mxu0 0.0
        %1309 = vmatpush2.msra.mxu0 0.0
        %1310 = vmatprep.subr.mxu0 0.0
        %1311 = vmatpush2.msra.mxu0 0.0
        %1312 = vmatprep.subr.mxu0 0.0
        %1313 = vmatpush2.msra.mxu0 0.0
        %1314 = vmatprep.subr.mxu0 0.0
        %1315 = vmatpush2.msra.mxu0 0.0
        %1316 = vmatprep.subr.mxu0 0.0
        %1317 = vmatpush2.msra.mxu0 0.0
        %1318 = vmatprep.subr.mxu0 0.0
        %1319 = vmatpush2.msra.mxu0 0.0
        %1320 = vmatprep.subr.mxu0 0.0
        %1321 = vmatpush2.msra.mxu0 0.0
        %1322 = vmatprep.subr.mxu0 0.0
        %1323 = vmatpush2.msra.mxu0 0.0
        %1324 = vmatprep.subr.mxu0 0.0
        %1325 = vmatpush2.msra.mxu0 0.0
        %1326 = vmatprep.subr.mxu0 0.0
        %1327 = vmatpush2.msra.mxu0 0.0
        %1328 = vmatprep.subr.mxu0 0.0
        %1329 = vmatpush2.msra.mxu0 0.0
        %1330 = vmatprep.subr.mxu0 0.0
        %1331 = vmatpush2.msra.mxu0 0.0
        %1332 = vmatprep.subr.mxu0 0.0
        %1333 = vmatpush2.msra.mxu0 0.0
        %1334 = vmatprep.subr.mxu0 0.0
        %1335 = vmatpush2.msra.mxu0 0.0
        %1336 = vmatprep.mubr.f32.mxu0 0.0
        %1337 = vmatmul.mubr.f32.gmra.mxu0 %v1107
        %v1338 = vpop.f32.mrf.mxu0
        %v1339 = vadd.f32 %v1219, %v1338
        %v1340 = vpop.f32.mrf.mxu0
        %1341 = vmatprep.mubr.f32.mxu0 0.0
        %1342 = vmatmul.mubr.f32.gmra.mxu0 %v1108
        %v1343 = vpop.f32.mrf.mxu0
        %v1344 = vadd.f32 %v1224, %v1343
        %v1345 = vpop.f32.mrf.mxu0
        %1346 = vmatprep.mubr.f32.mxu0 0.0
        %1347 = vmatmul.mubr.f32.gmra.mxu0 %v1109
        %v1348 = vpop.f32.mrf.mxu0
        %v1349 = vadd.f32 %v1229, %v1348
        %v1350 = vpop.f32.mrf.mxu0
        %1351 = vmatprep.mubr.f32.mxu0 0.0
        %1352 = vmatmul.mubr.f32.gmra.mxu0 %v1110
        %v1353 = vpop.f32.mrf.mxu0
        %v1354 = vadd.f32 %v1234, %v1353
        %v1355 = vpop.f32.mrf.mxu0
        %1356 = vmatprep.mubr.f32.mxu0 0.0
        %1357 = vmatmul.mubr.f32.gmra.mxu0 %v1111
        %v1358 = vpop.f32.mrf.mxu0
        %v1359 = vadd.f32 %v1239, %v1358
        %v1360 = vpop.f32.mrf.mxu0
        %1361 = vmatprep.mubr.f32.mxu0 0.0
        %1362 = vmatmul.mubr.f32.gmra.mxu0 %v1112
        %v1363 = vpop.f32.mrf.mxu0
        %v1364 = vadd.f32 %v1244, %v1363
        %v1365 = vpop.f32.mrf.mxu0
        %1366 = vmatprep.mubr.f32.mxu0 0.0
        %1367 = vmatmul.mubr.f32.gmra.mxu0 %v1113
        %v1368 = vpop.f32.mrf.mxu0
        %v1369 = vadd.f32 %v1249, %v1368
        %v1370 = vpop.f32.mrf.mxu0
        %1371 = vmatprep.mubr.f32.mxu0 0.0
        %1372 = vmatmul.mubr.f32.gmra.mxu0 %v1114
        %v1373 = vpop.f32.mrf.mxu0
        %v1374 = vadd.f32 %v1254, %v1373
        %v1375 = vpop.f32.mrf.mxu0
        %1376 = vmatprep.mubr.f32.mxu0 0.0
        %1377 = vmatmul.mubr.f32.gmra.mxu0 %v1115
        %v1378 = vpop.f32.mrf.mxu0
        %v1379 = vadd.f32 %v1259, %v1378
        %v1380 = vpop.f32.mrf.mxu0
        %1381 = vmatprep.mubr.f32.mxu0 0.0
        %1382 = vmatmul.mubr.f32.gmra.mxu0 %v1116
        %v1383 = vpop.f32.mrf.mxu0
        %v1384 = vadd.f32 %v1264, %v1383
        %v1385 = vpop.f32.mrf.mxu0
        %1386 = vmatprep.mubr.f32.mxu0 0.0
        %1387 = vmatmul.mubr.f32.gmra.mxu0 %v1117
        %v1388 = vpop.f32.mrf.mxu0
        %v1389 = vadd.f32 %v1269, %v1388
        %v1390 = vpop.f32.mrf.mxu0
        %1391 = vdwg.mxu0
        %v1392 = vld [vmem:[#allocation2 + $0x10] sm:$0xff]
        %v1393 = vld [vmem:[#allocation2 + $0x18] sm:$0xff]
        %v1394 = vld [vmem:[#allocation2 + $0x20] sm:$0xff]
        %v1395 = vld [vmem:[#allocation2 + $0x28] sm:$0xff]
        %v1396 = vld [vmem:[#allocation2 + $0x30] sm:$0xff]
        %v1397 = vld [vmem:[#allocation2 + $0x38] sm:$0xff]
        %v1398 = vld [vmem:[#allocation2 + $0x40] sm:$0xff]
        %v1399 = vld [vmem:[#allocation2 + $0x48] sm:$0xff]
        %v1400 = vld [vmem:[#allocation2 + $0x50] sm:$0xff]
        %v1401 = vld [vmem:[#allocation2 + $0x58] sm:$0xff]
        %v1402 = vld [vmem:[#allocation2 + $0x60] sm:$0xff]
        %s1403 = scalar_lea.vmem [#allocation11], 256
        %v1404 = vld [vmem:[%s1403] sm:$0xff]
        %v1405 = vld [vmem:[%s1403 + $0x8] sm:$0xff]
        %v1406 = vld [vmem:[%s1403 + $0x10] sm:$0xff]
        %v1407 = vld [vmem:[%s1403 + $0x18] sm:$0xff]
        %v1408 = vld [vmem:[%s1403 + $0x20] sm:$0xff]
        %v1409 = vld [vmem:[%s1403 + $0x28] sm:$0xff]
        %v1410 = vld [vmem:[%s1403 + $0x30] sm:$0xff]
        %v1411 = vld [vmem:[%s1403 + $0x38] sm:$0xff]
        %v1412 = vld [vmem:[%s1403 + $0x40] sm:$0xff]
        %v1413 = vld [vmem:[%s1403 + $0x48] sm:$0xff]
        %v1414 = vld [vmem:[%s1403 + $0x50] sm:$0xff]
        %v1415 = vld [vmem:[%s1403 + $0x58] sm:$0xff]
        %v1416 = vld [vmem:[%s1403 + $0x60] sm:$0xff]
        %v1417 = vld [vmem:[%s1403 + $0x68] sm:$0xff]
        %v1418 = vld [vmem:[%s1403 + $0x70] sm:$0xff]
        %v1419 = vld [vmem:[%s1403 + $0x78] sm:$0xff]
        %1420 = vmatprep.subr.mxu0 0.0
        %1421 = vmatpush1.msra.mxu0 %v1419
        %1422 = vmatprep.subr.mxu0 0.0
        %1423 = vmatpush1.msra.mxu0 %v1418
        %1424 = vmatprep.subr.mxu0 0.0
        %1425 = vmatpush1.msra.mxu0 %v1417
        %1426 = vmatprep.subr.mxu0 0.0
        %1427 = vmatpush1.msra.mxu0 %v1416
        %1428 = vmatprep.subr.mxu0 0.0
        %1429 = vmatpush1.msra.mxu0 %v1415
        %1430 = vmatprep.subr.mxu0 0.0
        %1431 = vmatpush1.msra.mxu0 %v1414
        %1432 = vmatprep.subr.mxu0 0.0
        %1433 = vmatpush1.msra.mxu0 %v1413
        %1434 = vmatprep.subr.mxu0 0.0
        %1435 = vmatpush1.msra.mxu0 %v1412
        %1436 = vmatprep.subr.mxu0 0.0
        %1437 = vmatpush1.msra.mxu0 %v1411
        %1438 = vmatprep.subr.mxu0 0.0
        %1439 = vmatpush1.msra.mxu0 %v1410
        %1440 = vmatprep.subr.mxu0 0.0
        %1441 = vmatpush1.msra.mxu0 %v1409
        %1442 = vmatprep.subr.mxu0 0.0
        %1443 = vmatpush1.msra.mxu0 %v1408
        %1444 = vmatprep.subr.mxu0 0.0
        %1445 = vmatpush1.msra.mxu0 %v1407
        %1446 = vmatprep.subr.mxu0 0.0
        %1447 = vmatpush1.msra.mxu0 %v1406
        %1448 = vmatprep.subr.mxu0 0.0
        %1449 = vmatpush1.msra.mxu0 %v1405
        %1450 = vmatprep.subr.mxu0 0.0
        %1451 = vmatpush1.msra.mxu0 %v1404
        %1452 = vmatprep.subr.mxu0 0.0
        %1453 = vmatpush2.msra.mxu0 0.0
        %1454 = vmatprep.subr.mxu0 0.0
        %1455 = vmatpush2.msra.mxu0 0.0
        %1456 = vmatprep.subr.mxu0 0.0
        %1457 = vmatpush2.msra.mxu0 0.0
        %1458 = vmatprep.subr.mxu0 0.0
        %1459 = vmatpush2.msra.mxu0 0.0
        %1460 = vmatprep.subr.mxu0 0.0
        %1461 = vmatpush2.msra.mxu0 0.0
        %1462 = vmatprep.subr.mxu0 0.0
        %1463 = vmatpush2.msra.mxu0 0.0
        %1464 = vmatprep.subr.mxu0 0.0
        %1465 = vmatpush2.msra.mxu0 0.0
        %1466 = vmatprep.subr.mxu0 0.0
        %1467 = vmatpush2.msra.mxu0 0.0
        %1468 = vmatprep.subr.mxu0 0.0
        %1469 = vmatpush2.msra.mxu0 0.0
        %1470 = vmatprep.subr.mxu0 0.0
        %1471 = vmatpush2.msra.mxu0 0.0
        %1472 = vmatprep.subr.mxu0 0.0
        %1473 = vmatpush2.msra.mxu0 0.0
        %1474 = vmatprep.subr.mxu0 0.0
        %1475 = vmatpush2.msra.mxu0 0.0
        %1476 = vmatprep.subr.mxu0 0.0
        %1477 = vmatpush2.msra.mxu0 0.0
        %1478 = vmatprep.subr.mxu0 0.0
        %1479 = vmatpush2.msra.mxu0 0.0
        %1480 = vmatprep.subr.mxu0 0.0
        %1481 = vmatpush2.msra.mxu0 0.0
        %1482 = vmatprep.subr.mxu0 0.0
        %1483 = vmatpush2.msra.mxu0 0.0
        %1484 = vmatprep.mubr.f32.mxu0 0.0
        %1485 = vmatmul.mubr.f32.gmra.mxu0 %v1392
        %v1486 = vpop.f32.mrf.mxu0
        %v1487 = vadd.f32 0.0, %v1486
        %v1488 = vpop.f32.mrf.mxu0
        %1489 = vmatprep.mubr.f32.mxu0 0.0
        %1490 = vmatmul.mubr.f32.gmra.mxu0 %v1393
        %v1491 = vpop.f32.mrf.mxu0
        %v1492 = vadd.f32 0.0, %v1491
        %v1493 = vpop.f32.mrf.mxu0
        %1494 = vmatprep.mubr.f32.mxu0 0.0
        %1495 = vmatmul.mubr.f32.gmra.mxu0 %v1394
        %v1496 = vpop.f32.mrf.mxu0
        %v1497 = vadd.f32 0.0, %v1496
        %v1498 = vpop.f32.mrf.mxu0
        %1499 = vmatprep.mubr.f32.mxu0 0.0
        %1500 = vmatmul.mubr.f32.gmra.mxu0 %v1395
        %v1501 = vpop.f32.mrf.mxu0
        %v1502 = vadd.f32 0.0, %v1501
        %v1503 = vpop.f32.mrf.mxu0
        %1504 = vmatprep.mubr.f32.mxu0 0.0
        %1505 = vmatmul.mubr.f32.gmra.mxu0 %v1396
        %v1506 = vpop.f32.mrf.mxu0
        %v1507 = vadd.f32 0.0, %v1506
        %v1508 = vpop.f32.mrf.mxu0
        %1509 = vmatprep.mubr.f32.mxu0 0.0
        %1510 = vmatmul.mubr.f32.gmra.mxu0 %v1397
        %v1511 = vpop.f32.mrf.mxu0
        %v1512 = vadd.f32 0.0, %v1511
        %v1513 = vpop.f32.mrf.mxu0
        %1514 = vmatprep.mubr.f32.mxu0 0.0
        %1515 = vmatmul.mubr.f32.gmra.mxu0 %v1398
        %v1516 = vpop.f32.mrf.mxu0
        %v1517 = vadd.f32 0.0, %v1516
        %v1518 = vpop.f32.mrf.mxu0
        %1519 = vmatprep.mubr.f32.mxu0 0.0
        %1520 = vmatmul.mubr.f32.gmra.mxu0 %v1399
        %v1521 = vpop.f32.mrf.mxu0
        %v1522 = vadd.f32 0.0, %v1521
        %v1523 = vpop.f32.mrf.mxu0
        %1524 = vmatprep.mubr.f32.mxu0 0.0
        %1525 = vmatmul.mubr.f32.gmra.mxu0 %v1400
        %v1526 = vpop.f32.mrf.mxu0
        %v1527 = vadd.f32 0.0, %v1526
        %v1528 = vpop.f32.mrf.mxu0
        %1529 = vmatprep.mubr.f32.mxu0 0.0
        %1530 = vmatmul.mubr.f32.gmra.mxu0 %v1401
        %v1531 = vpop.f32.mrf.mxu0
        %v1532 = vadd.f32 0.0, %v1531
        %v1533 = vpop.f32.mrf.mxu0
        %1534 = vmatprep.mubr.f32.mxu0 0.0
        %1535 = vmatmul.mubr.f32.gmra.mxu0 %v1402
        %v1536 = vpop.f32.mrf.mxu0
        %v1537 = vadd.f32 0.0, %v1536
        %v1538 = vpop.f32.mrf.mxu0
        %1539 = vdwg.mxu0
        %v1540 = vadd.f32 %v1339, %v1487
        %v1541 = vadd.f32 %v1344, %v1492
        %v1542 = vadd.f32 %v1349, %v1497
        %v1543 = vadd.f32 %v1354, %v1502
        %v1544 = vadd.f32 %v1359, %v1507
        %v1545 = vadd.f32 %v1364, %v1512
        %v1546 = vadd.f32 %v1369, %v1517
        %v1547 = vadd.f32 %v1374, %v1522
        %v1548 = vadd.f32 %v1379, %v1527
        %v1549 = vadd.f32 %v1384, %v1532
        %v1550 = vadd.f32 %v1389, %v1537
        %v1551 = vld [vmem:[#allocation12] sm:$0x1]
        %v1553 = vlaneseq
        %v1554 = vshrl.u32 %v1553, 7
        %v1555 = vsub.s32 0, %v1554
        %v1556 = vrot.slane %v1551, %v1555
        %v1558 = vadd.f32 %v1540, %v1556
        %v1559 = vadd.f32 %v1541, %v1556
        %v1560 = vadd.f32 %v1542, %v1556
        %v1561 = vadd.f32 %v1543, %v1556
        %v1562 = vadd.f32 %v1544, %v1556
        %v1563 = vadd.f32 %v1545, %v1556
        %v1564 = vadd.f32 %v1546, %v1556
        %v1565 = vadd.f32 %v1547, %v1556
        %v1566 = vadd.f32 %v1548, %v1556
        %v1567 = vadd.f32 %v1549, %v1556
        %v1568 = vadd.f32 %v1550, %v1556
        %v1569 = vmax.f32 %v1558, 0.0
        %v1570 = vmax.f32 %v1559, 0.0
        %v1571 = vmax.f32 %v1560, 0.0
        %v1572 = vmax.f32 %v1561, 0.0
        %v1573 = vmax.f32 %v1562, 0.0
        %v1574 = vmax.f32 %v1563, 0.0
        %v1575 = vmax.f32 %v1564, 0.0
        %v1576 = vmax.f32 %v1565, 0.0
        %v1577 = vmax.f32 %v1566, 0.0
        %v1578 = vmax.f32 %v1567, 0.0
        %v1579 = vmax.f32 %v1568, 0.0
        %1580 = vst [vmem:[#allocation3] sm:$0xff] %v1569
        %1581 = vst [vmem:[#allocation3 + $0x8] sm:$0xff] %v1570
        %1582 = vst [vmem:[#allocation3 + $0x10] sm:$0xff] %v1571
        %1583 = vst [vmem:[#allocation3 + $0x18] sm:$0xff] %v1572
        %1584 = vst [vmem:[#allocation3 + $0x20] sm:$0xff] %v1573
        %1585 = vst [vmem:[#allocation3 + $0x28] sm:$0xff] %v1574
        %1586 = vst [vmem:[#allocation3 + $0x30] sm:$0xff] %v1575
        %1587 = vst [vmem:[#allocation3 + $0x38] sm:$0xff] %v1576
        %1588 = vst [vmem:[#allocation3 + $0x40] sm:$0xff] %v1577
        %1589 = vst [vmem:[#allocation3 + $0x48] sm:$0xff] %v1578
        %1590 = vst [vmem:[#allocation3 + $0x50] sm:$0xff] %v1579
        %v1591 = vld [vmem:[#allocation3] sm:$0xff]
        %v1592 = vld [vmem:[#allocation3 + $0x8] sm:$0xff]
        %v1593 = vld [vmem:[#allocation3 + $0x10] sm:$0xff]
        %v1594 = vld [vmem:[#allocation3 + $0x18] sm:$0xff]
        %v1595 = vld [vmem:[#allocation3 + $0x20] sm:$0xff]
        %v1596 = vld [vmem:[#allocation3 + $0x28] sm:$0xff]
        %v1597 = vld [vmem:[#allocation3 + $0x30] sm:$0xff]
        %v1598 = vld [vmem:[#allocation3 + $0x38] sm:$0xff]
        %v1599 = vld [vmem:[#allocation3 + $0x40] sm:$0xff]
        %v1600 = vld [vmem:[%s5] sm:$0xff]
        %v1601 = vld [vmem:[%s5 + $0x8] sm:$0xff]
        %v1602 = vld [vmem:[%s5 + $0x10] sm:$0xff]
        %v1603 = vld [vmem:[%s5 + $0x18] sm:$0xff]
        %v1604 = vld [vmem:[%s5 + $0x20] sm:$0xff]
        %v1605 = vld [vmem:[%s5 + $0x28] sm:$0xff]
        %v1606 = vld [vmem:[%s5 + $0x30] sm:$0xff]
        %v1607 = vld [vmem:[%s5 + $0x38] sm:$0xff]
        %v1608 = vld [vmem:[%s5 + $0x40] sm:$0xff]
        %v1609 = vld [vmem:[%s5 + $0x48] sm:$0xff]
        %v1610 = vld [vmem:[%s5 + $0x50] sm:$0xff]
        %v1611 = vld [vmem:[%s5 + $0x58] sm:$0xff]
        %v1612 = vld [vmem:[%s5 + $0x60] sm:$0xff]
        %v1613 = vld [vmem:[%s5 + $0x68] sm:$0xff]
        %v1614 = vld [vmem:[%s5 + $0x70] sm:$0xff]
        %v1615 = vld [vmem:[%s5 + $0x78] sm:$0xff]
        %v1616 = vld [vmem:[%s5 + $0x80] sm:$0xff]
        %v1617 = vld [vmem:[%s5 + $0x88] sm:$0xff]
        %v1618 = vld [vmem:[%s5 + $0x90] sm:$0xff]
        %v1619 = vld [vmem:[%s5 + $0x98] sm:$0xff]
        %v1620 = vld [vmem:[%s5 + $0xa0] sm:$0xff]
        %v1621 = vld [vmem:[%s5 + $0xa8] sm:$0xff]
        %v1622 = vld [vmem:[%s5 + $0xb0] sm:$0xff]
        %v1623 = vld [vmem:[%s5 + $0xb8] sm:$0xff]
        %v1624 = vld [vmem:[%s5 + $0xc0] sm:$0xff]
        %v1625 = vld [vmem:[%s5 + $0xc8] sm:$0xff]
        %v1626 = vld [vmem:[%s5 + $0xd0] sm:$0xff]
        %v1627 = vld [vmem:[%s5 + $0xd8] sm:$0xff]
        %v1628 = vld [vmem:[%s5 + $0xe0] sm:$0xff]
        %v1629 = vld [vmem:[%s5 + $0xe8] sm:$0xff]
        %v1630 = vld [vmem:[%s5 + $0xf0] sm:$0xff]
        %v1631 = vld [vmem:[%s5 + $0xf8] sm:$0xff]
        %v1632 = vld [vmem:[#allocation3 + $0x48] sm:$0xff]
        %s1633 = scalar_lea.vmem %s5, 256
        %v1634 = vld [vmem:[%s1633] sm:$0xff]
        %v1635 = vld [vmem:[%s1633 + $0x8] sm:$0xff]
        %v1636 = vld [vmem:[%s1633 + $0x10] sm:$0xff]
        %v1637 = vld [vmem:[%s1633 + $0x18] sm:$0xff]
        %v1638 = vld [vmem:[%s1633 + $0x20] sm:$0xff]
        %v1639 = vld [vmem:[%s1633 + $0x28] sm:$0xff]
        %v1640 = vld [vmem:[%s1633 + $0x30] sm:$0xff]
        %v1641 = vld [vmem:[%s1633 + $0x38] sm:$0xff]
        %v1642 = vld [vmem:[%s1633 + $0x40] sm:$0xff]
        %v1643 = vld [vmem:[%s1633 + $0x48] sm:$0xff]
        %v1644 = vld [vmem:[%s1633 + $0x50] sm:$0xff]
        %v1645 = vld [vmem:[%s1633 + $0x58] sm:$0xff]
        %v1646 = vld [vmem:[%s1633 + $0x60] sm:$0xff]
        %v1647 = vld [vmem:[%s1633 + $0x68] sm:$0xff]
        %v1648 = vld [vmem:[%s1633 + $0x70] sm:$0xff]
        %v1649 = vld [vmem:[%s1633 + $0x78] sm:$0xff]
        %v1650 = vld [vmem:[%s1633 + $0x80] sm:$0xff]
        %v1651 = vld [vmem:[%s1633 + $0x88] sm:$0xff]
        %v1652 = vld [vmem:[%s1633 + $0x90] sm:$0xff]
        %v1653 = vld [vmem:[%s1633 + $0x98] sm:$0xff]
        %v1654 = vld [vmem:[%s1633 + $0xa0] sm:$0xff]
        %v1655 = vld [vmem:[%s1633 + $0xa8] sm:$0xff]
        %v1656 = vld [vmem:[%s1633 + $0xb0] sm:$0xff]
        %v1657 = vld [vmem:[%s1633 + $0xb8] sm:$0xff]
        %v1658 = vld [vmem:[%s1633 + $0xc0] sm:$0xff]
        %v1659 = vld [vmem:[%s1633 + $0xc8] sm:$0xff]
        %v1660 = vld [vmem:[%s1633 + $0xd0] sm:$0xff]
        %v1661 = vld [vmem:[%s1633 + $0xd8] sm:$0xff]
        %v1662 = vld [vmem:[%s1633 + $0xe0] sm:$0xff]
        %v1663 = vld [vmem:[%s1633 + $0xe8] sm:$0xff]
        %v1664 = vld [vmem:[%s1633 + $0xf0] sm:$0xff]
        %v1665 = vld [vmem:[%s1633 + $0xf8] sm:$0xff]
        %1666 = vmatprep.subr.mxu0 %v1665
        %1667 = vmatpush1.msra.mxu0 %v1664
        %1668 = vmatprep.subr.mxu0 %v1663
        %1669 = vmatpush1.msra.mxu0 %v1662
        %1670 = vmatprep.subr.mxu0 %v1661
        %1671 = vmatpush1.msra.mxu0 %v1660
        %1672 = vmatprep.subr.mxu0 %v1659
        %1673 = vmatpush1.msra.mxu0 %v1658
        %1674 = vmatprep.subr.mxu0 %v1657
        %1675 = vmatpush1.msra.mxu0 %v1656
        %1676 = vmatprep.subr.mxu0 %v1655
        %1677 = vmatpush1.msra.mxu0 %v1654
        %1678 = vmatprep.subr.mxu0 %v1653
        %1679 = vmatpush1.msra.mxu0 %v1652
        %1680 = vmatprep.subr.mxu0 %v1651
        %1681 = vmatpush1.msra.mxu0 %v1650
        %1682 = vmatprep.subr.mxu0 %v1649
        %1683 = vmatpush1.msra.mxu0 %v1648
        %1684 = vmatprep.subr.mxu0 %v1647
        %1685 = vmatpush1.msra.mxu0 %v1646
        %1686 = vmatprep.subr.mxu0 %v1645
        %1687 = vmatpush1.msra.mxu0 %v1644
        %1688 = vmatprep.subr.mxu0 %v1643
        %1689 = vmatpush1.msra.mxu0 %v1642
        %1690 = vmatprep.subr.mxu0 %v1641
        %1691 = vmatpush1.msra.mxu0 %v1640
        %1692 = vmatprep.subr.mxu0 %v1639
        %1693 = vmatpush1.msra.mxu0 %v1638
        %1694 = vmatprep.subr.mxu0 %v1637
        %1695 = vmatpush1.msra.mxu0 %v1636
        %1696 = vmatprep.subr.mxu0 %v1635
        %1697 = vmatpush1.msra.mxu0 %v1634
        %1698 = vmatprep.subr.mxu0 0.0
        %1699 = vmatpush2.msra.mxu0 0.0
        %1700 = vmatprep.subr.mxu0 0.0
        %1701 = vmatpush2.msra.mxu0 0.0
        %1702 = vmatprep.subr.mxu0 0.0
        %1703 = vmatpush2.msra.mxu0 0.0
        %1704 = vmatprep.subr.mxu0 0.0
        %1705 = vmatpush2.msra.mxu0 0.0
        %1706 = vmatprep.subr.mxu0 0.0
        %1707 = vmatpush2.msra.mxu0 0.0
        %1708 = vmatprep.subr.mxu0 0.0
        %1709 = vmatpush2.msra.mxu0 0.0
        %1710 = vmatprep.subr.mxu0 0.0
        %1711 = vmatpush2.msra.mxu0 0.0
        %1712 = vmatprep.subr.mxu0 0.0
        %1713 = vmatpush2.msra.mxu0 0.0
        %1714 = vmatprep.subr.mxu0 0.0
        %1715 = vmatpush2.msra.mxu0 0.0
        %1716 = vmatprep.subr.mxu0 0.0
        %1717 = vmatpush2.msra.mxu0 0.0
        %1718 = vmatprep.subr.mxu0 0.0
        %1719 = vmatpush2.msra.mxu0 0.0
        %1720 = vmatprep.subr.mxu0 0.0
        %1721 = vmatpush2.msra.mxu0 0.0
        %1722 = vmatprep.subr.mxu0 0.0
        %1723 = vmatpush2.msra.mxu0 0.0
        %1724 = vmatprep.subr.mxu0 0.0
        %1725 = vmatpush2.msra.mxu0 0.0
        %1726 = vmatprep.subr.mxu0 0.0
        %1727 = vmatpush2.msra.mxu0 0.0
        %1728 = vmatprep.subr.mxu0 0.0
        %1729 = vmatpush2.msra.mxu0 0.0
        %1730 = vmatprep.mubr.f32.mxu0 0.0
        %1731 = vmatmul.mubr.f32.gmra.mxu0 %v1592
        %v1732 = vpop.f32.mrf.mxu0
        %v1733 = vadd.f32 0.0, %v1732
        %v1734 = vpop.f32.mrf.mxu0
        %v1735 = vadd.f32 0.0, %v1734
        %1736 = vmatprep.mubr.f32.mxu0 0.0
        %1737 = vmatmul.mubr.f32.gmra.mxu0 %v1593
        %v1738 = vpop.f32.mrf.mxu0
        %v1739 = vadd.f32 0.0, %v1738
        %v1740 = vpop.f32.mrf.mxu0
        %v1741 = vadd.f32 0.0, %v1740
        %1742 = vmatprep.mubr.f32.mxu0 0.0
        %1743 = vmatmul.mubr.f32.gmra.mxu0 %v1594
        %v1744 = vpop.f32.mrf.mxu0
        %v1745 = vadd.f32 0.0, %v1744
        %v1746 = vpop.f32.mrf.mxu0
        %v1747 = vadd.f32 0.0, %v1746
        %1748 = vmatprep.mubr.f32.mxu0 0.0
        %1749 = vmatmul.mubr.f32.gmra.mxu0 %v1595
        %v1750 = vpop.f32.mrf.mxu0
        %v1751 = vadd.f32 0.0, %v1750
        %v1752 = vpop.f32.mrf.mxu0
        %v1753 = vadd.f32 0.0, %v1752
        %1754 = vmatprep.mubr.f32.mxu0 0.0
        %1755 = vmatmul.mubr.f32.gmra.mxu0 %v1596
        %v1756 = vpop.f32.mrf.mxu0
        %v1757 = vadd.f32 0.0, %v1756
        %v1758 = vpop.f32.mrf.mxu0
        %v1759 = vadd.f32 0.0, %v1758
        %1760 = vmatprep.mubr.f32.mxu0 0.0
        %1761 = vmatmul.mubr.f32.gmra.mxu0 %v1597
        %v1762 = vpop.f32.mrf.mxu0
        %v1763 = vadd.f32 0.0, %v1762
        %v1764 = vpop.f32.mrf.mxu0
        %v1765 = vadd.f32 0.0, %v1764
        %1766 = vmatprep.mubr.f32.mxu0 0.0
        %1767 = vmatmul.mubr.f32.gmra.mxu0 %v1598
        %v1768 = vpop.f32.mrf.mxu0
        %v1769 = vadd.f32 0.0, %v1768
        %v1770 = vpop.f32.mrf.mxu0
        %v1771 = vadd.f32 0.0, %v1770
        %1772 = vmatprep.mubr.f32.mxu0 0.0
        %1773 = vmatmul.mubr.f32.gmra.mxu0 %v1599
        %v1774 = vpop.f32.mrf.mxu0
        %v1775 = vadd.f32 0.0, %v1774
        %v1776 = vpop.f32.mrf.mxu0
        %v1777 = vadd.f32 0.0, %v1776
        %1778 = vmatprep.mubr.f32.mxu0 0.0
        %1779 = vmatmul.mubr.f32.gmra.mxu0 %v1632
        %v1780 = vpop.f32.mrf.mxu0
        %v1781 = vadd.f32 0.0, %v1780
        %v1782 = vpop.f32.mrf.mxu0
        %v1783 = vadd.f32 0.0, %v1782
        %1784 = vdwg.mxu0
        %1785 = vmatprep.subr.mxu0 %v1631
        %1786 = vmatpush1.msra.mxu0 %v1630
        %1787 = vmatprep.subr.mxu0 %v1629
        %1788 = vmatpush1.msra.mxu0 %v1628
        %1789 = vmatprep.subr.mxu0 %v1627
        %1790 = vmatpush1.msra.mxu0 %v1626
        %1791 = vmatprep.subr.mxu0 %v1625
        %1792 = vmatpush1.msra.mxu0 %v1624
        %1793 = vmatprep.subr.mxu0 %v1623
        %1794 = vmatpush1.msra.mxu0 %v1622
        %1795 = vmatprep.subr.mxu0 %v1621
        %1796 = vmatpush1.msra.mxu0 %v1620
        %1797 = vmatprep.subr.mxu0 %v1619
        %1798 = vmatpush1.msra.mxu0 %v1618
        %1799 = vmatprep.subr.mxu0 %v1617
        %1800 = vmatpush1.msra.mxu0 %v1616
        %1801 = vmatprep.subr.mxu0 %v1615
        %1802 = vmatpush1.msra.mxu0 %v1614
        %1803 = vmatprep.subr.mxu0 %v1613
        %1804 = vmatpush1.msra.mxu0 %v1612
        %1805 = vmatprep.subr.mxu0 %v1611
        %1806 = vmatpush1.msra.mxu0 %v1610
        %1807 = vmatprep.subr.mxu0 %v1609
        %1808 = vmatpush1.msra.mxu0 %v1608
        %1809 = vmatprep.subr.mxu0 %v1607
        %1810 = vmatpush1.msra.mxu0 %v1606
        %1811 = vmatprep.subr.mxu0 %v1605
        %1812 = vmatpush1.msra.mxu0 %v1604
        %1813 = vmatprep.subr.mxu0 %v1603
        %1814 = vmatpush1.msra.mxu0 %v1602
        %1815 = vmatprep.subr.mxu0 %v1601
        %1816 = vmatpush1.msra.mxu0 %v1600
        %1817 = vmatprep.subr.mxu0 0.0
        %1818 = vmatpush2.msra.mxu0 0.0
        %1819 = vmatprep.subr.mxu0 0.0
        %1820 = vmatpush2.msra.mxu0 0.0
        %1821 = vmatprep.subr.mxu0 0.0
        %1822 = vmatpush2.msra.mxu0 0.0
        %1823 = vmatprep.subr.mxu0 0.0
        %1824 = vmatpush2.msra.mxu0 0.0
        %1825 = vmatprep.subr.mxu0 0.0
        %1826 = vmatpush2.msra.mxu0 0.0
        %1827 = vmatprep.subr.mxu0 0.0
        %1828 = vmatpush2.msra.mxu0 0.0
        %1829 = vmatprep.subr.mxu0 0.0
        %1830 = vmatpush2.msra.mxu0 0.0
        %1831 = vmatprep.subr.mxu0 0.0
        %1832 = vmatpush2.msra.mxu0 0.0
        %1833 = vmatprep.subr.mxu0 0.0
        %1834 = vmatpush2.msra.mxu0 0.0
        %1835 = vmatprep.subr.mxu0 0.0
        %1836 = vmatpush2.msra.mxu0 0.0
        %1837 = vmatprep.subr.mxu0 0.0
        %1838 = vmatpush2.msra.mxu0 0.0
        %1839 = vmatprep.subr.mxu0 0.0
        %1840 = vmatpush2.msra.mxu0 0.0
        %1841 = vmatprep.subr.mxu0 0.0
        %1842 = vmatpush2.msra.mxu0 0.0
        %1843 = vmatprep.subr.mxu0 0.0
        %1844 = vmatpush2.msra.mxu0 0.0
        %1845 = vmatprep.subr.mxu0 0.0
        %1846 = vmatpush2.msra.mxu0 0.0
        %1847 = vmatprep.subr.mxu0 0.0
        %1848 = vmatpush2.msra.mxu0 0.0
        %1849 = vmatprep.mubr.f32.mxu0 0.0
        %1850 = vmatmul.mubr.f32.gmra.mxu0 %v1591
        %v1851 = vpop.f32.mrf.mxu0
        %v1852 = vadd.f32 %v1733, %v1851
        %v1853 = vpop.f32.mrf.mxu0
        %v1854 = vadd.f32 %v1735, %v1853
        %1855 = vmatprep.mubr.f32.mxu0 0.0
        %1856 = vmatmul.mubr.f32.gmra.mxu0 %v1592
        %v1857 = vpop.f32.mrf.mxu0
        %v1858 = vadd.f32 %v1739, %v1857
        %v1859 = vpop.f32.mrf.mxu0
        %v1860 = vadd.f32 %v1741, %v1859
        %1861 = vmatprep.mubr.f32.mxu0 0.0
        %1862 = vmatmul.mubr.f32.gmra.mxu0 %v1593
        %v1863 = vpop.f32.mrf.mxu0
        %v1864 = vadd.f32 %v1745, %v1863
        %v1865 = vpop.f32.mrf.mxu0
        %v1866 = vadd.f32 %v1747, %v1865
        %1867 = vmatprep.mubr.f32.mxu0 0.0
        %1868 = vmatmul.mubr.f32.gmra.mxu0 %v1594
        %v1869 = vpop.f32.mrf.mxu0
        %v1870 = vadd.f32 %v1751, %v1869
        %v1871 = vpop.f32.mrf.mxu0
        %v1872 = vadd.f32 %v1753, %v1871
        %1873 = vmatprep.mubr.f32.mxu0 0.0
        %1874 = vmatmul.mubr.f32.gmra.mxu0 %v1595
        %v1875 = vpop.f32.mrf.mxu0
        %v1876 = vadd.f32 %v1757, %v1875
        %v1877 = vpop.f32.mrf.mxu0
        %v1878 = vadd.f32 %v1759, %v1877
        %1879 = vmatprep.mubr.f32.mxu0 0.0
        %1880 = vmatmul.mubr.f32.gmra.mxu0 %v1596
        %v1881 = vpop.f32.mrf.mxu0
        %v1882 = vadd.f32 %v1763, %v1881
        %v1883 = vpop.f32.mrf.mxu0
        %v1884 = vadd.f32 %v1765, %v1883
        %1885 = vmatprep.mubr.f32.mxu0 0.0
        %1886 = vmatmul.mubr.f32.gmra.mxu0 %v1597
        %v1887 = vpop.f32.mrf.mxu0
        %v1888 = vadd.f32 %v1769, %v1887
        %v1889 = vpop.f32.mrf.mxu0
        %v1890 = vadd.f32 %v1771, %v1889
        %1891 = vmatprep.mubr.f32.mxu0 0.0
        %1892 = vmatmul.mubr.f32.gmra.mxu0 %v1598
        %v1893 = vpop.f32.mrf.mxu0
        %v1894 = vadd.f32 %v1775, %v1893
        %v1895 = vpop.f32.mrf.mxu0
        %v1896 = vadd.f32 %v1777, %v1895
        %1897 = vmatprep.mubr.f32.mxu0 0.0
        %1898 = vmatmul.mubr.f32.gmra.mxu0 %v1599
        %v1899 = vpop.f32.mrf.mxu0
        %v1900 = vadd.f32 %v1781, %v1899
        %v1901 = vpop.f32.mrf.mxu0
        %v1902 = vadd.f32 %v1783, %v1901
        %1903 = vdwg.mxu0
        %v1904 = vld [vmem:[#allocation3 + $0x10] sm:$0xff]
        %v1905 = vld [vmem:[#allocation3 + $0x18] sm:$0xff]
        %v1906 = vld [vmem:[#allocation3 + $0x20] sm:$0xff]
        %v1907 = vld [vmem:[#allocation3 + $0x28] sm:$0xff]
        %v1908 = vld [vmem:[#allocation3 + $0x30] sm:$0xff]
        %v1909 = vld [vmem:[#allocation3 + $0x38] sm:$0xff]
        %v1910 = vld [vmem:[#allocation3 + $0x40] sm:$0xff]
        %v1911 = vld [vmem:[#allocation3 + $0x48] sm:$0xff]
        %v1912 = vld [vmem:[#allocation3 + $0x50] sm:$0xff]
        %s1913 = scalar_lea.vmem %s5, 512
        %v1914 = vld [vmem:[%s1913] sm:$0xff]
        %v1915 = vld [vmem:[%s1913 + $0x8] sm:$0xff]
        %v1916 = vld [vmem:[%s1913 + $0x10] sm:$0xff]
        %v1917 = vld [vmem:[%s1913 + $0x18] sm:$0xff]
        %v1918 = vld [vmem:[%s1913 + $0x20] sm:$0xff]
        %v1919 = vld [vmem:[%s1913 + $0x28] sm:$0xff]
        %v1920 = vld [vmem:[%s1913 + $0x30] sm:$0xff]
        %v1921 = vld [vmem:[%s1913 + $0x38] sm:$0xff]
        %v1922 = vld [vmem:[%s1913 + $0x40] sm:$0xff]
        %v1923 = vld [vmem:[%s1913 + $0x48] sm:$0xff]
        %v1924 = vld [vmem:[%s1913 + $0x50] sm:$0xff]
        %v1925 = vld [vmem:[%s1913 + $0x58] sm:$0xff]
        %v1926 = vld [vmem:[%s1913 + $0x60] sm:$0xff]
        %v1927 = vld [vmem:[%s1913 + $0x68] sm:$0xff]
        %v1928 = vld [vmem:[%s1913 + $0x70] sm:$0xff]
        %v1929 = vld [vmem:[%s1913 + $0x78] sm:$0xff]
        %v1930 = vld [vmem:[%s1913 + $0x80] sm:$0xff]
        %v1931 = vld [vmem:[%s1913 + $0x88] sm:$0xff]
        %v1932 = vld [vmem:[%s1913 + $0x90] sm:$0xff]
        %v1933 = vld [vmem:[%s1913 + $0x98] sm:$0xff]
        %v1934 = vld [vmem:[%s1913 + $0xa0] sm:$0xff]
        %v1935 = vld [vmem:[%s1913 + $0xa8] sm:$0xff]
        %v1936 = vld [vmem:[%s1913 + $0xb0] sm:$0xff]
        %v1937 = vld [vmem:[%s1913 + $0xb8] sm:$0xff]
        %v1938 = vld [vmem:[%s1913 + $0xc0] sm:$0xff]
        %v1939 = vld [vmem:[%s1913 + $0xc8] sm:$0xff]
        %v1940 = vld [vmem:[%s1913 + $0xd0] sm:$0xff]
        %v1941 = vld [vmem:[%s1913 + $0xd8] sm:$0xff]
        %v1942 = vld [vmem:[%s1913 + $0xe0] sm:$0xff]
        %v1943 = vld [vmem:[%s1913 + $0xe8] sm:$0xff]
        %v1944 = vld [vmem:[%s1913 + $0xf0] sm:$0xff]
        %v1945 = vld [vmem:[%s1913 + $0xf8] sm:$0xff]
        %1946 = vmatprep.subr.mxu0 %v1945
        %1947 = vmatpush1.msra.mxu0 %v1944
        %1948 = vmatprep.subr.mxu0 %v1943
        %1949 = vmatpush1.msra.mxu0 %v1942
        %1950 = vmatprep.subr.mxu0 %v1941
        %1951 = vmatpush1.msra.mxu0 %v1940
        %1952 = vmatprep.subr.mxu0 %v1939
        %1953 = vmatpush1.msra.mxu0 %v1938
        %1954 = vmatprep.subr.mxu0 %v1937
        %1955 = vmatpush1.msra.mxu0 %v1936
        %1956 = vmatprep.subr.mxu0 %v1935
        %1957 = vmatpush1.msra.mxu0 %v1934
        %1958 = vmatprep.subr.mxu0 %v1933
        %1959 = vmatpush1.msra.mxu0 %v1932
        %1960 = vmatprep.subr.mxu0 %v1931
        %1961 = vmatpush1.msra.mxu0 %v1930
        %1962 = vmatprep.subr.mxu0 %v1929
        %1963 = vmatpush1.msra.mxu0 %v1928
        %1964 = vmatprep.subr.mxu0 %v1927
        %1965 = vmatpush1.msra.mxu0 %v1926
        %1966 = vmatprep.subr.mxu0 %v1925
        %1967 = vmatpush1.msra.mxu0 %v1924
        %1968 = vmatprep.subr.mxu0 %v1923
        %1969 = vmatpush1.msra.mxu0 %v1922
        %1970 = vmatprep.subr.mxu0 %v1921
        %1971 = vmatpush1.msra.mxu0 %v1920
        %1972 = vmatprep.subr.mxu0 %v1919
        %1973 = vmatpush1.msra.mxu0 %v1918
        %1974 = vmatprep.subr.mxu0 %v1917
        %1975 = vmatpush1.msra.mxu0 %v1916
        %1976 = vmatprep.subr.mxu0 %v1915
        %1977 = vmatpush1.msra.mxu0 %v1914
        %1978 = vmatprep.subr.mxu0 0.0
        %1979 = vmatpush2.msra.mxu0 0.0
        %1980 = vmatprep.subr.mxu0 0.0
        %1981 = vmatpush2.msra.mxu0 0.0
        %1982 = vmatprep.subr.mxu0 0.0
        %1983 = vmatpush2.msra.mxu0 0.0
        %1984 = vmatprep.subr.mxu0 0.0
        %1985 = vmatpush2.msra.mxu0 0.0
        %1986 = vmatprep.subr.mxu0 0.0
        %1987 = vmatpush2.msra.mxu0 0.0
        %1988 = vmatprep.subr.mxu0 0.0
        %1989 = vmatpush2.msra.mxu0 0.0
        %1990 = vmatprep.subr.mxu0 0.0
        %1991 = vmatpush2.msra.mxu0 0.0
        %1992 = vmatprep.subr.mxu0 0.0
        %1993 = vmatpush2.msra.mxu0 0.0
        %1994 = vmatprep.subr.mxu0 0.0
        %1995 = vmatpush2.msra.mxu0 0.0
        %1996 = vmatprep.subr.mxu0 0.0
        %1997 = vmatpush2.msra.mxu0 0.0
        %1998 = vmatprep.subr.mxu0 0.0
        %1999 = vmatpush2.msra.mxu0 0.0
        %2000 = vmatprep.subr.mxu0 0.0
        %2001 = vmatpush2.msra.mxu0 0.0
        %2002 = vmatprep.subr.mxu0 0.0
        %2003 = vmatpush2.msra.mxu0 0.0
        %2004 = vmatprep.subr.mxu0 0.0
        %2005 = vmatpush2.msra.mxu0 0.0
        %2006 = vmatprep.subr.mxu0 0.0
        %2007 = vmatpush2.msra.mxu0 0.0
        %2008 = vmatprep.subr.mxu0 0.0
        %2009 = vmatpush2.msra.mxu0 0.0
        %2010 = vmatprep.mubr.f32.mxu0 0.0
        %2011 = vmatmul.mubr.f32.gmra.mxu0 %v1904
        %v2012 = vpop.f32.mrf.mxu0
        %v2013 = vadd.f32 0.0, %v2012
        %v2014 = vpop.f32.mrf.mxu0
        %v2015 = vadd.f32 0.0, %v2014
        %2016 = vmatprep.mubr.f32.mxu0 0.0
        %2017 = vmatmul.mubr.f32.gmra.mxu0 %v1905
        %v2018 = vpop.f32.mrf.mxu0
        %v2019 = vadd.f32 0.0, %v2018
        %v2020 = vpop.f32.mrf.mxu0
        %v2021 = vadd.f32 0.0, %v2020
        %2022 = vmatprep.mubr.f32.mxu0 0.0
        %2023 = vmatmul.mubr.f32.gmra.mxu0 %v1906
        %v2024 = vpop.f32.mrf.mxu0
        %v2025 = vadd.f32 0.0, %v2024
        %v2026 = vpop.f32.mrf.mxu0
        %v2027 = vadd.f32 0.0, %v2026
        %2028 = vmatprep.mubr.f32.mxu0 0.0
        %2029 = vmatmul.mubr.f32.gmra.mxu0 %v1907
        %v2030 = vpop.f32.mrf.mxu0
        %v2031 = vadd.f32 0.0, %v2030
        %v2032 = vpop.f32.mrf.mxu0
        %v2033 = vadd.f32 0.0, %v2032
        %2034 = vmatprep.mubr.f32.mxu0 0.0
        %2035 = vmatmul.mubr.f32.gmra.mxu0 %v1908
        %v2036 = vpop.f32.mrf.mxu0
        %v2037 = vadd.f32 0.0, %v2036
        %v2038 = vpop.f32.mrf.mxu0
        %v2039 = vadd.f32 0.0, %v2038
        %2040 = vmatprep.mubr.f32.mxu0 0.0
        %2041 = vmatmul.mubr.f32.gmra.mxu0 %v1909
        %v2042 = vpop.f32.mrf.mxu0
        %v2043 = vadd.f32 0.0, %v2042
        %v2044 = vpop.f32.mrf.mxu0
        %v2045 = vadd.f32 0.0, %v2044
        %2046 = vmatprep.mubr.f32.mxu0 0.0
        %2047 = vmatmul.mubr.f32.gmra.mxu0 %v1910
        %v2048 = vpop.f32.mrf.mxu0
        %v2049 = vadd.f32 0.0, %v2048
        %v2050 = vpop.f32.mrf.mxu0
        %v2051 = vadd.f32 0.0, %v2050
        %2052 = vmatprep.mubr.f32.mxu0 0.0
        %2053 = vmatmul.mubr.f32.gmra.mxu0 %v1911
        %v2054 = vpop.f32.mrf.mxu0
        %v2055 = vadd.f32 0.0, %v2054
        %v2056 = vpop.f32.mrf.mxu0
        %v2057 = vadd.f32 0.0, %v2056
        %2058 = vmatprep.mubr.f32.mxu0 0.0
        %2059 = vmatmul.mubr.f32.gmra.mxu0 %v1912
        %v2060 = vpop.f32.mrf.mxu0
        %v2061 = vadd.f32 0.0, %v2060
        %v2062 = vpop.f32.mrf.mxu0
        %v2063 = vadd.f32 0.0, %v2062
        %2064 = vdwg.mxu0
        %v2065 = vadd.f32 %v1852, %v2013
        %v2066 = vadd.f32 %v1854, %v2015
        %v2067 = vadd.f32 %v1858, %v2019
        %v2068 = vadd.f32 %v1860, %v2021
        %v2069 = vadd.f32 %v1864, %v2025
        %v2070 = vadd.f32 %v1866, %v2027
        %v2071 = vadd.f32 %v1870, %v2031
        %v2072 = vadd.f32 %v1872, %v2033
        %v2073 = vadd.f32 %v1876, %v2037
        %v2074 = vadd.f32 %v1878, %v2039
        %v2075 = vadd.f32 %v1882, %v2043
        %v2076 = vadd.f32 %v1884, %v2045
        %v2077 = vadd.f32 %v1888, %v2049
        %v2078 = vadd.f32 %v1890, %v2051
        %v2079 = vadd.f32 %v1894, %v2055
        %v2080 = vadd.f32 %v1896, %v2057
        %v2081 = vadd.f32 %v1900, %v2061
        %v2082 = vadd.f32 %v1902, %v2063
        %v2083 = vld [vmem:[#allocation14] sm:$0x3]
        %v2085 = vlaneseq
        %v2086 = vshrl.u32 %v2085, 7
        %v2087 = vsub.s32 0, %v2086
        %v2088 = vrot.slane %v2083, %v2087
        %v2089 = vlaneseq
        %v2090 = vshrl.u32 %v2089, 7
        %v2091 = vsub.s32 1, %v2090
        %v2092 = vrot.slane %v2083, %v2091
        %v2095 = vadd.f32 %v2065, %v2088
        %v2096 = vadd.f32 %v2066, %v2092
        %v2097 = vadd.f32 %v2067, %v2088
        %v2098 = vadd.f32 %v2068, %v2092
        %v2099 = vadd.f32 %v2069, %v2088
        %v2100 = vadd.f32 %v2070, %v2092
        %v2101 = vadd.f32 %v2071, %v2088
        %v2102 = vadd.f32 %v2072, %v2092
        %v2103 = vadd.f32 %v2073, %v2088
        %v2104 = vadd.f32 %v2074, %v2092
        %v2105 = vadd.f32 %v2075, %v2088
        %v2106 = vadd.f32 %v2076, %v2092
        %v2107 = vadd.f32 %v2077, %v2088
        %v2108 = vadd.f32 %v2078, %v2092
        %v2109 = vadd.f32 %v2079, %v2088
        %v2110 = vadd.f32 %v2080, %v2092
        %v2111 = vadd.f32 %v2081, %v2088
        %v2112 = vadd.f32 %v2082, %v2092
        %v2113 = vmax.f32 %v2095, 0.0
        %v2114 = vmax.f32 %v2096, 0.0
        %v2115 = vmax.f32 %v2097, 0.0
        %v2116 = vmax.f32 %v2098, 0.0
        %v2117 = vmax.f32 %v2099, 0.0
        %v2118 = vmax.f32 %v2100, 0.0
        %v2119 = vmax.f32 %v2101, 0.0
        %v2120 = vmax.f32 %v2102, 0.0
        %v2121 = vmax.f32 %v2103, 0.0
        %v2122 = vmax.f32 %v2104, 0.0
        %v2123 = vmax.f32 %v2105, 0.0
        %v2124 = vmax.f32 %v2106, 0.0
        %v2125 = vmax.f32 %v2107, 0.0
        %v2126 = vmax.f32 %v2108, 0.0
        %v2127 = vmax.f32 %v2109, 0.0
        %v2128 = vmax.f32 %v2110, 0.0
        %v2129 = vmax.f32 %v2111, 0.0
        %v2130 = vmax.f32 %v2112, 0.0
        %2131 = vst [vmem:[#allocation4] sm:$0xff] %v2113
        %2132 = vst [vmem:[#allocation4 + $0x8] sm:$0xff] %v2114
        %2133 = vst [vmem:[#allocation4 + $0x10] sm:$0xff] %v2115
        %2134 = vst [vmem:[#allocation4 + $0x18] sm:$0xff] %v2116
        %2135 = vst [vmem:[#allocation4 + $0x20] sm:$0xff] %v2117
        %2136 = vst [vmem:[#allocation4 + $0x28] sm:$0xff] %v2118
        %2137 = vst [vmem:[#allocation4 + $0x30] sm:$0xff] %v2119
        %2138 = vst [vmem:[#allocation4 + $0x38] sm:$0xff] %v2120
        %2139 = vst [vmem:[#allocation4 + $0x40] sm:$0xff] %v2121
        %2140 = vst [vmem:[#allocation4 + $0x48] sm:$0xff] %v2122
        %2141 = vst [vmem:[#allocation4 + $0x50] sm:$0xff] %v2123
        %2142 = vst [vmem:[#allocation4 + $0x58] sm:$0xff] %v2124
        %2143 = vst [vmem:[#allocation4 + $0x60] sm:$0xff] %v2125
        %2144 = vst [vmem:[#allocation4 + $0x68] sm:$0xff] %v2126
        %2145 = vst [vmem:[#allocation4 + $0x70] sm:$0xff] %v2127
        %2146 = vst [vmem:[#allocation4 + $0x78] sm:$0xff] %v2128
        %2147 = vst [vmem:[#allocation4 + $0x80] sm:$0xff] %v2129
        %2148 = vst [vmem:[#allocation4 + $0x88] sm:$0xff] %v2130
        %v2149 = vld [vmem:[#allocation4] sm:$0xff]
        %v2150 = vld [vmem:[#allocation4 + $0x8] sm:$0xff]
        %v2151 = vld [vmem:[#allocation4 + $0x10] sm:$0xff]
        %v2152 = vld [vmem:[#allocation4 + $0x18] sm:$0xff]
        %v2153 = vld [vmem:[#allocation4 + $0x20] sm:$0xff]
        %v2154 = vld [vmem:[#allocation4 + $0x28] sm:$0xff]
        %v2155 = vld [vmem:[#allocation4 + $0x30] sm:$0xff]
        %v2156 = vld [vmem:[#allocation4 + $0x38] sm:$0xff]
        %v2157 = vld [vmem:[#allocation4 + $0x40] sm:$0xff]
        %v2158 = vld [vmem:[#allocation4 + $0x48] sm:$0xff]
        %v2159 = vld [vmem:[#allocation4 + $0x50] sm:$0xff]
        %v2160 = vld [vmem:[#allocation4 + $0x58] sm:$0xff]
        %v2161 = vld [vmem:[#allocation4 + $0x60] sm:$0xff]
        %v2162 = vld [vmem:[#allocation4 + $0x68] sm:$0xff]
        %v2163 = vld [vmem:[%s7] sm:$0xff]
        %v2164 = vld [vmem:[%s7 + $0x8] sm:$0xff]
        %v2165 = vld [vmem:[%s7 + $0x10] sm:$0xff]
        %v2166 = vld [vmem:[%s7 + $0x18] sm:$0xff]
        %v2167 = vld [vmem:[%s7 + $0x20] sm:$0xff]
        %v2168 = vld [vmem:[%s7 + $0x28] sm:$0xff]
        %v2169 = vld [vmem:[%s7 + $0x30] sm:$0xff]
        %v2170 = vld [vmem:[%s7 + $0x38] sm:$0xff]
        %v2171 = vld [vmem:[%s7 + $0x40] sm:$0xff]
        %v2172 = vld [vmem:[%s7 + $0x48] sm:$0xff]
        %v2173 = vld [vmem:[%s7 + $0x50] sm:$0xff]
        %v2174 = vld [vmem:[%s7 + $0x58] sm:$0xff]
        %v2175 = vld [vmem:[%s7 + $0x60] sm:$0xff]
        %v2176 = vld [vmem:[%s7 + $0x68] sm:$0xff]
        %v2177 = vld [vmem:[%s7 + $0x70] sm:$0xff]
        %v2178 = vld [vmem:[%s7 + $0x78] sm:$0xff]
        %v2179 = vld [vmem:[%s7 + $0x80] sm:$0xff]
        %v2180 = vld [vmem:[%s7 + $0x88] sm:$0xff]
        %v2181 = vld [vmem:[%s7 + $0x90] sm:$0xff]
        %v2182 = vld [vmem:[%s7 + $0x98] sm:$0xff]
        %v2183 = vld [vmem:[%s7 + $0xa0] sm:$0xff]
        %v2184 = vld [vmem:[%s7 + $0xa8] sm:$0xff]
        %v2185 = vld [vmem:[%s7 + $0xb0] sm:$0xff]
        %v2186 = vld [vmem:[%s7 + $0xb8] sm:$0xff]
        %v2187 = vld [vmem:[%s7 + $0xc0] sm:$0xff]
        %v2188 = vld [vmem:[%s7 + $0xc8] sm:$0xff]
        %v2189 = vld [vmem:[%s7 + $0xd0] sm:$0xff]
        %v2190 = vld [vmem:[%s7 + $0xd8] sm:$0xff]
        %v2191 = vld [vmem:[%s7 + $0xe0] sm:$0xff]
        %v2192 = vld [vmem:[%s7 + $0xe8] sm:$0xff]
        %v2193 = vld [vmem:[%s7 + $0xf0] sm:$0xff]
        %v2194 = vld [vmem:[%s7 + $0xf8] sm:$0xff]
        %v2195 = vld [vmem:[%s7 + $0x100] sm:$0xff]
        %v2196 = vld [vmem:[%s7 + $0x108] sm:$0xff]
        %v2197 = vld [vmem:[%s7 + $0x110] sm:$0xff]
        %v2198 = vld [vmem:[%s7 + $0x118] sm:$0xff]
        %v2199 = vld [vmem:[%s7 + $0x120] sm:$0xff]
        %v2200 = vld [vmem:[%s7 + $0x128] sm:$0xff]
        %v2201 = vld [vmem:[%s7 + $0x130] sm:$0xff]
        %v2202 = vld [vmem:[%s7 + $0x138] sm:$0xff]
        %v2203 = vld [vmem:[%s7 + $0x140] sm:$0xff]
        %v2204 = vld [vmem:[%s7 + $0x148] sm:$0xff]
        %v2205 = vld [vmem:[%s7 + $0x150] sm:$0xff]
        %v2206 = vld [vmem:[%s7 + $0x158] sm:$0xff]
        %v2207 = vld [vmem:[%s7 + $0x160] sm:$0xff]
        %v2208 = vld [vmem:[%s7 + $0x168] sm:$0xff]
        %v2209 = vld [vmem:[%s7 + $0x170] sm:$0xff]
        %v2210 = vld [vmem:[%s7 + $0x178] sm:$0xff]
        %v2211 = vld [vmem:[%s7 + $0x180] sm:$0xff]
        %v2212 = vld [vmem:[%s7 + $0x188] sm:$0xff]
        %v2213 = vld [vmem:[%s7 + $0x190] sm:$0xff]
        %v2214 = vld [vmem:[%s7 + $0x198] sm:$0xff]
        %v2215 = vld [vmem:[%s7 + $0x1a0] sm:$0xff]
        %v2216 = vld [vmem:[%s7 + $0x1a8] sm:$0xff]
        %v2217 = vld [vmem:[%s7 + $0x1b0] sm:$0xff]
        %v2218 = vld [vmem:[%s7 + $0x1b8] sm:$0xff]
        %v2219 = vld [vmem:[%s7 + $0x1c0] sm:$0xff]
        %v2220 = vld [vmem:[%s7 + $0x1c8] sm:$0xff]
        %v2221 = vld [vmem:[%s7 + $0x1d0] sm:$0xff]
        %v2222 = vld [vmem:[%s7 + $0x1d8] sm:$0xff]
        %v2223 = vld [vmem:[%s7 + $0x1e0] sm:$0xff]
        %v2224 = vld [vmem:[%s7 + $0x1e8] sm:$0xff]
        %v2225 = vld [vmem:[%s7 + $0x1f0] sm:$0xff]
        %v2226 = vld [vmem:[%s7 + $0x1f8] sm:$0xff]
        %v2227 = vld [vmem:[#allocation4 + $0x70] sm:$0xff]
        %v2228 = vld [vmem:[#allocation4 + $0x78] sm:$0xff]
        %s2229 = scalar_lea.vmem %s7, 512
        %v2230 = vld [vmem:[%s2229] sm:$0xff]
        %v2231 = vld [vmem:[%s2229 + $0x8] sm:$0xff]
        %v2232 = vld [vmem:[%s2229 + $0x10] sm:$0xff]
        %v2233 = vld [vmem:[%s2229 + $0x18] sm:$0xff]
        %v2234 = vld [vmem:[%s2229 + $0x20] sm:$0xff]
        %v2235 = vld [vmem:[%s2229 + $0x28] sm:$0xff]
        %v2236 = vld [vmem:[%s2229 + $0x30] sm:$0xff]
        %v2237 = vld [vmem:[%s2229 + $0x38] sm:$0xff]
        %v2238 = vld [vmem:[%s2229 + $0x40] sm:$0xff]
        %v2239 = vld [vmem:[%s2229 + $0x48] sm:$0xff]
        %v2240 = vld [vmem:[%s2229 + $0x50] sm:$0xff]
        %v2241 = vld [vmem:[%s2229 + $0x58] sm:$0xff]
        %v2242 = vld [vmem:[%s2229 + $0x60] sm:$0xff]
        %v2243 = vld [vmem:[%s2229 + $0x68] sm:$0xff]
        %v2244 = vld [vmem:[%s2229 + $0x70] sm:$0xff]
        %v2245 = vld [vmem:[%s2229 + $0x78] sm:$0xff]
        %v2246 = vld [vmem:[%s2229 + $0x80] sm:$0xff]
        %v2247 = vld [vmem:[%s2229 + $0x88] sm:$0xff]
        %v2248 = vld [vmem:[%s2229 + $0x90] sm:$0xff]
        %v2249 = vld [vmem:[%s2229 + $0x98] sm:$0xff]
        %v2250 = vld [vmem:[%s2229 + $0xa0] sm:$0xff]
        %v2251 = vld [vmem:[%s2229 + $0xa8] sm:$0xff]
        %v2252 = vld [vmem:[%s2229 + $0xb0] sm:$0xff]
        %v2253 = vld [vmem:[%s2229 + $0xb8] sm:$0xff]
        %v2254 = vld [vmem:[%s2229 + $0xc0] sm:$0xff]
        %v2255 = vld [vmem:[%s2229 + $0xc8] sm:$0xff]
        %v2256 = vld [vmem:[%s2229 + $0xd0] sm:$0xff]
        %v2257 = vld [vmem:[%s2229 + $0xd8] sm:$0xff]
        %v2258 = vld [vmem:[%s2229 + $0xe0] sm:$0xff]
        %v2259 = vld [vmem:[%s2229 + $0xe8] sm:$0xff]
        %v2260 = vld [vmem:[%s2229 + $0xf0] sm:$0xff]
        %v2261 = vld [vmem:[%s2229 + $0xf8] sm:$0xff]
        %v2262 = vld [vmem:[%s2229 + $0x100] sm:$0xff]
        %v2263 = vld [vmem:[%s2229 + $0x108] sm:$0xff]
        %v2264 = vld [vmem:[%s2229 + $0x110] sm:$0xff]
        %v2265 = vld [vmem:[%s2229 + $0x118] sm:$0xff]
        %v2266 = vld [vmem:[%s2229 + $0x120] sm:$0xff]
        %v2267 = vld [vmem:[%s2229 + $0x128] sm:$0xff]
        %v2268 = vld [vmem:[%s2229 + $0x130] sm:$0xff]
        %v2269 = vld [vmem:[%s2229 + $0x138] sm:$0xff]
        %v2270 = vld [vmem:[%s2229 + $0x140] sm:$0xff]
        %v2271 = vld [vmem:[%s2229 + $0x148] sm:$0xff]
        %v2272 = vld [vmem:[%s2229 + $0x150] sm:$0xff]
        %v2273 = vld [vmem:[%s2229 + $0x158] sm:$0xff]
        %v2274 = vld [vmem:[%s2229 + $0x160] sm:$0xff]
        %v2275 = vld [vmem:[%s2229 + $0x168] sm:$0xff]
        %v2276 = vld [vmem:[%s2229 + $0x170] sm:$0xff]
        %v2277 = vld [vmem:[%s2229 + $0x178] sm:$0xff]
        %v2278 = vld [vmem:[%s2229 + $0x180] sm:$0xff]
        %v2279 = vld [vmem:[%s2229 + $0x188] sm:$0xff]
        %v2280 = vld [vmem:[%s2229 + $0x190] sm:$0xff]
        %v2281 = vld [vmem:[%s2229 + $0x198] sm:$0xff]
        %v2282 = vld [vmem:[%s2229 + $0x1a0] sm:$0xff]
        %v2283 = vld [vmem:[%s2229 + $0x1a8] sm:$0xff]
        %v2284 = vld [vmem:[%s2229 + $0x1b0] sm:$0xff]
        %v2285 = vld [vmem:[%s2229 + $0x1b8] sm:$0xff]
        %v2286 = vld [vmem:[%s2229 + $0x1c0] sm:$0xff]
        %v2287 = vld [vmem:[%s2229 + $0x1c8] sm:$0xff]
        %v2288 = vld [vmem:[%s2229 + $0x1d0] sm:$0xff]
        %v2289 = vld [vmem:[%s2229 + $0x1d8] sm:$0xff]
        %v2290 = vld [vmem:[%s2229 + $0x1e0] sm:$0xff]
        %v2291 = vld [vmem:[%s2229 + $0x1e8] sm:$0xff]
        %v2292 = vld [vmem:[%s2229 + $0x1f0] sm:$0xff]
        %v2293 = vld [vmem:[%s2229 + $0x1f8] sm:$0xff]
        %2294 = vmatprep.subr.mxu0 %v2261
        %2295 = vmatpush1.msra.mxu0 %v2260
        %2296 = vmatprep.subr.mxu0 %v2259
        %2297 = vmatpush1.msra.mxu0 %v2258
        %2298 = vmatprep.subr.mxu0 %v2257
        %2299 = vmatpush1.msra.mxu0 %v2256
        %2300 = vmatprep.subr.mxu0 %v2255
        %2301 = vmatpush1.msra.mxu0 %v2254
        %2302 = vmatprep.subr.mxu0 %v2253
        %2303 = vmatpush1.msra.mxu0 %v2252
        %2304 = vmatprep.subr.mxu0 %v2251
        %2305 = vmatpush1.msra.mxu0 %v2250
        %2306 = vmatprep.subr.mxu0 %v2249
        %2307 = vmatpush1.msra.mxu0 %v2248
        %2308 = vmatprep.subr.mxu0 %v2247
        %2309 = vmatpush1.msra.mxu0 %v2246
        %2310 = vmatprep.subr.mxu0 %v2245
        %2311 = vmatpush1.msra.mxu0 %v2244
        %2312 = vmatprep.subr.mxu0 %v2243
        %2313 = vmatpush1.msra.mxu0 %v2242
        %2314 = vmatprep.subr.mxu0 %v2241
        %2315 = vmatpush1.msra.mxu0 %v2240
        %2316 = vmatprep.subr.mxu0 %v2239
        %2317 = vmatpush1.msra.mxu0 %v2238
        %2318 = vmatprep.subr.mxu0 %v2237
        %2319 = vmatpush1.msra.mxu0 %v2236
        %2320 = vmatprep.subr.mxu0 %v2235
        %2321 = vmatpush1.msra.mxu0 %v2234
        %2322 = vmatprep.subr.mxu0 %v2233
        %2323 = vmatpush1.msra.mxu0 %v2232
        %2324 = vmatprep.subr.mxu0 %v2231
        %2325 = vmatpush1.msra.mxu0 %v2230
        %2326 = vmatprep.subr.mxu0 %v2293
        %2327 = vmatpush2.msra.mxu0 %v2292
        %2328 = vmatprep.subr.mxu0 %v2291
        %2329 = vmatpush2.msra.mxu0 %v2290
        %2330 = vmatprep.subr.mxu0 %v2289
        %2331 = vmatpush2.msra.mxu0 %v2288
        %2332 = vmatprep.subr.mxu0 %v2287
        %2333 = vmatpush2.msra.mxu0 %v2286
        %2334 = vmatprep.subr.mxu0 %v2285
        %2335 = vmatpush2.msra.mxu0 %v2284
        %2336 = vmatprep.subr.mxu0 %v2283
        %2337 = vmatpush2.msra.mxu0 %v2282
        %2338 = vmatprep.subr.mxu0 %v2281
        %2339 = vmatpush2.msra.mxu0 %v2280
        %2340 = vmatprep.subr.mxu0 %v2279
        %2341 = vmatpush2.msra.mxu0 %v2278
        %2342 = vmatprep.subr.mxu0 %v2277
        %2343 = vmatpush2.msra.mxu0 %v2276
        %2344 = vmatprep.subr.mxu0 %v2275
        %2345 = vmatpush2.msra.mxu0 %v2274
        %2346 = vmatprep.subr.mxu0 %v2273
        %2347 = vmatpush2.msra.mxu0 %v2272
        %2348 = vmatprep.subr.mxu0 %v2271
        %2349 = vmatpush2.msra.mxu0 %v2270
        %2350 = vmatprep.subr.mxu0 %v2269
        %2351 = vmatpush2.msra.mxu0 %v2268
        %2352 = vmatprep.subr.mxu0 %v2267
        %2353 = vmatpush2.msra.mxu0 %v2266
        %2354 = vmatprep.subr.mxu0 %v2265
        %2355 = vmatpush2.msra.mxu0 %v2264
        %2356 = vmatprep.subr.mxu0 %v2263
        %2357 = vmatpush2.msra.mxu0 %v2262
        %2358 = vmatprep.mubr.f32.mxu0 %v2152
        %2359 = vmatmul.mubr.f32.gmra.mxu0 %v2151
        %v2360 = vpop.f32.mrf.mxu0
        %v2361 = vadd.f32 0.0, %v2360
        %v2362 = vpop.f32.mrf.mxu0
        %v2363 = vadd.f32 0.0, %v2362
        %2364 = vmatprep.mubr.f32.mxu0 %v2154
        %2365 = vmatmul.mubr.f32.gmra.mxu0 %v2153
        %v2366 = vpop.f32.mrf.mxu0
        %v2367 = vadd.f32 0.0, %v2366
        %v2368 = vpop.f32.mrf.mxu0
        %v2369 = vadd.f32 0.0, %v2368
        %2370 = vmatprep.mubr.f32.mxu0 %v2156
        %2371 = vmatmul.mubr.f32.gmra.mxu0 %v2155
        %v2372 = vpop.f32.mrf.mxu0
        %v2373 = vadd.f32 0.0, %v2372
        %v2374 = vpop.f32.mrf.mxu0
        %v2375 = vadd.f32 0.0, %v2374
        %2376 = vmatprep.mubr.f32.mxu0 %v2158
        %2377 = vmatmul.mubr.f32.gmra.mxu0 %v2157
        %v2378 = vpop.f32.mrf.mxu0
        %v2379 = vadd.f32 0.0, %v2378
        %v2380 = vpop.f32.mrf.mxu0
        %v2381 = vadd.f32 0.0, %v2380
        %2382 = vmatprep.mubr.f32.mxu0 %v2160
        %2383 = vmatmul.mubr.f32.gmra.mxu0 %v2159
        %v2384 = vpop.f32.mrf.mxu0
        %v2385 = vadd.f32 0.0, %v2384
        %v2386 = vpop.f32.mrf.mxu0
        %v2387 = vadd.f32 0.0, %v2386
        %2388 = vmatprep.mubr.f32.mxu0 %v2162
        %2389 = vmatmul.mubr.f32.gmra.mxu0 %v2161
        %v2390 = vpop.f32.mrf.mxu0
        %v2391 = vadd.f32 0.0, %v2390
        %v2392 = vpop.f32.mrf.mxu0
        %v2393 = vadd.f32 0.0, %v2392
        %2394 = vmatprep.mubr.f32.mxu0 %v2228
        %2395 = vmatmul.mubr.f32.gmra.mxu0 %v2227
        %v2396 = vpop.f32.mrf.mxu0
        %v2397 = vadd.f32 0.0, %v2396
        %v2398 = vpop.f32.mrf.mxu0
        %v2399 = vadd.f32 0.0, %v2398
        %2400 = vdwg.mxu0
        %2401 = vmatprep.subr.mxu0 %v2194
        %2402 = vmatpush1.msra.mxu0 %v2193
        %2403 = vmatprep.subr.mxu0 %v2192
        %2404 = vmatpush1.msra.mxu0 %v2191
        %2405 = vmatprep.subr.mxu0 %v2190
        %2406 = vmatpush1.msra.mxu0 %v2189
        %2407 = vmatprep.subr.mxu0 %v2188
        %2408 = vmatpush1.msra.mxu0 %v2187
        %2409 = vmatprep.subr.mxu0 %v2186
        %2410 = vmatpush1.msra.mxu0 %v2185
        %2411 = vmatprep.subr.mxu0 %v2184
        %2412 = vmatpush1.msra.mxu0 %v2183
        %2413 = vmatprep.subr.mxu0 %v2182
        %2414 = vmatpush1.msra.mxu0 %v2181
        %2415 = vmatprep.subr.mxu0 %v2180
        %2416 = vmatpush1.msra.mxu0 %v2179
        %2417 = vmatprep.subr.mxu0 %v2178
        %2418 = vmatpush1.msra.mxu0 %v2177
        %2419 = vmatprep.subr.mxu0 %v2176
        %2420 = vmatpush1.msra.mxu0 %v2175
        %2421 = vmatprep.subr.mxu0 %v2174
        %2422 = vmatpush1.msra.mxu0 %v2173
        %2423 = vmatprep.subr.mxu0 %v2172
        %2424 = vmatpush1.msra.mxu0 %v2171
        %2425 = vmatprep.subr.mxu0 %v2170
        %2426 = vmatpush1.msra.mxu0 %v2169
        %2427 = vmatprep.subr.mxu0 %v2168
        %2428 = vmatpush1.msra.mxu0 %v2167
        %2429 = vmatprep.subr.mxu0 %v2166
        %2430 = vmatpush1.msra.mxu0 %v2165
        %2431 = vmatprep.subr.mxu0 %v2164
        %2432 = vmatpush1.msra.mxu0 %v2163
        %2433 = vmatprep.subr.mxu0 %v2226
        %2434 = vmatpush2.msra.mxu0 %v2225
        %2435 = vmatprep.subr.mxu0 %v2224
        %2436 = vmatpush2.msra.mxu0 %v2223
        %2437 = vmatprep.subr.mxu0 %v2222
        %2438 = vmatpush2.msra.mxu0 %v2221
        %2439 = vmatprep.subr.mxu0 %v2220
        %2440 = vmatpush2.msra.mxu0 %v2219
        %2441 = vmatprep.subr.mxu0 %v2218
        %2442 = vmatpush2.msra.mxu0 %v2217
        %2443 = vmatprep.subr.mxu0 %v2216
        %2444 = vmatpush2.msra.mxu0 %v2215
        %2445 = vmatprep.subr.mxu0 %v2214
        %2446 = vmatpush2.msra.mxu0 %v2213
        %2447 = vmatprep.subr.mxu0 %v2212
        %2448 = vmatpush2.msra.mxu0 %v2211
        %2449 = vmatprep.subr.mxu0 %v2210
        %2450 = vmatpush2.msra.mxu0 %v2209
        %2451 = vmatprep.subr.mxu0 %v2208
        %2452 = vmatpush2.msra.mxu0 %v2207
        %2453 = vmatprep.subr.mxu0 %v2206
        %2454 = vmatpush2.msra.mxu0 %v2205
        %2455 = vmatprep.subr.mxu0 %v2204
        %2456 = vmatpush2.msra.mxu0 %v2203
        %2457 = vmatprep.subr.mxu0 %v2202
        %2458 = vmatpush2.msra.mxu0 %v2201
        %2459 = vmatprep.subr.mxu0 %v2200
        %2460 = vmatpush2.msra.mxu0 %v2199
        %2461 = vmatprep.subr.mxu0 %v2198
        %2462 = vmatpush2.msra.mxu0 %v2197
        %2463 = vmatprep.subr.mxu0 %v2196
        %2464 = vmatpush2.msra.mxu0 %v2195
        %2465 = vmatprep.mubr.f32.mxu0 %v2150
        %2466 = vmatmul.mubr.f32.gmra.mxu0 %v2149
        %v2467 = vpop.f32.mrf.mxu0
        %v2468 = vadd.f32 %v2361, %v2467
        %v2469 = vpop.f32.mrf.mxu0
        %v2470 = vadd.f32 %v2363, %v2469
        %2471 = vmatprep.mubr.f32.mxu0 %v2152
        %2472 = vmatmul.mubr.f32.gmra.mxu0 %v2151
        %v2473 = vpop.f32.mrf.mxu0
        %v2474 = vadd.f32 %v2367, %v2473
        %v2475 = vpop.f32.mrf.mxu0
        %v2476 = vadd.f32 %v2369, %v2475
        %2477 = vmatprep.mubr.f32.mxu0 %v2154
        %2478 = vmatmul.mubr.f32.gmra.mxu0 %v2153
        %v2479 = vpop.f32.mrf.mxu0
        %v2480 = vadd.f32 %v2373, %v2479
        %v2481 = vpop.f32.mrf.mxu0
        %v2482 = vadd.f32 %v2375, %v2481
        %2483 = vmatprep.mubr.f32.mxu0 %v2156
        %2484 = vmatmul.mubr.f32.gmra.mxu0 %v2155
        %v2485 = vpop.f32.mrf.mxu0
        %v2486 = vadd.f32 %v2379, %v2485
        %v2487 = vpop.f32.mrf.mxu0
        %v2488 = vadd.f32 %v2381, %v2487
        %2489 = vmatprep.mubr.f32.mxu0 %v2158
        %2490 = vmatmul.mubr.f32.gmra.mxu0 %v2157
        %v2491 = vpop.f32.mrf.mxu0
        %v2492 = vadd.f32 %v2385, %v2491
        %v2493 = vpop.f32.mrf.mxu0
        %v2494 = vadd.f32 %v2387, %v2493
        %2495 = vmatprep.mubr.f32.mxu0 %v2160
        %2496 = vmatmul.mubr.f32.gmra.mxu0 %v2159
        %v2497 = vpop.f32.mrf.mxu0
        %v2498 = vadd.f32 %v2391, %v2497
        %v2499 = vpop.f32.mrf.mxu0
        %v2500 = vadd.f32 %v2393, %v2499
        %2501 = vmatprep.mubr.f32.mxu0 %v2162
        %2502 = vmatmul.mubr.f32.gmra.mxu0 %v2161
        %v2503 = vpop.f32.mrf.mxu0
        %v2504 = vadd.f32 %v2397, %v2503
        %v2505 = vpop.f32.mrf.mxu0
        %v2506 = vadd.f32 %v2399, %v2505
        %2507 = vdwg.mxu0
        %v2508 = vld [vmem:[#allocation4 + $0x20] sm:$0xff]
        %v2509 = vld [vmem:[#allocation4 + $0x28] sm:$0xff]
        %v2510 = vld [vmem:[#allocation4 + $0x30] sm:$0xff]
        %v2511 = vld [vmem:[#allocation4 + $0x38] sm:$0xff]
        %v2512 = vld [vmem:[#allocation4 + $0x40] sm:$0xff]
        %v2513 = vld [vmem:[#allocation4 + $0x48] sm:$0xff]
        %v2514 = vld [vmem:[#allocation4 + $0x50] sm:$0xff]
        %v2515 = vld [vmem:[#allocation4 + $0x58] sm:$0xff]
        %v2516 = vld [vmem:[#allocation4 + $0x60] sm:$0xff]
        %v2517 = vld [vmem:[#allocation4 + $0x68] sm:$0xff]
        %v2518 = vld [vmem:[#allocation4 + $0x70] sm:$0xff]
        %v2519 = vld [vmem:[#allocation4 + $0x78] sm:$0xff]
        %v2520 = vld [vmem:[#allocation4 + $0x80] sm:$0xff]
        %v2521 = vld [vmem:[#allocation4 + $0x88] sm:$0xff]
        %s2522 = scalar_lea.vmem %s7, 1024
        %v2523 = vld [vmem:[%s2522] sm:$0xff]
        %v2524 = vld [vmem:[%s2522 + $0x8] sm:$0xff]
        %v2525 = vld [vmem:[%s2522 + $0x10] sm:$0xff]
        %v2526 = vld [vmem:[%s2522 + $0x18] sm:$0xff]
        %v2527 = vld [vmem:[%s2522 + $0x20] sm:$0xff]
        %v2528 = vld [vmem:[%s2522 + $0x28] sm:$0xff]
        %v2529 = vld [vmem:[%s2522 + $0x30] sm:$0xff]
        %v2530 = vld [vmem:[%s2522 + $0x38] sm:$0xff]
        %v2531 = vld [vmem:[%s2522 + $0x40] sm:$0xff]
        %v2532 = vld [vmem:[%s2522 + $0x48] sm:$0xff]
        %v2533 = vld [vmem:[%s2522 + $0x50] sm:$0xff]
        %v2534 = vld [vmem:[%s2522 + $0x58] sm:$0xff]
        %v2535 = vld [vmem:[%s2522 + $0x60] sm:$0xff]
        %v2536 = vld [vmem:[%s2522 + $0x68] sm:$0xff]
        %v2537 = vld [vmem:[%s2522 + $0x70] sm:$0xff]
        %v2538 = vld [vmem:[%s2522 + $0x78] sm:$0xff]
        %v2539 = vld [vmem:[%s2522 + $0x80] sm:$0xff]
        %v2540 = vld [vmem:[%s2522 + $0x88] sm:$0xff]
        %v2541 = vld [vmem:[%s2522 + $0x90] sm:$0xff]
        %v2542 = vld [vmem:[%s2522 + $0x98] sm:$0xff]
        %v2543 = vld [vmem:[%s2522 + $0xa0] sm:$0xff]
        %v2544 = vld [vmem:[%s2522 + $0xa8] sm:$0xff]
        %v2545 = vld [vmem:[%s2522 + $0xb0] sm:$0xff]
        %v2546 = vld [vmem:[%s2522 + $0xb8] sm:$0xff]
        %v2547 = vld [vmem:[%s2522 + $0xc0] sm:$0xff]
        %v2548 = vld [vmem:[%s2522 + $0xc8] sm:$0xff]
        %v2549 = vld [vmem:[%s2522 + $0xd0] sm:$0xff]
        %v2550 = vld [vmem:[%s2522 + $0xd8] sm:$0xff]
        %v2551 = vld [vmem:[%s2522 + $0xe0] sm:$0xff]
        %v2552 = vld [vmem:[%s2522 + $0xe8] sm:$0xff]
        %v2553 = vld [vmem:[%s2522 + $0xf0] sm:$0xff]
        %v2554 = vld [vmem:[%s2522 + $0xf8] sm:$0xff]
        %v2555 = vld [vmem:[%s2522 + $0x100] sm:$0xff]
        %v2556 = vld [vmem:[%s2522 + $0x108] sm:$0xff]
        %v2557 = vld [vmem:[%s2522 + $0x110] sm:$0xff]
        %v2558 = vld [vmem:[%s2522 + $0x118] sm:$0xff]
        %v2559 = vld [vmem:[%s2522 + $0x120] sm:$0xff]
        %v2560 = vld [vmem:[%s2522 + $0x128] sm:$0xff]
        %v2561 = vld [vmem:[%s2522 + $0x130] sm:$0xff]
        %v2562 = vld [vmem:[%s2522 + $0x138] sm:$0xff]
        %v2563 = vld [vmem:[%s2522 + $0x140] sm:$0xff]
        %v2564 = vld [vmem:[%s2522 + $0x148] sm:$0xff]
        %v2565 = vld [vmem:[%s2522 + $0x150] sm:$0xff]
        %v2566 = vld [vmem:[%s2522 + $0x158] sm:$0xff]
        %v2567 = vld [vmem:[%s2522 + $0x160] sm:$0xff]
        %v2568 = vld [vmem:[%s2522 + $0x168] sm:$0xff]
        %v2569 = vld [vmem:[%s2522 + $0x170] sm:$0xff]
        %v2570 = vld [vmem:[%s2522 + $0x178] sm:$0xff]
        %v2571 = vld [vmem:[%s2522 + $0x180] sm:$0xff]
        %v2572 = vld [vmem:[%s2522 + $0x188] sm:$0xff]
        %v2573 = vld [vmem:[%s2522 + $0x190] sm:$0xff]
        %v2574 = vld [vmem:[%s2522 + $0x198] sm:$0xff]
        %v2575 = vld [vmem:[%s2522 + $0x1a0] sm:$0xff]
        %v2576 = vld [vmem:[%s2522 + $0x1a8] sm:$0xff]
        %v2577 = vld [vmem:[%s2522 + $0x1b0] sm:$0xff]
        %v2578 = vld [vmem:[%s2522 + $0x1b8] sm:$0xff]
        %v2579 = vld [vmem:[%s2522 + $0x1c0] sm:$0xff]
        %v2580 = vld [vmem:[%s2522 + $0x1c8] sm:$0xff]
        %v2581 = vld [vmem:[%s2522 + $0x1d0] sm:$0xff]
        %v2582 = vld [vmem:[%s2522 + $0x1d8] sm:$0xff]
        %v2583 = vld [vmem:[%s2522 + $0x1e0] sm:$0xff]
        %v2584 = vld [vmem:[%s2522 + $0x1e8] sm:$0xff]
        %v2585 = vld [vmem:[%s2522 + $0x1f0] sm:$0xff]
        %v2586 = vld [vmem:[%s2522 + $0x1f8] sm:$0xff]
        %2587 = vmatprep.subr.mxu0 %v2554
        %2588 = vmatpush1.msra.mxu0 %v2553
        %2589 = vmatprep.subr.mxu0 %v2552
        %2590 = vmatpush1.msra.mxu0 %v2551
        %2591 = vmatprep.subr.mxu0 %v2550
        %2592 = vmatpush1.msra.mxu0 %v2549
        %2593 = vmatprep.subr.mxu0 %v2548
        %2594 = vmatpush1.msra.mxu0 %v2547
        %2595 = vmatprep.subr.mxu0 %v2546
        %2596 = vmatpush1.msra.mxu0 %v2545
        %2597 = vmatprep.subr.mxu0 %v2544
        %2598 = vmatpush1.msra.mxu0 %v2543
        %2599 = vmatprep.subr.mxu0 %v2542
        %2600 = vmatpush1.msra.mxu0 %v2541
        %2601 = vmatprep.subr.mxu0 %v2540
        %2602 = vmatpush1.msra.mxu0 %v2539
        %2603 = vmatprep.subr.mxu0 %v2538
        %2604 = vmatpush1.msra.mxu0 %v2537
        %2605 = vmatprep.subr.mxu0 %v2536
        %2606 = vmatpush1.msra.mxu0 %v2535
        %2607 = vmatprep.subr.mxu0 %v2534
        %2608 = vmatpush1.msra.mxu0 %v2533
        %2609 = vmatprep.subr.mxu0 %v2532
        %2610 = vmatpush1.msra.mxu0 %v2531
        %2611 = vmatprep.subr.mxu0 %v2530
        %2612 = vmatpush1.msra.mxu0 %v2529
        %2613 = vmatprep.subr.mxu0 %v2528
        %2614 = vmatpush1.msra.mxu0 %v2527
        %2615 = vmatprep.subr.mxu0 %v2526
        %2616 = vmatpush1.msra.mxu0 %v2525
        %2617 = vmatprep.subr.mxu0 %v2524
        %2618 = vmatpush1.msra.mxu0 %v2523
        %2619 = vmatprep.subr.mxu0 %v2586
        %2620 = vmatpush2.msra.mxu0 %v2585
        %2621 = vmatprep.subr.mxu0 %v2584
        %2622 = vmatpush2.msra.mxu0 %v2583
        %2623 = vmatprep.subr.mxu0 %v2582
        %2624 = vmatpush2.msra.mxu0 %v2581
        %2625 = vmatprep.subr.mxu0 %v2580
        %2626 = vmatpush2.msra.mxu0 %v2579
        %2627 = vmatprep.subr.mxu0 %v2578
        %2628 = vmatpush2.msra.mxu0 %v2577
        %2629 = vmatprep.subr.mxu0 %v2576
        %2630 = vmatpush2.msra.mxu0 %v2575
        %2631 = vmatprep.subr.mxu0 %v2574
        %2632 = vmatpush2.msra.mxu0 %v2573
        %2633 = vmatprep.subr.mxu0 %v2572
        %2634 = vmatpush2.msra.mxu0 %v2571
        %2635 = vmatprep.subr.mxu0 %v2570
        %2636 = vmatpush2.msra.mxu0 %v2569
        %2637 = vmatprep.subr.mxu0 %v2568
        %2638 = vmatpush2.msra.mxu0 %v2567
        %2639 = vmatprep.subr.mxu0 %v2566
        %2640 = vmatpush2.msra.mxu0 %v2565
        %2641 = vmatprep.subr.mxu0 %v2564
        %2642 = vmatpush2.msra.mxu0 %v2563
        %2643 = vmatprep.subr.mxu0 %v2562
        %2644 = vmatpush2.msra.mxu0 %v2561
        %2645 = vmatprep.subr.mxu0 %v2560
        %2646 = vmatpush2.msra.mxu0 %v2559
        %2647 = vmatprep.subr.mxu0 %v2558
        %2648 = vmatpush2.msra.mxu0 %v2557
        %2649 = vmatprep.subr.mxu0 %v2556
        %2650 = vmatpush2.msra.mxu0 %v2555
        %2651 = vmatprep.mubr.f32.mxu0 %v2509
        %2652 = vmatmul.mubr.f32.gmra.mxu0 %v2508
        %v2653 = vpop.f32.mrf.mxu0
        %v2654 = vadd.f32 0.0, %v2653
        %v2655 = vpop.f32.mrf.mxu0
        %v2656 = vadd.f32 0.0, %v2655
        %2657 = vmatprep.mubr.f32.mxu0 %v2511
        %2658 = vmatmul.mubr.f32.gmra.mxu0 %v2510
        %v2659 = vpop.f32.mrf.mxu0
        %v2660 = vadd.f32 0.0, %v2659
        %v2661 = vpop.f32.mrf.mxu0
        %v2662 = vadd.f32 0.0, %v2661
        %2663 = vmatprep.mubr.f32.mxu0 %v2513
        %2664 = vmatmul.mubr.f32.gmra.mxu0 %v2512
        %v2665 = vpop.f32.mrf.mxu0
        %v2666 = vadd.f32 0.0, %v2665
        %v2667 = vpop.f32.mrf.mxu0
        %v2668 = vadd.f32 0.0, %v2667
        %2669 = vmatprep.mubr.f32.mxu0 %v2515
        %2670 = vmatmul.mubr.f32.gmra.mxu0 %v2514
        %v2671 = vpop.f32.mrf.mxu0
        %v2672 = vadd.f32 0.0, %v2671
        %v2673 = vpop.f32.mrf.mxu0
        %v2674 = vadd.f32 0.0, %v2673
        %2675 = vmatprep.mubr.f32.mxu0 %v2517
        %2676 = vmatmul.mubr.f32.gmra.mxu0 %v2516
        %v2677 = vpop.f32.mrf.mxu0
        %v2678 = vadd.f32 0.0, %v2677
        %v2679 = vpop.f32.mrf.mxu0
        %v2680 = vadd.f32 0.0, %v2679
        %2681 = vmatprep.mubr.f32.mxu0 %v2519
        %2682 = vmatmul.mubr.f32.gmra.mxu0 %v2518
        %v2683 = vpop.f32.mrf.mxu0
        %v2684 = vadd.f32 0.0, %v2683
        %v2685 = vpop.f32.mrf.mxu0
        %v2686 = vadd.f32 0.0, %v2685
        %2687 = vmatprep.mubr.f32.mxu0 %v2521
        %2688 = vmatmul.mubr.f32.gmra.mxu0 %v2520
        %v2689 = vpop.f32.mrf.mxu0
        %v2690 = vadd.f32 0.0, %v2689
        %v2691 = vpop.f32.mrf.mxu0
        %v2692 = vadd.f32 0.0, %v2691
        %2693 = vdwg.mxu0
        %v2694 = vadd.f32 %v2468, %v2654
        %v2695 = vadd.f32 %v2470, %v2656
        %v2696 = vadd.f32 %v2474, %v2660
        %v2697 = vadd.f32 %v2476, %v2662
        %v2698 = vadd.f32 %v2480, %v2666
        %v2699 = vadd.f32 %v2482, %v2668
        %v2700 = vadd.f32 %v2486, %v2672
        %v2701 = vadd.f32 %v2488, %v2674
        %v2702 = vadd.f32 %v2492, %v2678
        %v2703 = vadd.f32 %v2494, %v2680
        %v2704 = vadd.f32 %v2498, %v2684
        %v2705 = vadd.f32 %v2500, %v2686
        %v2706 = vadd.f32 %v2504, %v2690
        %v2707 = vadd.f32 %v2506, %v2692
        %v2708 = vld [vmem:[#allocation15] sm:$0x3]
        %v2710 = vlaneseq
        %v2711 = vshrl.u32 %v2710, 7
        %v2712 = vsub.s32 0, %v2711
        %v2713 = vrot.slane %v2708, %v2712
        %v2714 = vlaneseq
        %v2715 = vshrl.u32 %v2714, 7
        %v2716 = vsub.s32 1, %v2715
        %v2717 = vrot.slane %v2708, %v2716
        %v2720 = vadd.f32 %v2694, %v2713
        %v2721 = vadd.f32 %v2695, %v2717
        %v2722 = vadd.f32 %v2696, %v2713
        %v2723 = vadd.f32 %v2697, %v2717
        %v2724 = vadd.f32 %v2698, %v2713
        %v2725 = vadd.f32 %v2699, %v2717
        %v2726 = vadd.f32 %v2700, %v2713
        %v2727 = vadd.f32 %v2701, %v2717
        %v2728 = vadd.f32 %v2702, %v2713
        %v2729 = vadd.f32 %v2703, %v2717
        %v2730 = vadd.f32 %v2704, %v2713
        %v2731 = vadd.f32 %v2705, %v2717
        %v2732 = vadd.f32 %v2706, %v2713
        %v2733 = vadd.f32 %v2707, %v2717
        %v2734 = vmax.f32 %v2720, 0.0
        %v2735 = vmax.f32 %v2721, 0.0
        %v2736 = vmax.f32 %v2722, 0.0
        %v2737 = vmax.f32 %v2723, 0.0
        %v2738 = vmax.f32 %v2724, 0.0
        %v2739 = vmax.f32 %v2725, 0.0
        %v2740 = vmax.f32 %v2726, 0.0
        %v2741 = vmax.f32 %v2727, 0.0
        %v2742 = vmax.f32 %v2728, 0.0
        %v2743 = vmax.f32 %v2729, 0.0
        %v2744 = vmax.f32 %v2730, 0.0
        %v2745 = vmax.f32 %v2731, 0.0
        %v2746 = vmax.f32 %v2732, 0.0
        %v2747 = vmax.f32 %v2733, 0.0
        %2748 = vst [vmem:[#allocation5] sm:$0xff] %v2734
        %2749 = vst [vmem:[#allocation5 + $0x8] sm:$0xff] %v2735
        %2750 = vst [vmem:[#allocation5 + $0x10] sm:$0xff] %v2736
        %2751 = vst [vmem:[#allocation5 + $0x18] sm:$0xff] %v2737
        %2752 = vst [vmem:[#allocation5 + $0x20] sm:$0xff] %v2738
        %2753 = vst [vmem:[#allocation5 + $0x28] sm:$0xff] %v2739
        %2754 = vst [vmem:[#allocation5 + $0x30] sm:$0xff] %v2740
        %2755 = vst [vmem:[#allocation5 + $0x38] sm:$0xff] %v2741
        %2756 = vst [vmem:[#allocation5 + $0x40] sm:$0xff] %v2742
        %2757 = vst [vmem:[#allocation5 + $0x48] sm:$0xff] %v2743
        %2758 = vst [vmem:[#allocation5 + $0x50] sm:$0xff] %v2744
        %2759 = vst [vmem:[#allocation5 + $0x58] sm:$0xff] %v2745
        %2760 = vst [vmem:[#allocation5 + $0x60] sm:$0xff] %v2746
        %2761 = vst [vmem:[#allocation5 + $0x68] sm:$0xff] %v2747
        %v2762 = vld [vmem:[#allocation5] sm:$0xff]
        %v2763 = vld [vmem:[#allocation5 + $0x8] sm:$0xff]
        %v2764 = vld [vmem:[%s9] sm:$0xff]
        %v2765 = vld [vmem:[%s9 + $0x8] sm:$0xff]
        %v2766 = vld [vmem:[%s9 + $0x10] sm:$0xff]
        %v2767 = vld [vmem:[%s9 + $0x18] sm:$0xff]
        %v2768 = vld [vmem:[%s9 + $0x20] sm:$0xff]
        %v2769 = vld [vmem:[%s9 + $0x28] sm:$0xff]
        %v2770 = vld [vmem:[%s9 + $0x30] sm:$0xff]
        %v2771 = vld [vmem:[%s9 + $0x38] sm:$0xff]
        %v2772 = vld [vmem:[%s9 + $0x40] sm:$0xff]
        %v2773 = vld [vmem:[%s9 + $0x48] sm:$0xff]
        %v2774 = vld [vmem:[%s9 + $0x50] sm:$0xff]
        %v2775 = vld [vmem:[%s9 + $0x58] sm:$0xff]
        %v2776 = vld [vmem:[%s9 + $0x60] sm:$0xff]
        %v2777 = vld [vmem:[%s9 + $0x68] sm:$0xff]
        %v2778 = vld [vmem:[%s9 + $0x70] sm:$0xff]
        %v2779 = vld [vmem:[%s9 + $0x78] sm:$0xff]
        %v2780 = vld [vmem:[%s9 + $0x80] sm:$0xff]
        %v2781 = vld [vmem:[%s9 + $0x88] sm:$0xff]
        %v2782 = vld [vmem:[%s9 + $0x90] sm:$0xff]
        %v2783 = vld [vmem:[%s9 + $0x98] sm:$0xff]
        %v2784 = vld [vmem:[%s9 + $0xa0] sm:$0xff]
        %v2785 = vld [vmem:[%s9 + $0xa8] sm:$0xff]
        %v2786 = vld [vmem:[%s9 + $0xb0] sm:$0xff]
        %v2787 = vld [vmem:[%s9 + $0xb8] sm:$0xff]
        %v2788 = vld [vmem:[%s9 + $0xc0] sm:$0xff]
        %v2789 = vld [vmem:[%s9 + $0xc8] sm:$0xff]
        %v2790 = vld [vmem:[%s9 + $0xd0] sm:$0xff]
        %v2791 = vld [vmem:[%s9 + $0xd8] sm:$0xff]
        %v2792 = vld [vmem:[%s9 + $0xe0] sm:$0xff]
        %v2793 = vld [vmem:[%s9 + $0xe8] sm:$0xff]
        %v2794 = vld [vmem:[%s9 + $0xf0] sm:$0xff]
        %v2795 = vld [vmem:[%s9 + $0xf8] sm:$0xff]
        %v2796 = vld [vmem:[#allocation5 + $0x10] sm:$0xff]
        %v2797 = vld [vmem:[#allocation5 + $0x18] sm:$0xff]
        %s2798 = scalar_lea.vmem %s9, 256
        %v2799 = vld [vmem:[%s2798] sm:$0xff]
        %v2800 = vld [vmem:[%s2798 + $0x8] sm:$0xff]
        %v2801 = vld [vmem:[%s2798 + $0x10] sm:$0xff]
        %v2802 = vld [vmem:[%s2798 + $0x18] sm:$0xff]
        %v2803 = vld [vmem:[%s2798 + $0x20] sm:$0xff]
        %v2804 = vld [vmem:[%s2798 + $0x28] sm:$0xff]
        %v2805 = vld [vmem:[%s2798 + $0x30] sm:$0xff]
        %v2806 = vld [vmem:[%s2798 + $0x38] sm:$0xff]
        %v2807 = vld [vmem:[%s2798 + $0x40] sm:$0xff]
        %v2808 = vld [vmem:[%s2798 + $0x48] sm:$0xff]
        %v2809 = vld [vmem:[%s2798 + $0x50] sm:$0xff]
        %v2810 = vld [vmem:[%s2798 + $0x58] sm:$0xff]
        %v2811 = vld [vmem:[%s2798 + $0x60] sm:$0xff]
        %v2812 = vld [vmem:[%s2798 + $0x68] sm:$0xff]
        %v2813 = vld [vmem:[%s2798 + $0x70] sm:$0xff]
        %v2814 = vld [vmem:[%s2798 + $0x78] sm:$0xff]
        %v2815 = vld [vmem:[%s2798 + $0x80] sm:$0xff]
        %v2816 = vld [vmem:[%s2798 + $0x88] sm:$0xff]
        %v2817 = vld [vmem:[%s2798 + $0x90] sm:$0xff]
        %v2818 = vld [vmem:[%s2798 + $0x98] sm:$0xff]
        %v2819 = vld [vmem:[%s2798 + $0xa0] sm:$0xff]
        %v2820 = vld [vmem:[%s2798 + $0xa8] sm:$0xff]
        %v2821 = vld [vmem:[%s2798 + $0xb0] sm:$0xff]
        %v2822 = vld [vmem:[%s2798 + $0xb8] sm:$0xff]
        %v2823 = vld [vmem:[%s2798 + $0xc0] sm:$0xff]
        %v2824 = vld [vmem:[%s2798 + $0xc8] sm:$0xff]
        %v2825 = vld [vmem:[%s2798 + $0xd0] sm:$0xff]
        %v2826 = vld [vmem:[%s2798 + $0xd8] sm:$0xff]
        %v2827 = vld [vmem:[%s2798 + $0xe0] sm:$0xff]
        %v2828 = vld [vmem:[%s2798 + $0xe8] sm:$0xff]
        %v2829 = vld [vmem:[%s2798 + $0xf0] sm:$0xff]
        %v2830 = vld [vmem:[%s2798 + $0xf8] sm:$0xff]
        %2831 = vmatprep.subr.mxu0 0.0
        %2832 = vmatpush1.msra.mxu0 %v2814
        %2833 = vmatprep.subr.mxu0 0.0
        %2834 = vmatpush1.msra.mxu0 %v2813
        %2835 = vmatprep.subr.mxu0 0.0
        %2836 = vmatpush1.msra.mxu0 %v2812
        %2837 = vmatprep.subr.mxu0 0.0
        %2838 = vmatpush1.msra.mxu0 %v2811
        %2839 = vmatprep.subr.mxu0 0.0
        %2840 = vmatpush1.msra.mxu0 %v2810
        %2841 = vmatprep.subr.mxu0 0.0
        %2842 = vmatpush1.msra.mxu0 %v2809
        %2843 = vmatprep.subr.mxu0 0.0
        %2844 = vmatpush1.msra.mxu0 %v2808
        %2845 = vmatprep.subr.mxu0 0.0
        %2846 = vmatpush1.msra.mxu0 %v2807
        %2847 = vmatprep.subr.mxu0 0.0
        %2848 = vmatpush1.msra.mxu0 %v2806
        %2849 = vmatprep.subr.mxu0 0.0
        %2850 = vmatpush1.msra.mxu0 %v2805
        %2851 = vmatprep.subr.mxu0 0.0
        %2852 = vmatpush1.msra.mxu0 %v2804
        %2853 = vmatprep.subr.mxu0 0.0
        %2854 = vmatpush1.msra.mxu0 %v2803
        %2855 = vmatprep.subr.mxu0 0.0
        %2856 = vmatpush1.msra.mxu0 %v2802
        %2857 = vmatprep.subr.mxu0 0.0
        %2858 = vmatpush1.msra.mxu0 %v2801
        %2859 = vmatprep.subr.mxu0 0.0
        %2860 = vmatpush1.msra.mxu0 %v2800
        %2861 = vmatprep.subr.mxu0 0.0
        %2862 = vmatpush1.msra.mxu0 %v2799
        %2863 = vmatprep.subr.mxu0 0.0
        %2864 = vmatpush2.msra.mxu0 %v2830
        %2865 = vmatprep.subr.mxu0 0.0
        %2866 = vmatpush2.msra.mxu0 %v2829
        %2867 = vmatprep.subr.mxu0 0.0
        %2868 = vmatpush2.msra.mxu0 %v2828
        %2869 = vmatprep.subr.mxu0 0.0
        %2870 = vmatpush2.msra.mxu0 %v2827
        %2871 = vmatprep.subr.mxu0 0.0
        %2872 = vmatpush2.msra.mxu0 %v2826
        %2873 = vmatprep.subr.mxu0 0.0
        %2874 = vmatpush2.msra.mxu0 %v2825
        %2875 = vmatprep.subr.mxu0 0.0
        %2876 = vmatpush2.msra.mxu0 %v2824
        %2877 = vmatprep.subr.mxu0 0.0
        %2878 = vmatpush2.msra.mxu0 %v2823
        %2879 = vmatprep.subr.mxu0 0.0
        %2880 = vmatpush2.msra.mxu0 %v2822
        %2881 = vmatprep.subr.mxu0 0.0
        %2882 = vmatpush2.msra.mxu0 %v2821
        %2883 = vmatprep.subr.mxu0 0.0
        %2884 = vmatpush2.msra.mxu0 %v2820
        %2885 = vmatprep.subr.mxu0 0.0
        %2886 = vmatpush2.msra.mxu0 %v2819
        %2887 = vmatprep.subr.mxu0 0.0
        %2888 = vmatpush2.msra.mxu0 %v2818
        %2889 = vmatprep.subr.mxu0 0.0
        %2890 = vmatpush2.msra.mxu0 %v2817
        %2891 = vmatprep.subr.mxu0 0.0
        %2892 = vmatpush2.msra.mxu0 %v2816
        %2893 = vmatprep.subr.mxu0 0.0
        %2894 = vmatpush2.msra.mxu0 %v2815
        %2895 = vmatprep.mubr.f32.mxu0 %v2797
        %2896 = vmatmul.mubr.f32.gmra.mxu0 %v2796
        %v2897 = vpop.f32.mrf.mxu0
        %v2898 = vadd.f32 0.0, %v2897
        %v2899 = vpop.f32.mrf.mxu0
        %2900 = vdwg.mxu0
        %v2901 = vld [vmem:[#allocation5 + $0x20] sm:$0xff]
        %v2902 = vld [vmem:[#allocation5 + $0x28] sm:$0xff]
        %s2903 = scalar_lea.vmem %s9, 512
        %v2904 = vld [vmem:[%s2903] sm:$0xff]
        %v2905 = vld [vmem:[%s2903 + $0x8] sm:$0xff]
        %v2906 = vld [vmem:[%s2903 + $0x10] sm:$0xff]
        %v2907 = vld [vmem:[%s2903 + $0x18] sm:$0xff]
        %v2908 = vld [vmem:[%s2903 + $0x20] sm:$0xff]
        %v2909 = vld [vmem:[%s2903 + $0x28] sm:$0xff]
        %v2910 = vld [vmem:[%s2903 + $0x30] sm:$0xff]
        %v2911 = vld [vmem:[%s2903 + $0x38] sm:$0xff]
        %v2912 = vld [vmem:[%s2903 + $0x40] sm:$0xff]
        %v2913 = vld [vmem:[%s2903 + $0x48] sm:$0xff]
        %v2914 = vld [vmem:[%s2903 + $0x50] sm:$0xff]
        %v2915 = vld [vmem:[%s2903 + $0x58] sm:$0xff]
        %v2916 = vld [vmem:[%s2903 + $0x60] sm:$0xff]
        %v2917 = vld [vmem:[%s2903 + $0x68] sm:$0xff]
        %v2918 = vld [vmem:[%s2903 + $0x70] sm:$0xff]
        %v2919 = vld [vmem:[%s2903 + $0x78] sm:$0xff]
        %v2920 = vld [vmem:[%s2903 + $0x80] sm:$0xff]
        %v2921 = vld [vmem:[%s2903 + $0x88] sm:$0xff]
        %v2922 = vld [vmem:[%s2903 + $0x90] sm:$0xff]
        %v2923 = vld [vmem:[%s2903 + $0x98] sm:$0xff]
        %v2924 = vld [vmem:[%s2903 + $0xa0] sm:$0xff]
        %v2925 = vld [vmem:[%s2903 + $0xa8] sm:$0xff]
        %v2926 = vld [vmem:[%s2903 + $0xb0] sm:$0xff]
        %v2927 = vld [vmem:[%s2903 + $0xb8] sm:$0xff]
        %v2928 = vld [vmem:[%s2903 + $0xc0] sm:$0xff]
        %v2929 = vld [vmem:[%s2903 + $0xc8] sm:$0xff]
        %v2930 = vld [vmem:[%s2903 + $0xd0] sm:$0xff]
        %v2931 = vld [vmem:[%s2903 + $0xd8] sm:$0xff]
        %v2932 = vld [vmem:[%s2903 + $0xe0] sm:$0xff]
        %v2933 = vld [vmem:[%s2903 + $0xe8] sm:$0xff]
        %v2934 = vld [vmem:[%s2903 + $0xf0] sm:$0xff]
        %v2935 = vld [vmem:[%s2903 + $0xf8] sm:$0xff]
        %v2936 = vld [vmem:[#allocation5 + $0x30] sm:$0xff]
        %v2937 = vld [vmem:[#allocation5 + $0x38] sm:$0xff]
        %s2938 = scalar_lea.vmem %s9, 768
        %v2939 = vld [vmem:[%s2938] sm:$0xff]
        %v2940 = vld [vmem:[%s2938 + $0x8] sm:$0xff]
        %v2941 = vld [vmem:[%s2938 + $0x10] sm:$0xff]
        %v2942 = vld [vmem:[%s2938 + $0x18] sm:$0xff]
        %v2943 = vld [vmem:[%s2938 + $0x20] sm:$0xff]
        %v2944 = vld [vmem:[%s2938 + $0x28] sm:$0xff]
        %v2945 = vld [vmem:[%s2938 + $0x30] sm:$0xff]
        %v2946 = vld [vmem:[%s2938 + $0x38] sm:$0xff]
        %v2947 = vld [vmem:[%s2938 + $0x40] sm:$0xff]
        %v2948 = vld [vmem:[%s2938 + $0x48] sm:$0xff]
        %v2949 = vld [vmem:[%s2938 + $0x50] sm:$0xff]
        %v2950 = vld [vmem:[%s2938 + $0x58] sm:$0xff]
        %v2951 = vld [vmem:[%s2938 + $0x60] sm:$0xff]
        %v2952 = vld [vmem:[%s2938 + $0x68] sm:$0xff]
        %v2953 = vld [vmem:[%s2938 + $0x70] sm:$0xff]
        %v2954 = vld [vmem:[%s2938 + $0x78] sm:$0xff]
        %v2955 = vld [vmem:[%s2938 + $0x80] sm:$0xff]
        %v2956 = vld [vmem:[%s2938 + $0x88] sm:$0xff]
        %v2957 = vld [vmem:[%s2938 + $0x90] sm:$0xff]
        %v2958 = vld [vmem:[%s2938 + $0x98] sm:$0xff]
        %v2959 = vld [vmem:[%s2938 + $0xa0] sm:$0xff]
        %v2960 = vld [vmem:[%s2938 + $0xa8] sm:$0xff]
        %v2961 = vld [vmem:[%s2938 + $0xb0] sm:$0xff]
        %v2962 = vld [vmem:[%s2938 + $0xb8] sm:$0xff]
        %v2963 = vld [vmem:[%s2938 + $0xc0] sm:$0xff]
        %v2964 = vld [vmem:[%s2938 + $0xc8] sm:$0xff]
        %v2965 = vld [vmem:[%s2938 + $0xd0] sm:$0xff]
        %v2966 = vld [vmem:[%s2938 + $0xd8] sm:$0xff]
        %v2967 = vld [vmem:[%s2938 + $0xe0] sm:$0xff]
        %v2968 = vld [vmem:[%s2938 + $0xe8] sm:$0xff]
        %v2969 = vld [vmem:[%s2938 + $0xf0] sm:$0xff]
        %v2970 = vld [vmem:[%s2938 + $0xf8] sm:$0xff]
        %2971 = vmatprep.subr.mxu0 0.0
        %2972 = vmatpush1.msra.mxu0 %v2954
        %2973 = vmatprep.subr.mxu0 0.0
        %2974 = vmatpush1.msra.mxu0 %v2953
        %2975 = vmatprep.subr.mxu0 0.0
        %2976 = vmatpush1.msra.mxu0 %v2952
        %2977 = vmatprep.subr.mxu0 0.0
        %2978 = vmatpush1.msra.mxu0 %v2951
        %2979 = vmatprep.subr.mxu0 0.0
        %2980 = vmatpush1.msra.mxu0 %v2950
        %2981 = vmatprep.subr.mxu0 0.0
        %2982 = vmatpush1.msra.mxu0 %v2949
        %2983 = vmatprep.subr.mxu0 0.0
        %2984 = vmatpush1.msra.mxu0 %v2948
        %2985 = vmatprep.subr.mxu0 0.0
        %2986 = vmatpush1.msra.mxu0 %v2947
        %2987 = vmatprep.subr.mxu0 0.0
        %2988 = vmatpush1.msra.mxu0 %v2946
        %2989 = vmatprep.subr.mxu0 0.0
        %2990 = vmatpush1.msra.mxu0 %v2945
        %2991 = vmatprep.subr.mxu0 0.0
        %2992 = vmatpush1.msra.mxu0 %v2944
        %2993 = vmatprep.subr.mxu0 0.0
        %2994 = vmatpush1.msra.mxu0 %v2943
        %2995 = vmatprep.subr.mxu0 0.0
        %2996 = vmatpush1.msra.mxu0 %v2942
        %2997 = vmatprep.subr.mxu0 0.0
        %2998 = vmatpush1.msra.mxu0 %v2941
        %2999 = vmatprep.subr.mxu0 0.0
        %3000 = vmatpush1.msra.mxu0 %v2940
        %3001 = vmatprep.subr.mxu0 0.0
        %3002 = vmatpush1.msra.mxu0 %v2939
        %3003 = vmatprep.subr.mxu0 0.0
        %3004 = vmatpush2.msra.mxu0 %v2970
        %3005 = vmatprep.subr.mxu0 0.0
        %3006 = vmatpush2.msra.mxu0 %v2969
        %3007 = vmatprep.subr.mxu0 0.0
        %3008 = vmatpush2.msra.mxu0 %v2968
        %3009 = vmatprep.subr.mxu0 0.0
        %3010 = vmatpush2.msra.mxu0 %v2967
        %3011 = vmatprep.subr.mxu0 0.0
        %3012 = vmatpush2.msra.mxu0 %v2966
        %3013 = vmatprep.subr.mxu0 0.0
        %3014 = vmatpush2.msra.mxu0 %v2965
        %3015 = vmatprep.subr.mxu0 0.0
        %3016 = vmatpush2.msra.mxu0 %v2964
        %3017 = vmatprep.subr.mxu0 0.0
        %3018 = vmatpush2.msra.mxu0 %v2963
        %3019 = vmatprep.subr.mxu0 0.0
        %3020 = vmatpush2.msra.mxu0 %v2962
        %3021 = vmatprep.subr.mxu0 0.0
        %3022 = vmatpush2.msra.mxu0 %v2961
        %3023 = vmatprep.subr.mxu0 0.0
        %3024 = vmatpush2.msra.mxu0 %v2960
        %3025 = vmatprep.subr.mxu0 0.0
        %3026 = vmatpush2.msra.mxu0 %v2959
        %3027 = vmatprep.subr.mxu0 0.0
        %3028 = vmatpush2.msra.mxu0 %v2958
        %3029 = vmatprep.subr.mxu0 0.0
        %3030 = vmatpush2.msra.mxu0 %v2957
        %3031 = vmatprep.subr.mxu0 0.0
        %3032 = vmatpush2.msra.mxu0 %v2956
        %3033 = vmatprep.subr.mxu0 0.0
        %3034 = vmatpush2.msra.mxu0 %v2955
        %3035 = vmatprep.mubr.f32.mxu0 %v2937
        %3036 = vmatmul.mubr.f32.gmra.mxu0 %v2936
        %v3037 = vpop.f32.mrf.mxu0
        %v3038 = vadd.f32 0.0, %v3037
        %v3039 = vpop.f32.mrf.mxu0
        %3040 = vdwg.mxu0
        %v3041 = vld [vmem:[#allocation5 + $0x40] sm:$0xff]
        %v3042 = vld [vmem:[#allocation5 + $0x48] sm:$0xff]
        %s3043 = scalar_lea.vmem %s9, 1024
        %v3044 = vld [vmem:[%s3043] sm:$0xff]
        %v3045 = vld [vmem:[%s3043 + $0x8] sm:$0xff]
        %v3046 = vld [vmem:[%s3043 + $0x10] sm:$0xff]
        %v3047 = vld [vmem:[%s3043 + $0x18] sm:$0xff]
        %v3048 = vld [vmem:[%s3043 + $0x20] sm:$0xff]
        %v3049 = vld [vmem:[%s3043 + $0x28] sm:$0xff]
        %v3050 = vld [vmem:[%s3043 + $0x30] sm:$0xff]
        %v3051 = vld [vmem:[%s3043 + $0x38] sm:$0xff]
        %v3052 = vld [vmem:[%s3043 + $0x40] sm:$0xff]
        %v3053 = vld [vmem:[%s3043 + $0x48] sm:$0xff]
        %v3054 = vld [vmem:[%s3043 + $0x50] sm:$0xff]
        %v3055 = vld [vmem:[%s3043 + $0x58] sm:$0xff]
        %v3056 = vld [vmem:[%s3043 + $0x60] sm:$0xff]
        %v3057 = vld [vmem:[%s3043 + $0x68] sm:$0xff]
        %v3058 = vld [vmem:[%s3043 + $0x70] sm:$0xff]
        %v3059 = vld [vmem:[%s3043 + $0x78] sm:$0xff]
        %v3060 = vld [vmem:[%s3043 + $0x80] sm:$0xff]
        %v3061 = vld [vmem:[%s3043 + $0x88] sm:$0xff]
        %v3062 = vld [vmem:[%s3043 + $0x90] sm:$0xff]
        %v3063 = vld [vmem:[%s3043 + $0x98] sm:$0xff]
        %v3064 = vld [vmem:[%s3043 + $0xa0] sm:$0xff]
        %v3065 = vld [vmem:[%s3043 + $0xa8] sm:$0xff]
        %v3066 = vld [vmem:[%s3043 + $0xb0] sm:$0xff]
        %v3067 = vld [vmem:[%s3043 + $0xb8] sm:$0xff]
        %v3068 = vld [vmem:[%s3043 + $0xc0] sm:$0xff]
        %v3069 = vld [vmem:[%s3043 + $0xc8] sm:$0xff]
        %v3070 = vld [vmem:[%s3043 + $0xd0] sm:$0xff]
        %v3071 = vld [vmem:[%s3043 + $0xd8] sm:$0xff]
        %v3072 = vld [vmem:[%s3043 + $0xe0] sm:$0xff]
        %v3073 = vld [vmem:[%s3043 + $0xe8] sm:$0xff]
        %v3074 = vld [vmem:[%s3043 + $0xf0] sm:$0xff]
        %v3075 = vld [vmem:[%s3043 + $0xf8] sm:$0xff]
        %v3076 = vld [vmem:[#allocation5 + $0x50] sm:$0xff]
        %v3077 = vld [vmem:[#allocation5 + $0x58] sm:$0xff]
        %s3078 = scalar_lea.vmem %s9, 1280
        %v3079 = vld [vmem:[%s3078] sm:$0xff]
        %v3080 = vld [vmem:[%s3078 + $0x8] sm:$0xff]
        %v3081 = vld [vmem:[%s3078 + $0x10] sm:$0xff]
        %v3082 = vld [vmem:[%s3078 + $0x18] sm:$0xff]
        %v3083 = vld [vmem:[%s3078 + $0x20] sm:$0xff]
        %v3084 = vld [vmem:[%s3078 + $0x28] sm:$0xff]
        %v3085 = vld [vmem:[%s3078 + $0x30] sm:$0xff]
        %v3086 = vld [vmem:[%s3078 + $0x38] sm:$0xff]
        %v3087 = vld [vmem:[%s3078 + $0x40] sm:$0xff]
        %v3088 = vld [vmem:[%s3078 + $0x48] sm:$0xff]
        %v3089 = vld [vmem:[%s3078 + $0x50] sm:$0xff]
        %v3090 = vld [vmem:[%s3078 + $0x58] sm:$0xff]
        %v3091 = vld [vmem:[%s3078 + $0x60] sm:$0xff]
        %v3092 = vld [vmem:[%s3078 + $0x68] sm:$0xff]
        %v3093 = vld [vmem:[%s3078 + $0x70] sm:$0xff]
        %v3094 = vld [vmem:[%s3078 + $0x78] sm:$0xff]
        %v3095 = vld [vmem:[%s3078 + $0x80] sm:$0xff]
        %v3096 = vld [vmem:[%s3078 + $0x88] sm:$0xff]
        %v3097 = vld [vmem:[%s3078 + $0x90] sm:$0xff]
        %v3098 = vld [vmem:[%s3078 + $0x98] sm:$0xff]
        %v3099 = vld [vmem:[%s3078 + $0xa0] sm:$0xff]
        %v3100 = vld [vmem:[%s3078 + $0xa8] sm:$0xff]
        %v3101 = vld [vmem:[%s3078 + $0xb0] sm:$0xff]
        %v3102 = vld [vmem:[%s3078 + $0xb8] sm:$0xff]
        %v3103 = vld [vmem:[%s3078 + $0xc0] sm:$0xff]
        %v3104 = vld [vmem:[%s3078 + $0xc8] sm:$0xff]
        %v3105 = vld [vmem:[%s3078 + $0xd0] sm:$0xff]
        %v3106 = vld [vmem:[%s3078 + $0xd8] sm:$0xff]
        %v3107 = vld [vmem:[%s3078 + $0xe0] sm:$0xff]
        %v3108 = vld [vmem:[%s3078 + $0xe8] sm:$0xff]
        %v3109 = vld [vmem:[%s3078 + $0xf0] sm:$0xff]
        %v3110 = vld [vmem:[%s3078 + $0xf8] sm:$0xff]
        %3111 = vmatprep.subr.mxu0 0.0
        %3112 = vmatpush1.msra.mxu0 %v3094
        %3113 = vmatprep.subr.mxu0 0.0
        %3114 = vmatpush1.msra.mxu0 %v3093
        %3115 = vmatprep.subr.mxu0 0.0
        %3116 = vmatpush1.msra.mxu0 %v3092
        %3117 = vmatprep.subr.mxu0 0.0
        %3118 = vmatpush1.msra.mxu0 %v3091
        %3119 = vmatprep.subr.mxu0 0.0
        %3120 = vmatpush1.msra.mxu0 %v3090
        %3121 = vmatprep.subr.mxu0 0.0
        %3122 = vmatpush1.msra.mxu0 %v3089
        %3123 = vmatprep.subr.mxu0 0.0
        %3124 = vmatpush1.msra.mxu0 %v3088
        %3125 = vmatprep.subr.mxu0 0.0
        %3126 = vmatpush1.msra.mxu0 %v3087
        %3127 = vmatprep.subr.mxu0 0.0
        %3128 = vmatpush1.msra.mxu0 %v3086
        %3129 = vmatprep.subr.mxu0 0.0
        %3130 = vmatpush1.msra.mxu0 %v3085
        %3131 = vmatprep.subr.mxu0 0.0
        %3132 = vmatpush1.msra.mxu0 %v3084
        %3133 = vmatprep.subr.mxu0 0.0
        %3134 = vmatpush1.msra.mxu0 %v3083
        %3135 = vmatprep.subr.mxu0 0.0
        %3136 = vmatpush1.msra.mxu0 %v3082
        %3137 = vmatprep.subr.mxu0 0.0
        %3138 = vmatpush1.msra.mxu0 %v3081
        %3139 = vmatprep.subr.mxu0 0.0
        %3140 = vmatpush1.msra.mxu0 %v3080
        %3141 = vmatprep.subr.mxu0 0.0
        %3142 = vmatpush1.msra.mxu0 %v3079
        %3143 = vmatprep.subr.mxu0 0.0
        %3144 = vmatpush2.msra.mxu0 %v3110
        %3145 = vmatprep.subr.mxu0 0.0
        %3146 = vmatpush2.msra.mxu0 %v3109
        %3147 = vmatprep.subr.mxu0 0.0
        %3148 = vmatpush2.msra.mxu0 %v3108
        %3149 = vmatprep.subr.mxu0 0.0
        %3150 = vmatpush2.msra.mxu0 %v3107
        %3151 = vmatprep.subr.mxu0 0.0
        %3152 = vmatpush2.msra.mxu0 %v3106
        %3153 = vmatprep.subr.mxu0 0.0
        %3154 = vmatpush2.msra.mxu0 %v3105
        %3155 = vmatprep.subr.mxu0 0.0
        %3156 = vmatpush2.msra.mxu0 %v3104
        %3157 = vmatprep.subr.mxu0 0.0
        %3158 = vmatpush2.msra.mxu0 %v3103
        %3159 = vmatprep.subr.mxu0 0.0
        %3160 = vmatpush2.msra.mxu0 %v3102
        %3161 = vmatprep.subr.mxu0 0.0
        %3162 = vmatpush2.msra.mxu0 %v3101
        %3163 = vmatprep.subr.mxu0 0.0
        %3164 = vmatpush2.msra.mxu0 %v3100
        %3165 = vmatprep.subr.mxu0 0.0
        %3166 = vmatpush2.msra.mxu0 %v3099
        %3167 = vmatprep.subr.mxu0 0.0
        %3168 = vmatpush2.msra.mxu0 %v3098
        %3169 = vmatprep.subr.mxu0 0.0
        %3170 = vmatpush2.msra.mxu0 %v3097
        %3171 = vmatprep.subr.mxu0 0.0
        %3172 = vmatpush2.msra.mxu0 %v3096
        %3173 = vmatprep.subr.mxu0 0.0
        %3174 = vmatpush2.msra.mxu0 %v3095
        %3175 = vmatprep.mubr.f32.mxu0 %v3077
        %3176 = vmatmul.mubr.f32.gmra.mxu0 %v3076
        %v3177 = vpop.f32.mrf.mxu0
        %v3178 = vadd.f32 0.0, %v3177
        %v3179 = vpop.f32.mrf.mxu0
        %3180 = vdwg.mxu0
        %v3181 = vld [vmem:[#allocation5 + $0x60] sm:$0xff]
        %v3182 = vld [vmem:[#allocation5 + $0x68] sm:$0xff]
        %s3183 = scalar_lea.vmem %s9, 1536
        %v3184 = vld [vmem:[%s3183] sm:$0xff]
        %v3185 = vld [vmem:[%s3183 + $0x8] sm:$0xff]
        %v3186 = vld [vmem:[%s3183 + $0x10] sm:$0xff]
        %v3187 = vld [vmem:[%s3183 + $0x18] sm:$0xff]
        %v3188 = vld [vmem:[%s3183 + $0x20] sm:$0xff]
        %v3189 = vld [vmem:[%s3183 + $0x28] sm:$0xff]
        %v3190 = vld [vmem:[%s3183 + $0x30] sm:$0xff]
        %v3191 = vld [vmem:[%s3183 + $0x38] sm:$0xff]
        %v3192 = vld [vmem:[%s3183 + $0x40] sm:$0xff]
        %v3193 = vld [vmem:[%s3183 + $0x48] sm:$0xff]
        %v3194 = vld [vmem:[%s3183 + $0x50] sm:$0xff]
        %v3195 = vld [vmem:[%s3183 + $0x58] sm:$0xff]
        %v3196 = vld [vmem:[%s3183 + $0x60] sm:$0xff]
        %v3197 = vld [vmem:[%s3183 + $0x68] sm:$0xff]
        %v3198 = vld [vmem:[%s3183 + $0x70] sm:$0xff]
        %v3199 = vld [vmem:[%s3183 + $0x78] sm:$0xff]
        %v3200 = vld [vmem:[%s3183 + $0x80] sm:$0xff]
        %v3201 = vld [vmem:[%s3183 + $0x88] sm:$0xff]
        %v3202 = vld [vmem:[%s3183 + $0x90] sm:$0xff]
        %v3203 = vld [vmem:[%s3183 + $0x98] sm:$0xff]
        %v3204 = vld [vmem:[%s3183 + $0xa0] sm:$0xff]
        %v3205 = vld [vmem:[%s3183 + $0xa8] sm:$0xff]
        %v3206 = vld [vmem:[%s3183 + $0xb0] sm:$0xff]
        %v3207 = vld [vmem:[%s3183 + $0xb8] sm:$0xff]
        %v3208 = vld [vmem:[%s3183 + $0xc0] sm:$0xff]
        %v3209 = vld [vmem:[%s3183 + $0xc8] sm:$0xff]
        %v3210 = vld [vmem:[%s3183 + $0xd0] sm:$0xff]
        %v3211 = vld [vmem:[%s3183 + $0xd8] sm:$0xff]
        %v3212 = vld [vmem:[%s3183 + $0xe0] sm:$0xff]
        %v3213 = vld [vmem:[%s3183 + $0xe8] sm:$0xff]
        %v3214 = vld [vmem:[%s3183 + $0xf0] sm:$0xff]
        %v3215 = vld [vmem:[%s3183 + $0xf8] sm:$0xff]
        %3216 = vmatprep.subr.mxu0 0.0
        %3217 = vmatpush1.msra.mxu0 %v3199
        %3218 = vmatprep.subr.mxu0 0.0
        %3219 = vmatpush1.msra.mxu0 %v3198
        %3220 = vmatprep.subr.mxu0 0.0
        %3221 = vmatpush1.msra.mxu0 %v3197
        %3222 = vmatprep.subr.mxu0 0.0
        %3223 = vmatpush1.msra.mxu0 %v3196
        %3224 = vmatprep.subr.mxu0 0.0
        %3225 = vmatpush1.msra.mxu0 %v3195
        %3226 = vmatprep.subr.mxu0 0.0
        %3227 = vmatpush1.msra.mxu0 %v3194
        %3228 = vmatprep.subr.mxu0 0.0
        %3229 = vmatpush1.msra.mxu0 %v3193
        %3230 = vmatprep.subr.mxu0 0.0
        %3231 = vmatpush1.msra.mxu0 %v3192
        %3232 = vmatprep.subr.mxu0 0.0
        %3233 = vmatpush1.msra.mxu0 %v3191
        %3234 = vmatprep.subr.mxu0 0.0
        %3235 = vmatpush1.msra.mxu0 %v3190
        %3236 = vmatprep.subr.mxu0 0.0
        %3237 = vmatpush1.msra.mxu0 %v3189
        %3238 = vmatprep.subr.mxu0 0.0
        %3239 = vmatpush1.msra.mxu0 %v3188
        %3240 = vmatprep.subr.mxu0 0.0
        %3241 = vmatpush1.msra.mxu0 %v3187
        %3242 = vmatprep.subr.mxu0 0.0
        %3243 = vmatpush1.msra.mxu0 %v3186
        %3244 = vmatprep.subr.mxu0 0.0
        %3245 = vmatpush1.msra.mxu0 %v3185
        %3246 = vmatprep.subr.mxu0 0.0
        %3247 = vmatpush1.msra.mxu0 %v3184
        %3248 = vmatprep.subr.mxu0 0.0
        %3249 = vmatpush2.msra.mxu0 %v3215
        %3250 = vmatprep.subr.mxu0 0.0
        %3251 = vmatpush2.msra.mxu0 %v3214
        %3252 = vmatprep.subr.mxu0 0.0
        %3253 = vmatpush2.msra.mxu0 %v3213
        %3254 = vmatprep.subr.mxu0 0.0
        %3255 = vmatpush2.msra.mxu0 %v3212
        %3256 = vmatprep.subr.mxu0 0.0
        %3257 = vmatpush2.msra.mxu0 %v3211
        %3258 = vmatprep.subr.mxu0 0.0
        %3259 = vmatpush2.msra.mxu0 %v3210
        %3260 = vmatprep.subr.mxu0 0.0
        %3261 = vmatpush2.msra.mxu0 %v3209
        %3262 = vmatprep.subr.mxu0 0.0
        %3263 = vmatpush2.msra.mxu0 %v3208
        %3264 = vmatprep.subr.mxu0 0.0
        %3265 = vmatpush2.msra.mxu0 %v3207
        %3266 = vmatprep.subr.mxu0 0.0
        %3267 = vmatpush2.msra.mxu0 %v3206
        %3268 = vmatprep.subr.mxu0 0.0
        %3269 = vmatpush2.msra.mxu0 %v3205
        %3270 = vmatprep.subr.mxu0 0.0
        %3271 = vmatpush2.msra.mxu0 %v3204
        %3272 = vmatprep.subr.mxu0 0.0
        %3273 = vmatpush2.msra.mxu0 %v3203
        %3274 = vmatprep.subr.mxu0 0.0
        %3275 = vmatpush2.msra.mxu0 %v3202
        %3276 = vmatprep.subr.mxu0 0.0
        %3277 = vmatpush2.msra.mxu0 %v3201
        %3278 = vmatprep.subr.mxu0 0.0
        %3279 = vmatpush2.msra.mxu0 %v3200
        %3280 = vmatprep.mubr.f32.mxu0 %v3182
        %3281 = vmatmul.mubr.f32.gmra.mxu0 %v3181
        %v3282 = vpop.f32.mrf.mxu0
        %v3283 = vadd.f32 0.0, %v3282
        %v3284 = vpop.f32.mrf.mxu0
        %3285 = vdwg.mxu0
        %3286 = vmatprep.subr.mxu0 0.0
        %3287 = vmatpush1.msra.mxu0 %v2779
        %3288 = vmatprep.subr.mxu0 0.0
        %3289 = vmatpush1.msra.mxu0 %v2778
        %3290 = vmatprep.subr.mxu0 0.0
        %3291 = vmatpush1.msra.mxu0 %v2777
        %3292 = vmatprep.subr.mxu0 0.0
        %3293 = vmatpush1.msra.mxu0 %v2776
        %3294 = vmatprep.subr.mxu0 0.0
        %3295 = vmatpush1.msra.mxu0 %v2775
        %3296 = vmatprep.subr.mxu0 0.0
        %3297 = vmatpush1.msra.mxu0 %v2774
        %3298 = vmatprep.subr.mxu0 0.0
        %3299 = vmatpush1.msra.mxu0 %v2773
        %3300 = vmatprep.subr.mxu0 0.0
        %3301 = vmatpush1.msra.mxu0 %v2772
        %3302 = vmatprep.subr.mxu0 0.0
        %3303 = vmatpush1.msra.mxu0 %v2771
        %3304 = vmatprep.subr.mxu0 0.0
        %3305 = vmatpush1.msra.mxu0 %v2770
        %3306 = vmatprep.subr.mxu0 0.0
        %3307 = vmatpush1.msra.mxu0 %v2769
        %3308 = vmatprep.subr.mxu0 0.0
        %3309 = vmatpush1.msra.mxu0 %v2768
        %3310 = vmatprep.subr.mxu0 0.0
        %3311 = vmatpush1.msra.mxu0 %v2767
        %3312 = vmatprep.subr.mxu0 0.0
        %3313 = vmatpush1.msra.mxu0 %v2766
        %3314 = vmatprep.subr.mxu0 0.0
        %3315 = vmatpush1.msra.mxu0 %v2765
        %3316 = vmatprep.subr.mxu0 0.0
        %3317 = vmatpush1.msra.mxu0 %v2764
        %3318 = vmatprep.subr.mxu0 0.0
        %3319 = vmatpush2.msra.mxu0 %v2795
        %3320 = vmatprep.subr.mxu0 0.0
        %3321 = vmatpush2.msra.mxu0 %v2794
        %3322 = vmatprep.subr.mxu0 0.0
        %3323 = vmatpush2.msra.mxu0 %v2793
        %3324 = vmatprep.subr.mxu0 0.0
        %3325 = vmatpush2.msra.mxu0 %v2792
        %3326 = vmatprep.subr.mxu0 0.0
        %3327 = vmatpush2.msra.mxu0 %v2791
        %3328 = vmatprep.subr.mxu0 0.0
        %3329 = vmatpush2.msra.mxu0 %v2790
        %3330 = vmatprep.subr.mxu0 0.0
        %3331 = vmatpush2.msra.mxu0 %v2789
        %3332 = vmatprep.subr.mxu0 0.0
        %3333 = vmatpush2.msra.mxu0 %v2788
        %3334 = vmatprep.subr.mxu0 0.0
        %3335 = vmatpush2.msra.mxu0 %v2787
        %3336 = vmatprep.subr.mxu0 0.0
        %3337 = vmatpush2.msra.mxu0 %v2786
        %3338 = vmatprep.subr.mxu0 0.0
        %3339 = vmatpush2.msra.mxu0 %v2785
        %3340 = vmatprep.subr.mxu0 0.0
        %3341 = vmatpush2.msra.mxu0 %v2784
        %3342 = vmatprep.subr.mxu0 0.0
        %3343 = vmatpush2.msra.mxu0 %v2783
        %3344 = vmatprep.subr.mxu0 0.0
        %3345 = vmatpush2.msra.mxu0 %v2782
        %3346 = vmatprep.subr.mxu0 0.0
        %3347 = vmatpush2.msra.mxu0 %v2781
        %3348 = vmatprep.subr.mxu0 0.0
        %3349 = vmatpush2.msra.mxu0 %v2780
        %3350 = vmatprep.mubr.f32.mxu0 %v2763
        %3351 = vmatmul.mubr.f32.gmra.mxu0 %v2762
        %v3352 = vpop.f32.mrf.mxu0
        %v3353 = vadd.f32 %v2898, %v3352
        %v3354 = vpop.f32.mrf.mxu0
        %3355 = vdwg.mxu0
        %3356 = vmatprep.subr.mxu0 0.0
        %3357 = vmatpush1.msra.mxu0 %v2919
        %3358 = vmatprep.subr.mxu0 0.0
        %3359 = vmatpush1.msra.mxu0 %v2918
        %3360 = vmatprep.subr.mxu0 0.0
        %3361 = vmatpush1.msra.mxu0 %v2917
        %3362 = vmatprep.subr.mxu0 0.0
        %3363 = vmatpush1.msra.mxu0 %v2916
        %3364 = vmatprep.subr.mxu0 0.0
        %3365 = vmatpush1.msra.mxu0 %v2915
        %3366 = vmatprep.subr.mxu0 0.0
        %3367 = vmatpush1.msra.mxu0 %v2914
        %3368 = vmatprep.subr.mxu0 0.0
        %3369 = vmatpush1.msra.mxu0 %v2913
        %3370 = vmatprep.subr.mxu0 0.0
        %3371 = vmatpush1.msra.mxu0 %v2912
        %3372 = vmatprep.subr.mxu0 0.0
        %3373 = vmatpush1.msra.mxu0 %v2911
        %3374 = vmatprep.subr.mxu0 0.0
        %3375 = vmatpush1.msra.mxu0 %v2910
        %3376 = vmatprep.subr.mxu0 0.0
        %3377 = vmatpush1.msra.mxu0 %v2909
        %3378 = vmatprep.subr.mxu0 0.0
        %3379 = vmatpush1.msra.mxu0 %v2908
        %3380 = vmatprep.subr.mxu0 0.0
        %3381 = vmatpush1.msra.mxu0 %v2907
        %3382 = vmatprep.subr.mxu0 0.0
        %3383 = vmatpush1.msra.mxu0 %v2906
        %3384 = vmatprep.subr.mxu0 0.0
        %3385 = vmatpush1.msra.mxu0 %v2905
        %3386 = vmatprep.subr.mxu0 0.0
        %3387 = vmatpush1.msra.mxu0 %v2904
        %3388 = vmatprep.subr.mxu0 0.0
        %3389 = vmatpush2.msra.mxu0 %v2935
        %3390 = vmatprep.subr.mxu0 0.0
        %3391 = vmatpush2.msra.mxu0 %v2934
        %3392 = vmatprep.subr.mxu0 0.0
        %3393 = vmatpush2.msra.mxu0 %v2933
        %3394 = vmatprep.subr.mxu0 0.0
        %3395 = vmatpush2.msra.mxu0 %v2932
        %3396 = vmatprep.subr.mxu0 0.0
        %3397 = vmatpush2.msra.mxu0 %v2931
        %3398 = vmatprep.subr.mxu0 0.0
        %3399 = vmatpush2.msra.mxu0 %v2930
        %3400 = vmatprep.subr.mxu0 0.0
        %3401 = vmatpush2.msra.mxu0 %v2929
        %3402 = vmatprep.subr.mxu0 0.0
        %3403 = vmatpush2.msra.mxu0 %v2928
        %3404 = vmatprep.subr.mxu0 0.0
        %3405 = vmatpush2.msra.mxu0 %v2927
        %3406 = vmatprep.subr.mxu0 0.0
        %3407 = vmatpush2.msra.mxu0 %v2926
        %3408 = vmatprep.subr.mxu0 0.0
        %3409 = vmatpush2.msra.mxu0 %v2925
        %3410 = vmatprep.subr.mxu0 0.0
        %3411 = vmatpush2.msra.mxu0 %v2924
        %3412 = vmatprep.subr.mxu0 0.0
        %3413 = vmatpush2.msra.mxu0 %v2923
        %3414 = vmatprep.subr.mxu0 0.0
        %3415 = vmatpush2.msra.mxu0 %v2922
        %3416 = vmatprep.subr.mxu0 0.0
        %3417 = vmatpush2.msra.mxu0 %v2921
        %3418 = vmatprep.subr.mxu0 0.0
        %3419 = vmatpush2.msra.mxu0 %v2920
        %3420 = vmatprep.mubr.f32.mxu0 %v2902
        %3421 = vmatmul.mubr.f32.gmra.mxu0 %v2901
        %v3422 = vpop.f32.mrf.mxu0
        %v3423 = vadd.f32 %v3038, %v3422
        %v3424 = vpop.f32.mrf.mxu0
        %3425 = vdwg.mxu0
        %3426 = vmatprep.subr.mxu0 0.0
        %3427 = vmatpush1.msra.mxu0 %v3059
        %3428 = vmatprep.subr.mxu0 0.0
        %3429 = vmatpush1.msra.mxu0 %v3058
        %3430 = vmatprep.subr.mxu0 0.0
        %3431 = vmatpush1.msra.mxu0 %v3057
        %3432 = vmatprep.subr.mxu0 0.0
        %3433 = vmatpush1.msra.mxu0 %v3056
        %3434 = vmatprep.subr.mxu0 0.0
        %3435 = vmatpush1.msra.mxu0 %v3055
        %3436 = vmatprep.subr.mxu0 0.0
        %3437 = vmatpush1.msra.mxu0 %v3054
        %3438 = vmatprep.subr.mxu0 0.0
        %3439 = vmatpush1.msra.mxu0 %v3053
        %3440 = vmatprep.subr.mxu0 0.0
        %3441 = vmatpush1.msra.mxu0 %v3052
        %3442 = vmatprep.subr.mxu0 0.0
        %3443 = vmatpush1.msra.mxu0 %v3051
        %3444 = vmatprep.subr.mxu0 0.0
        %3445 = vmatpush1.msra.mxu0 %v3050
        %3446 = vmatprep.subr.mxu0 0.0
        %3447 = vmatpush1.msra.mxu0 %v3049
        %3448 = vmatprep.subr.mxu0 0.0
        %3449 = vmatpush1.msra.mxu0 %v3048
        %3450 = vmatprep.subr.mxu0 0.0
        %3451 = vmatpush1.msra.mxu0 %v3047
        %3452 = vmatprep.subr.mxu0 0.0
        %3453 = vmatpush1.msra.mxu0 %v3046
        %3454 = vmatprep.subr.mxu0 0.0
        %3455 = vmatpush1.msra.mxu0 %v3045
        %3456 = vmatprep.subr.mxu0 0.0
        %3457 = vmatpush1.msra.mxu0 %v3044
        %3458 = vmatprep.subr.mxu0 0.0
        %3459 = vmatpush2.msra.mxu0 %v3075
        %3460 = vmatprep.subr.mxu0 0.0
        %3461 = vmatpush2.msra.mxu0 %v3074
        %3462 = vmatprep.subr.mxu0 0.0
        %3463 = vmatpush2.msra.mxu0 %v3073
        %3464 = vmatprep.subr.mxu0 0.0
        %3465 = vmatpush2.msra.mxu0 %v3072
        %3466 = vmatprep.subr.mxu0 0.0
        %3467 = vmatpush2.msra.mxu0 %v3071
        %3468 = vmatprep.subr.mxu0 0.0
        %3469 = vmatpush2.msra.mxu0 %v3070
        %3470 = vmatprep.subr.mxu0 0.0
        %3471 = vmatpush2.msra.mxu0 %v3069
        %3472 = vmatprep.subr.mxu0 0.0
        %3473 = vmatpush2.msra.mxu0 %v3068
        %3474 = vmatprep.subr.mxu0 0.0
        %3475 = vmatpush2.msra.mxu0 %v3067
        %3476 = vmatprep.subr.mxu0 0.0
        %3477 = vmatpush2.msra.mxu0 %v3066
        %3478 = vmatprep.subr.mxu0 0.0
        %3479 = vmatpush2.msra.mxu0 %v3065
        %3480 = vmatprep.subr.mxu0 0.0
        %3481 = vmatpush2.msra.mxu0 %v3064
        %3482 = vmatprep.subr.mxu0 0.0
        %3483 = vmatpush2.msra.mxu0 %v3063
        %3484 = vmatprep.subr.mxu0 0.0
        %3485 = vmatpush2.msra.mxu0 %v3062
        %3486 = vmatprep.subr.mxu0 0.0
        %3487 = vmatpush2.msra.mxu0 %v3061
        %3488 = vmatprep.subr.mxu0 0.0
        %3489 = vmatpush2.msra.mxu0 %v3060
        %3490 = vmatprep.mubr.f32.mxu0 %v3042
        %3491 = vmatmul.mubr.f32.gmra.mxu0 %v3041
        %v3492 = vpop.f32.mrf.mxu0
        %v3493 = vadd.f32 %v3178, %v3492
        %v3494 = vpop.f32.mrf.mxu0
        %3495 = vdwg.mxu0
        %v3496 = vadd.f32 %v3353, %v3423
        %v3497 = vadd.f32 %v3493, %v3283
        %v3498 = vadd.f32 %v3496, %v3497
        %v3499 = vld [vmem:[#allocation17] sm:$0x1]
        %v3501 = vlaneseq
        %v3502 = vshrl.u32 %v3501, 7
        %v3503 = vsub.s32 0, %v3502
        %v3504 = vrot.slane %v3499, %v3503
        %v3506 = vadd.f32 %v3498, %v3504
        %v3507 = vmax.f32 %v3506, -20.0
        %v3508 = vmin.f32 %v3507, 2.0
        %v3509 = vmul.f32 %v3508, 1.442695
        %v3510 = vpow.pop %v3509
        %v3511 = vld [vmem:[%s522] sm:$0xff]
        %3513 = vrot.lane.b32.xlu0 %v3511, 3
        %v3514 = vpop.permute.xlu0 %3513
        %v3516 = vmul.f32 %v3510, %v3514
        %3518 = vrot.lane.b32.xlu0 %v3516, 125
        %v3519 = vpop.permute.xlu0 %3518
        %v3521 = vadd.f32 %v3506, %v3519
        %v3522 = vtanh.pop %v3521
        %v3523 = vmul.f32 %v3522, 2.0
        %v3524 = vadd.f32 %v3523, 2.0
        %v3525 = vmax.f32 %v3524, 0.0
        %v3526 = vmin.f32 %v3525, 3.99
        %v3527 = vmul.f32 %v3511, %v3511
        %v3528 = vmul.f32 %v3527, -0.5
        %3530 = vrot.lane.b32.xlu0 %v3508, 125
        %v3531 = vpop.permute.xlu0 %3530
        %v3533 = vsub.f32 %v3528, %v3531
        %v3534 = vsub.f32 %v3533, 0.9189385
        %v3535 = vmul.f32 %v3534, 1.442695
        %v3536 = vpow.pop %v3535
        %v3537 = vsub.f32 0.0, %v3536
        %v3538 = vmul.f32 %v3537, %v3534
        %3540 = vrot.lane.b32.xlu0 %v3534, 3
        %v3541 = vpop.permute.xlu0 %3540
        %3544 = vrot.lane.b32.xlu0 %v3538, 6
        %v3545 = vpop.permute.xlu0 %3544
        %vm3547 = vcmask 23552
        %v3548 = vsel %vm3547, %v3526, %v3541
        %vm3549 = vcmask 48128
        %v3550 = vsel %vm3549, %v3548, %v3545
        %vm3551 = vcmask 72704
        %3552 = vst.msk [vmem:[%s512] sm:$0xff] %vm3551, %v3550
        %s3553 = sand.u32 %s300, 1
        %s3554 = scalar_lea.sflag [#allocation8], %s3553
        %s3555 = sand.u32 %s300, 1
        %s3556 = smul.addr %s3555, 8
        %s3557 = scalar_lea.vmem [#allocation18], %s3556
        // Predicated region
        $region97: #{tpu_custom_call.1} parent=67 // pred_check
          %p3558 = pneg %p310
        $region98: #{tpu_custom_call.1} parent=67 // pred_check_branch
          %3560 = sbr.rel (%p3558) target = $region100
        $region99: #{tpu_custom_call.1} parent=67 // pred_region
          %s3562 = ssub.s32 128, 128
          %3563 = vsyncadd %s3554, %s3562
          %s3564 = smul.addr %s30, 128
          %s3565 = scalar_lea.hbm %s12, %s3564
          %s3567 = sshll.u32 %s3557, 4
          %s3568 = int_to_ptr.vmem [resolvable:$true] %s3567
          %3570 = dma.vmem_to_hbm [thread:$0]  %s3568, 128, %s3565, %s3554
        $region100: #{tpu_custom_call.1} parent=67 // pred_fallthru
          _
      $region68: #{tpu_custom_call.1} parent=5 // pred_fallthru
        _
      %p3571 = scmp.le.s32.totalorder 2, %s25
      // Predicated region
      $region101: #{tpu_custom_call.1} parent=5 // pred_check
        %p3572 = pneg %p3571
      $region102: #{tpu_custom_call.1} parent=5 // pred_check_branch
        %3574 = sbr.rel (%p3572) target = $region104
      $region103: #{tpu_custom_call.1} parent=5 // pred_region
        %s3575 = ssub.s32 %s25, 2
        // Predicated region
        $region105: #{tpu_custom_call.1} parent=103 // pred_check
          %p3576 = pneg %p316
        $region106: #{tpu_custom_call.1} parent=103 // pred_check_branch
          %3578 = sbr.rel (%p3576) target = $region108
        $region107: #{tpu_custom_call.1} parent=103 // pred_region
          %s3579 = sand.u32 %s301, 1
          %s3580 = scalar_lea.sflag [#allocation8], %s3579
          %s3581 = sand.u32 %s301, 1
          %s3582 = smul.addr %s3581, 8
          %s3583 = scalar_lea.vmem [#allocation18], %s3582
          %3584 = dma.done %s3580, 128
        $region108: #{tpu_custom_call.1} parent=103 // pred_fallthru
          _
      $region104: #{tpu_custom_call.1} parent=5 // pred_fallthru
        _
    $region6: #{tpu_custom_call.1} parent=1 // loop_footer
      %s29 = sadd.s32 1, %s25
    $region7: #{tpu_custom_call.1} parent=1 // loop_footer_branch
      %24 = sbr.rel target = $region3
    $region8: #{tpu_custom_call.1} parent=1 // loop_exit
      _
    %3585 = vsyncpa [#allocation7], 1
    %s3586 = scalar_lea.sflag [#allocation7], 1
    %3587 = vsyncpa %s3586, 1
    %3588 = vsyncpa [#allocation10], 1
    %3589 = vsyncpa [#allocation13], 1
    %3590 = vsyncpa [#allocation16], 1
    %3591 = vsyncpa [#allocation8], 1
    %s3592 = scalar_lea.sflag [#allocation8], 1
    %3593 = vsyncpa %s3592, 1

</llo_original>
